<compile_context>
chip_gen: v7x
topology: tpu7x:2x2x1
jax: 0.10.0
libtpu: 0.0.40
codegen_flags: <defaults>
</compile_context>

<pallas_src>
import jax
import jax.numpy as jnp
from jax import lax
from jax.experimental import pallas as pl
from jax.experimental.pallas import tpu as pltpu


def _round_up(x, m):
    return ((x + m - 1) // m) * m


# -----------------------------------------------------------------------------
# Pallas kernel: two interleaved length-masked LSTM recurrences + dense head.
# Grid: (batch blocks  [parallel], time chunks [arbitrary]).
# -----------------------------------------------------------------------------
def tc_lstm_kernel(xl_ref, xr_ref, asp_ref, lenl_ref, lenr_ref,
                   wtl_ref, wal_ref, whl_ref, bl_ref,
                   wtr_ref, war_ref, whr_ref, br_ref,
                   wdl_ref, wdr_ref, bd_ref,
                   out_ref,
                   gxl_ref, gxr_ref, hl_ref, cl_ref, hr_ref, cr_ref):
    t_blk = pl.program_id(1)
    nt = pl.num_programs(1)
    Tt, Bt, E = xl_ref.shape
    Hp = whl_ref.shape[0]
    G = whl_ref.shape[1]                      # 4 * Hp, lane-aligned gate blocks

    # h/c carry lives in VMEM scratch across the time ("arbitrary") grid axis.
    @pl.when(t_blk == 0)
    def _init():
        hl_ref[...] = jnp.zeros_like(hl_ref)
        cl_ref[...] = jnp.zeros_like(cl_ref)
        hr_ref[...] = jnp.zeros_like(hr_ref)
        cr_ref[...] = jnp.zeros_like(cr_ref)

    # Time-invariant gate contribution (aspect pooled embedding + biases), once per chunk.
    asp = asp_ref[...]                                                   # [Bt, E] bf16
    ga_l = jnp.dot(asp, wal_ref[...], preferred_element_type=jnp.float32) + bl_ref[...]
    ga_r = jnp.dot(asp, war_ref[...], preferred_element_type=jnp.float32) + br_ref[...]

    # Hoisted input projection for the whole time chunk: one MXU-shaped matmul per chain.
    xl2 = xl_ref[...].reshape(Tt * Bt, E)
    xr2 = xr_ref[...].reshape(Tt * Bt, E)
    gxl = jnp.dot(xl2, wtl_ref[...], preferred_element_type=jnp.float32)  # [Tt*Bt, 4Hp]
    gxr = jnp.dot(xr2, wtr_ref[...], preferred_element_type=jnp.float32)
    gxl_ref[...] = gxl.reshape(Tt, Bt, G) + ga_l[None]
    gxr_ref[...] = gxr.reshape(Tt, Bt, G) + ga_r[None]

    whl = whl_ref[...]                         # [Hp, 4Hp] bf16 (recurrent weights)
    whr = whr_ref[...]
    lenl = lenl_ref[...]                       # [Bt, 1] int32
    lenr = lenr_ref[...]
    t0 = t_blk * Tt

    def gate_update(g, h, c, lens, t):
        # PyTorch gate order i, f, g, o; slices are lane-tile aligned (Hp % 128 == 0).
        i = jax.nn.sigmoid(g[:, 0 * Hp:1 * Hp])
        f = jax.nn.sigmoid(g[:, 1 * Hp:2 * Hp])
        gg = jnp.tanh(g[:, 2 * Hp:3 * Hp])
        o = jax.nn.sigmoid(g[:, 3 * Hp:4 * Hp])
        c_new = f * c + i * gg
        h_new = o * jnp.tanh(c_new)
        # Packed-sequence semantics: state only advances while t < seq_len.
        valid = (t0 + t) < lens                # [Bt, 1] -> broadcast over Hp
        return jnp.where(valid, h_new, h), jnp.where(valid, c_new, c)

    def step(t, carry):
        hl, cl, hr, cr = carry
        # Both chains interleaved -> ~2x ILP on the serial h->MXU->EUP->VPU chain.
        g_l = gxl_ref[t] + jnp.dot(hl.astype(jnp.bfloat16), whl,
                                   preferred_element_type=jnp.float32)
        g_r = gxr_ref[t] + jnp.dot(hr.astype(jnp.bfloat16), whr,
                                   preferred_element_type=jnp.float32)
        hl, cl = gate_update(g_l, hl, cl, lenl, t)
        hr, cr = gate_update(g_r, hr, cr, lenr, t)
        return hl, cl, hr, cr

    carry0 = (hl_ref[...], cl_ref[...], hr_ref[...], cr_ref[...])
    hl, cl, hr, cr = lax.fori_loop(0, Tt, step, carry0, unroll=True)
    hl_ref[...] = hl
    cl_ref[...] = cl
    hr_ref[...] = hr
    cr_ref[...] = cr

    # Classifier: concat replaced by split dot; output is a lane-dense [Bt, 128] slab.
    @pl.when(t_blk == nt - 1)
    def _final():
        out_ref[...] = (
            jnp.dot(hl.astype(jnp.bfloat16), wdl_ref[...],
                    preferred_element_type=jnp.float32)
            + jnp.dot(hr.astype(jnp.bfloat16), wdr_ref[...],
                      preferred_element_type=jnp.float32)
            + bd_ref[...])


# -----------------------------------------------------------------------------
# Wrapper: embedding / aspect pooling / padding in plain JAX, hot path in Pallas.
# -----------------------------------------------------------------------------
def _pad_gate_cols(w, H, Hp):
    # [din, 4*H] -> [din, 4*Hp], each gate block zero-padded on the right.
    din = w.shape[0]
    w4 = w.reshape(din, 4, H)
    w4 = jnp.pad(w4, ((0, 0), (0, 0), (0, Hp - H)))
    return w4.reshape(din, 4 * Hp)


@jax.jit
def tc_lstm_forward(x_l_tok, x_r_tok, aspect_tok, params):
    TIME_BLOCK = 16      # time-chunk streamed per grid step
    BATCH_BLOCK = 128    # batch tile (megacore "parallel" axis on v7x)

    emb = params["embedding"]
    E = emb.shape[1]
    H = params["w_hh_l"].shape[0]
    P = params["w_dense"].shape[1]
    Hp = _round_up(H, 128)
    Pp = _round_up(P, 128)

    x_l_len = jnp.sum(x_l_tok != 0, axis=-1).astype(jnp.int32)           # [B]
    x_r_len = jnp.sum(x_r_tok != 0, axis=-1).astype(jnp.int32)           # [B]
    aspect_len = jnp.sum(aspect_tok != 0, axis=-1).astype(jnp.float32)   # [B]

    x_l = emb[x_l_tok]                                                   # [B, T, E]
    x_r = emb[x_r_tok]                                                   # [B, T, E]
    aspect = emb[aspect_tok]                                             # [B, Ta, E]
    # NOTE: matches the PyTorch module exactly — no guard for aspect_len == 0.
    aspect_pool = jnp.sum(aspect, axis=1) / aspect_len[:, None]          # [B, E]

    B, T, _ = x_l.shape
    Bp = _round_up(B, 16)                       # >=16 so bf16 sublane tiles are dense
    if Bp > BATCH_BLOCK:
        Bp = _round_up(Bp, BATCH_BLOCK)
        Bt = BATCH_BLOCK
    else:
        Bt = Bp
    Tt = min(T, TIME_BLOCK)
    Tp = _round_up(T, Tt)
    nb = Bp // Bt
    nt = Tp // Tt

    # Time-major, padded, bf16 token streams (aspect half never materialized over T).
    def prep_x(x):
        x_tm = jnp.transpose(x, (1, 0, 2))                               # [T, B, E]
        x_tm = jnp.pad(x_tm, ((0, Tp - T), (0, Bp - B), (0, 0)))
        return x_tm.astype(jnp.bfloat16)

    xl_tm = prep_x(x_l)
    xr_tm = prep_x(x_r)
    asp_p = jnp.pad(aspect_pool, ((0, Bp - B), (0, 0))).astype(jnp.bfloat16)
    lenl = jnp.pad(x_l_len[:, None], ((0, Bp - B), (0, 0)))              # padded rows -> len 0
    lenr = jnp.pad(x_r_len[:, None], ((0, Bp - B), (0, 0)))

    def prep_lstm(w_ih, w_hh, b):
        w_tok = _pad_gate_cols(w_ih[:E], H, Hp).astype(jnp.bfloat16)     # [E, 4Hp]
        w_asp = _pad_gate_cols(w_ih[E:], H, Hp).astype(jnp.bfloat16)     # [E, 4Hp]
        w_hh_p = jnp.pad(_pad_gate_cols(w_hh, H, Hp),
                         ((0, Hp - H), (0, 0))).astype(jnp.bfloat16)     # [Hp, 4Hp]
        b_p = _pad_gate_cols(b, H, Hp).astype(jnp.float32)               # [1, 4Hp]
        return w_tok, w_asp, w_hh_p, b_p

    wtl, wal, whl, bl = prep_lstm(params["w_ih_l"], params["w_hh_l"], params["b_l"])
    wtr, war, whr, br = prep_lstm(params["w_ih_r"], params["w_hh_r"], params["b_r"])

    wd = params["w_dense"]                                               # [2H, P]
    wdl = jnp.pad(wd[:H], ((0, Hp - H), (0, Pp - P))).astype(jnp.bfloat16)
    wdr = jnp.pad(wd[H:], ((0, Hp - H), (0, Pp - P))).astype(jnp.bfloat16)
    bd = jnp.pad(params["b_dense"], ((0, 0), (0, Pp - P))).astype(jnp.float32)

    G = 4 * Hp
    x_spec = pl.BlockSpec((Tt, Bt, E), lambda b, t: (t, b, 0))
    bvec = lambda w: pl.BlockSpec((Bt, w), lambda b, t: (b, 0))
    res = lambda r, c: pl.BlockSpec((r, c), lambda b, t: (0, 0))         # resident weights

    in_specs = [
        x_spec, x_spec,
        bvec(E),
        bvec(1), bvec(1),
        res(E, G), res(E, G), res(Hp, G), res(1, G),
        res(E, G), res(E, G), res(Hp, G), res(1, G),
        res(Hp, Pp), res(Hp, Pp), res(1, Pp),
    ]
    out_specs = pl.BlockSpec((Bt, Pp), lambda b, t: (b, 0))
    scratch_shapes = [
        pltpu.VMEM((Tt, Bt, G), jnp.float32),   # precomputed input gates, left
        pltpu.VMEM((Tt, Bt, G), jnp.float32),   # precomputed input gates, right
        pltpu.VMEM((Bt, Hp), jnp.float32),      # h_l
        pltpu.VMEM((Bt, Hp), jnp.float32),      # c_l
        pltpu.VMEM((Bt, Hp), jnp.float32),      # h_r
        pltpu.VMEM((Bt, Hp), jnp.float32),      # c_r
    ]

    out = pl.pallas_call(
        tc_lstm_kernel,
        out_shape=jax.ShapeDtypeStruct((Bp, Pp), jnp.float32),
        grid=(nb, nt),
        in_specs=in_specs,
        out_specs=out_specs,
        scratch_shapes=scratch_shapes,
        compiler_params=pltpu.CompilerParams(
            dimension_semantics=("parallel", "arbitrary"),
            vmem_limit_bytes=64 * 1024 * 1024),
    )(xl_tm, xr_tm, asp_p, lenl, lenr,
      wtl, wal, whl, bl,
      wtr, war, whr, br,
      wdl, wdr, bd)

    return out[:B, :P]


# -----------------------------------------------------------------------------
# Pure-JAX f32 reference (same math, no Pallas) for correctness check.
# -----------------------------------------------------------------------------
def _ref_lstm_last_hidden(x, lens, w_ih, w_hh, b):
    B, T, D = x.shape
    H = w_hh.shape[0]

    def step(carry, t):
        h, c = carry
        x_t = x[:, t, :]
        gates = x_t @ w_ih + h @ w_hh + b
        i = jax.nn.sigmoid(gates[:, 0 * H:1 * H])
        f = jax.nn.sigmoid(gates[:, 1 * H:2 * H])
        g = jnp.tanh(gates[:, 2 * H:3 * H])
        o = jax.nn.sigmoid(gates[:, 3 * H:4 * H])
        c_new = f * c + i * g
        h_new = o * jnp.tanh(c_new)
        valid = (t < lens)[:, None]
        return (jnp.where(valid, h_new, h), jnp.where(valid, c_new, c)), None

    (h, _), _ = lax.scan(step,
                         (jnp.zeros((B, H), jnp.float32),
                          jnp.zeros((B, H), jnp.float32)),
                         jnp.arange(T))
    return h


def tc_lstm_reference(x_l_tok, x_r_tok, aspect_tok, params):
    emb = params["embedding"]
    x_l_len = jnp.sum(x_l_tok != 0, axis=-1).astype(jnp.int32)
    x_r_len = jnp.sum(x_r_tok != 0, axis=-1).astype(jnp.int32)
    aspect_len = jnp.sum(aspect_tok != 0, axis=-1).astype(jnp.float32)
    x_l = emb[x_l_tok]
    x_r = emb[x_r_tok]
    aspect = emb[aspect_tok]
    aspect_pool = jnp.sum(aspect, axis=1) / aspect_len[:, None]
    B, T, E = x_l.shape
    aspect_exp = jnp.broadcast_to(aspect_pool[:, None, :], (B, T, E))
    x_l = jnp.concatenate([x_l, aspect_exp], axis=-1)
    x_r = jnp.concatenate([x_r, aspect_exp], axis=-1)
    h_l = _ref_lstm_last_hidden(x_l, x_l_len, params["w_ih_l"],
                                params["w_hh_l"], params["b_l"][0])
    h_r = _ref_lstm_last_hidden(x_r, x_r_len, params["w_ih_r"],
                                params["w_hh_r"], params["b_r"][0])
    h_n = jnp.concatenate([h_l, h_r], axis=-1)
    return h_n @ params["w_dense"] + params["b_dense"][0]


# -----------------------------------------------------------------------------
# Deterministic parameter / input construction and smoke test.
# -----------------------------------------------------------------------------
def make_params(key, vocab, embed_dim, hidden_dim, polarities_dim):
    keys = jax.random.split(key, 12)
    E2 = embed_dim * 2
    H4 = hidden_dim * 4
    scale = 0.1

    embedding = scale * jax.random.normal(keys[0], (vocab, embed_dim), jnp.float32)
    embedding = embedding.at[0].set(0.0)                   # pad row

    def lstm_weights(k_ih, k_hh, k_bih, k_bhh):
        w_ih = scale * jax.random.normal(k_ih, (E2, H4), jnp.float32)   # [in, 4H]
        w_hh = scale * jax.random.normal(k_hh, (hidden_dim, H4), jnp.float32)
        b_ih = scale * jax.random.normal(k_bih, (H4,), jnp.float32)
        b_hh = scale * jax.random.normal(k_bhh, (H4,), jnp.float32)
        return w_ih, w_hh, (b_ih + b_hh)[None, :]

    w_ih_l, w_hh_l, b_l = lstm_weights(keys[1], keys[2], keys[3], keys[4])
    w_ih_r, w_hh_r, b_r = lstm_weights(keys[5], keys[6], keys[7], keys[8])

    w_dense = scale * jax.random.normal(keys[9], (hidden_dim * 2, polarities_dim),
                                        jnp.float32)
    b_dense = scale * jax.random.normal(keys[10], (1, polarities_dim), jnp.float32)

    return dict(embedding=embedding,
                w_ih_l=w_ih_l, w_hh_l=w_hh_l, b_l=b_l,
                w_ih_r=w_ih_r, w_hh_r=w_hh_r, b_r=b_r,
                w_dense=w_dense, b_dense=b_dense)


if __name__ == "__main__":
    B = 2
    MAX_SEQ_LEN = 8
    ASPECT_LEN = 4
    EMBED_DIM = 16
    HIDDEN_DIM = 32
    POLARITIES = 3
    VOCAB = 50

    key = jax.random.PRNGKey(0)
    k_par, k_xl, k_xr, k_asp = jax.random.split(key, 4)

    params = make_params(k_par, VOCAB, EMBED_DIM, HIDDEN_DIM, POLARITIES)

    # Token-id inputs with trailing zero padding (0 = pad id); lengths >= 1.
    x_l_tok = jax.random.randint(k_xl, (B, MAX_SEQ_LEN), 1, VOCAB, jnp.int32)
    x_l_tok = x_l_tok.at[0, 6:].set(0).at[1, 5:].set(0)
    x_r_tok = jax.random.randint(k_xr, (B, MAX_SEQ_LEN), 1, VOCAB, jnp.int32)
    x_r_tok = x_r_tok.at[0, 7:].set(0).at[1, 4:].set(0)
    aspect_tok = jax.random.randint(k_asp, (B, ASPECT_LEN), 1, VOCAB, jnp.int32)
    aspect_tok = aspect_tok.at[0, 2:].set(0).at[1, 3:].set(0)

    out = tc_lstm_forward(x_l_tok, x_r_tok, aspect_tok, params)
    out = jax.block_until_ready(out)

    ref = jax.block_until_ready(
        tc_lstm_reference(x_l_tok, x_r_tok, aspect_tok, params))

    assert out.shape == (B, POLARITIES), out.shape
    # Kernel streams activations/weights in bf16 (f32 accumulation + f32 state),
    # so compare against the f32 reference with a bf16-appropriate tolerance.
    assert jnp.allclose(out, ref, rtol=2e-2, atol=2e-2), (out, ref)

    print("KERNEL_OK")
</pallas_src>

<mosaic_0001>
module attributes {stable_mosaic.version = 11 : i64} {
  func.func @tc_lstm_kernel(%arg0: i32, %arg1: i32, %arg2: memref<8x16x16xbf16, #tpu.memory_space<vmem>>, %arg3: memref<8x16x16xbf16, #tpu.memory_space<vmem>>, %arg4: memref<16x16xbf16, #tpu.memory_space<vmem>>, %arg5: memref<16x1xi32, #tpu.memory_space<vmem>>, %arg6: memref<16x1xi32, #tpu.memory_space<vmem>>, %arg7: memref<16x512xbf16, #tpu.memory_space<vmem>>, %arg8: memref<16x512xbf16, #tpu.memory_space<vmem>>, %arg9: memref<128x512xbf16, #tpu.memory_space<vmem>>, %arg10: memref<1x512xf32, #tpu.memory_space<vmem>>, %arg11: memref<16x512xbf16, #tpu.memory_space<vmem>>, %arg12: memref<16x512xbf16, #tpu.memory_space<vmem>>, %arg13: memref<128x512xbf16, #tpu.memory_space<vmem>>, %arg14: memref<1x512xf32, #tpu.memory_space<vmem>>, %arg15: memref<128x128xbf16, #tpu.memory_space<vmem>>, %arg16: memref<128x128xbf16, #tpu.memory_space<vmem>>, %arg17: memref<1x128xf32, #tpu.memory_space<vmem>>, %arg18: memref<16x128xf32, #tpu.memory_space<vmem>>, %arg19: memref<8x16x512xf32, #tpu.memory_space<vmem>>, %arg20: memref<8x16x512xf32, #tpu.memory_space<vmem>>, %arg21: memref<16x128xf32, #tpu.memory_space<vmem>>, %arg22: memref<16x128xf32, #tpu.memory_space<vmem>>, %arg23: memref<16x128xf32, #tpu.memory_space<vmem>>, %arg24: memref<16x128xf32, #tpu.memory_space<vmem>>) attributes {dimension_semantics = [#tpu.dimension_semantics<parallel>, #tpu.dimension_semantics<arbitrary>], iteration_bounds = array<i64: 1, 1>, scalar_prefetch = 0 : i64, scratch_operands = 6 : i64, tpu.core_type = #tpu.core_type<tc>, window_params = [{transform_indices = @transform_0, window_bounds = array<i64: 8, 16, 16>}, {transform_indices = @transform_1, window_bounds = array<i64: 8, 16, 16>}, {transform_indices = @transform_2, window_bounds = array<i64: 16, 16>}, {transform_indices = @transform_3, window_bounds = array<i64: 16, 1>}, {transform_indices = @transform_4, window_bounds = array<i64: 16, 1>}, {pipeline_mode = #tpu.pipeline_mode<synchronous>, transform_indices = @transform_5, window_bounds = array<i64: 16, 512>}, {pipeline_mode = #tpu.pipeline_mode<synchronous>, transform_indices = @transform_6, window_bounds = array<i64: 16, 512>}, {pipeline_mode = #tpu.pipeline_mode<synchronous>, transform_indices = @transform_7, window_bounds = array<i64: 128, 512>}, {pipeline_mode = #tpu.pipeline_mode<synchronous>, transform_indices = @transform_8, window_bounds = array<i64: 1, 512>}, {pipeline_mode = #tpu.pipeline_mode<synchronous>, transform_indices = @transform_9, window_bounds = array<i64: 16, 512>}, {pipeline_mode = #tpu.pipeline_mode<synchronous>, transform_indices = @transform_10, window_bounds = array<i64: 16, 512>}, {pipeline_mode = #tpu.pipeline_mode<synchronous>, transform_indices = @transform_11, window_bounds = array<i64: 128, 512>}, {pipeline_mode = #tpu.pipeline_mode<synchronous>, transform_indices = @transform_12, window_bounds = array<i64: 1, 512>}, {pipeline_mode = #tpu.pipeline_mode<synchronous>, transform_indices = @transform_13, window_bounds = array<i64: 128, 128>}, {pipeline_mode = #tpu.pipeline_mode<synchronous>, transform_indices = @transform_14, window_bounds = array<i64: 128, 128>}, {pipeline_mode = #tpu.pipeline_mode<synchronous>, transform_indices = @transform_15, window_bounds = array<i64: 1, 128>}, {transform_indices = @transform_16, window_bounds = array<i64: 16, 128>}]} {
    %c0_i32 = arith.constant 0 : i32
    %0 = arith.cmpi eq, %arg1, %c0_i32 : i32
    %1 = arith.extui %0 : i1 to i32
    %c0_i32_0 = arith.constant 0 : i32
    %2 = arith.cmpi ne, %1, %c0_i32_0 : i32
    scf.if %2 {
      %cst_153 = arith.constant 0.000000e+00 : f32
      %688 = vector.broadcast %cst_153 : f32 to vector<16x128xf32>
      %c0_154 = arith.constant 0 : index
      %c0_155 = arith.constant 0 : index
      %689 = vector.load %arg21[%c0_154, %c0_155] : memref<16x128xf32, #tpu.memory_space<vmem>>, vector<16x128xf32>
      tpu.vector_store %arg21[%c0_154, %c0_155], %688 {strides = array<i32>} : memref<16x128xf32, #tpu.memory_space<vmem>>, vector<16x128xf32>,
      %cst_156 = arith.constant 0.000000e+00 : f32
      %690 = vector.broadcast %cst_156 : f32 to vector<16x128xf32>
      %c0_157 = arith.constant 0 : index
      %c0_158 = arith.constant 0 : index
      %691 = vector.load %arg22[%c0_157, %c0_158] : memref<16x128xf32, #tpu.memory_space<vmem>>, vector<16x128xf32>
      tpu.vector_store %arg22[%c0_157, %c0_158], %690 {strides = array<i32>} : memref<16x128xf32, #tpu.memory_space<vmem>>, vector<16x128xf32>,
      %cst_159 = arith.constant 0.000000e+00 : f32
      %692 = vector.broadcast %cst_159 : f32 to vector<16x128xf32>
      %c0_160 = arith.constant 0 : index
      %c0_161 = arith.constant 0 : index
      %693 = vector.load %arg23[%c0_160, %c0_161] : memref<16x128xf32, #tpu.memory_space<vmem>>, vector<16x128xf32>
      tpu.vector_store %arg23[%c0_160, %c0_161], %692 {strides = array<i32>} : memref<16x128xf32, #tpu.memory_space<vmem>>, vector<16x128xf32>,
      %cst_162 = arith.constant 0.000000e+00 : f32
      %694 = vector.broadcast %cst_162 : f32 to vector<16x128xf32>
      %c0_163 = arith.constant 0 : index
      %c0_164 = arith.constant 0 : index
      %695 = vector.load %arg24[%c0_163, %c0_164] : memref<16x128xf32, #tpu.memory_space<vmem>>, vector<16x128xf32>
      tpu.vector_store %arg24[%c0_163, %c0_164], %694 {strides = array<i32>} : memref<16x128xf32, #tpu.memory_space<vmem>>, vector<16x128xf32>,
    } else {
    }
    %c0 = arith.constant 0 : index
    %c0_1 = arith.constant 0 : index
    %3 = vector.load %arg4[%c0, %c0_1] : memref<16x16xbf16, #tpu.memory_space<vmem>>, vector<16x16xbf16>
    %c0_2 = arith.constant 0 : index
    %c0_3 = arith.constant 0 : index
    %4 = vector.load %arg8[%c0_2, %c0_3] : memref<16x512xbf16, #tpu.memory_space<vmem>>, vector<16x512xbf16>
    %cst = arith.constant dense<0.000000e+00> : vector<16x512xf32>
    %5 = tpu.matmul %3, %4, %cst {dimension_numbers = #tpu.dot_dimension_numbers<[1], [0], [0], [1], [0, 0, 1, 1], [], []>} : vector<16x16xbf16>, vector<16x512xbf16>, vector<16x512xf32> -> vector<16x512xf32>
    %c0_4 = arith.constant 0 : index
    %c0_5 = arith.constant 0 : index
    %6 = vector.load %arg10[%c0_4, %c0_5] : memref<1x512xf32, #tpu.memory_space<vmem>>, vector<1x512xf32>
    %7 = vector.broadcast %6 : vector<1x512xf32> to vector<16x512xf32>
    %8 = arith.addf %5, %7 : vector<16x512xf32>
    %c0_6 = arith.constant 0 : index
    %c0_7 = arith.constant 0 : index
    %9 = vector.load %arg12[%c0_6, %c0_7] : memref<16x512xbf16, #tpu.memory_space<vmem>>, vector<16x512xbf16>
    %cst_8 = arith.constant dense<0.000000e+00> : vector<16x512xf32>
    %10 = tpu.matmul %3, %9, %cst_8 {dimension_numbers = #tpu.dot_dimension_numbers<[1], [0], [0], [1], [0, 0, 1, 1], [], []>} : vector<16x16xbf16>, vector<16x512xbf16>, vector<16x512xf32> -> vector<16x512xf32>
    %c0_9 = arith.constant 0 : index
    %c0_10 = arith.constant 0 : index
    %11 = vector.load %arg14[%c0_9, %c0_10] : memref<1x512xf32, #tpu.memory_space<vmem>>, vector<1x512xf32>
    %12 = vector.broadcast %11 : vector<1x512xf32> to vector<16x512xf32>
    %13 = arith.addf %10, %12 : vector<16x512xf32>
    %c0_11 = arith.constant 0 : index
    %c0_12 = arith.constant 0 : index
    %c0_13 = arith.constant 0 : index
    %14 = vector.load %arg2[%c0_11, %c0_12, %c0_13] : memref<8x16x16xbf16, #tpu.memory_space<vmem>>, vector<8x16x16xbf16>
    %15 = vector.shape_cast %14 : vector<8x16x16xbf16> to vector<128x16xbf16>
    %c0_14 = arith.constant 0 : index
    %c0_15 = arith.constant 0 : index
    %c0_16 = arith.constant 0 : index
    %16 = vector.load %arg3[%c0_14, %c0_15, %c0_16] : memref<8x16x16xbf16, #tpu.memory_space<vmem>>, vector<8x16x16xbf16>
    %17 = vector.shape_cast %16 : vector<8x16x16xbf16> to vector<128x16xbf16>
    %c0_17 = arith.constant 0 : index
    %c0_18 = arith.constant 0 : index
    %18 = vector.load %arg7[%c0_17, %c0_18] : memref<16x512xbf16, #tpu.memory_space<vmem>>, vector<16x512xbf16>
    %cst_19 = arith.constant dense<0.000000e+00> : vector<128x512xf32>
    %19 = tpu.matmul %15, %18, %cst_19 {dimension_numbers = #tpu.dot_dimension_numbers<[1], [0], [0], [1], [0, 0, 1, 1], [], []>} : vector<128x16xbf16>, vector<16x512xbf16>, vector<128x512xf32> -> vector<128x512xf32>
    %c0_20 = arith.constant 0 : index
    %c0_21 = arith.constant 0 : index
    %20 = vector.load %arg11[%c0_20, %c0_21] : memref<16x512xbf16, #tpu.memory_space<vmem>>, vector<16x512xbf16>
    %cst_22 = arith.constant dense<0.000000e+00> : vector<128x512xf32>
    %21 = tpu.matmul %17, %20, %cst_22 {dimension_numbers = #tpu.dot_dimension_numbers<[1], [0], [0], [1], [0, 0, 1, 1], [], []>} : vector<128x16xbf16>, vector<16x512xbf16>, vector<128x512xf32> -> vector<128x512xf32>
    %22 = vector.shape_cast %19 : vector<128x512xf32> to vector<8x16x512xf32>
    %23 = vector.shape_cast %8 : vector<16x512xf32> to vector<1x16x512xf32>
    %24 = vector.broadcast %23 : vector<1x16x512xf32> to vector<8x16x512xf32>
    %25 = arith.addf %22, %24 : vector<8x16x512xf32>
    %c0_23 = arith.constant 0 : index
    %c0_24 = arith.constant 0 : index
    %c0_25 = arith.constant 0 : index
    %26 = vector.load %arg19[%c0_23, %c0_24, %c0_25] : memref<8x16x512xf32, #tpu.memory_space<vmem>>, vector<8x16x512xf32>
    tpu.vector_store %arg19[%c0_23, %c0_24, %c0_25], %25 {strides = array<i32>} : memref<8x16x512xf32, #tpu.memory_space<vmem>>, vector<8x16x512xf32>,
    %27 = vector.shape_cast %21 : vector<128x512xf32> to vector<8x16x512xf32>
    %28 = vector.shape_cast %13 : vector<16x512xf32> to vector<1x16x512xf32>
    %29 = vector.broadcast %28 : vector<1x16x512xf32> to vector<8x16x512xf32>
    %30 = arith.addf %27, %29 : vector<8x16x512xf32>
    %c0_26 = arith.constant 0 : index
    %c0_27 = arith.constant 0 : index
    %c0_28 = arith.constant 0 : index
    %31 = vector.load %arg20[%c0_26, %c0_27, %c0_28] : memref<8x16x512xf32, #tpu.memory_space<vmem>>, vector<8x16x512xf32>
    tpu.vector_store %arg20[%c0_26, %c0_27, %c0_28], %30 {strides = array<i32>} : memref<8x16x512xf32, #tpu.memory_space<vmem>>, vector<8x16x512xf32>,
    %c0_29 = arith.constant 0 : index
    %c0_30 = arith.constant 0 : index
    %32 = vector.load %arg9[%c0_29, %c0_30] : memref<128x512xbf16, #tpu.memory_space<vmem>>, vector<128x512xbf16>
    %c0_31 = arith.constant 0 : index
    %c0_32 = arith.constant 0 : index
    %33 = vector.load %arg13[%c0_31, %c0_32] : memref<128x512xbf16, #tpu.memory_space<vmem>>, vector<128x512xbf16>
    %c0_33 = arith.constant 0 : index
    %c0_34 = arith.constant 0 : index
    %34 = vector.load %arg5[%c0_33, %c0_34] : memref<16x1xi32, #tpu.memory_space<vmem>>, vector<16x1xi32>
    %c0_35 = arith.constant 0 : index
    %c0_36 = arith.constant 0 : index
    %35 = vector.load %arg6[%c0_35, %c0_36] : memref<16x1xi32, #tpu.memory_space<vmem>>, vector<16x1xi32>
    %c8_i32 = arith.constant 8 : i32
    %36 = arith.muli %arg1, %c8_i32 : i32
    %c0_37 = arith.constant 0 : index
    %c0_38 = arith.constant 0 : index
    %37 = vector.load %arg21[%c0_37, %c0_38] : memref<16x128xf32, #tpu.memory_space<vmem>>, vector<16x128xf32>
    %c0_39 = arith.constant 0 : index
    %c0_40 = arith.constant 0 : index
    %38 = vector.load %arg22[%c0_39, %c0_40] : memref<16x128xf32, #tpu.memory_space<vmem>>, vector<16x128xf32>
    %c0_41 = arith.constant 0 : index
    %c0_42 = arith.constant 0 : index
    %39 = vector.load %arg23[%c0_41, %c0_42] : memref<16x128xf32, #tpu.memory_space<vmem>>, vector<16x128xf32>
    %c0_43 = arith.constant 0 : index
    %c0_44 = arith.constant 0 : index
    %40 = vector.load %arg24[%c0_43, %c0_44] : memref<16x128xf32, #tpu.memory_space<vmem>>, vector<16x128xf32>
    %c0_i32_45 = arith.constant 0 : i32
    %41 = arith.index_cast %c0_i32_45 : i32 to index
    %c0_46 = arith.constant 0 : index
    %c0_47 = arith.constant 0 : index
    %42 = vector.load %arg19[%41, %c0_46, %c0_47] : memref<8x16x512xf32, #tpu.memory_space<vmem>>, vector<1x16x512xf32>
    %43 = vector.shape_cast %42 : vector<1x16x512xf32> to vector<16x512xf32>
    %44 = arith.truncf %37 : vector<16x128xf32> to vector<16x128xbf16>
    %cst_48 = arith.constant dense<0.000000e+00> : vector<16x512xf32>
    %45 = tpu.matmul %44, %32, %cst_48 {dimension_numbers = #tpu.dot_dimension_numbers<[1], [0], [0], [1], [0, 0, 1, 1], [], []>} : vector<16x128xbf16>, vector<128x512xbf16>, vector<16x512xf32> -> vector<16x512xf32>
    %46 = arith.addf %43, %45 : vector<16x512xf32>
    %47 = arith.index_cast %c0_i32_45 : i32 to index
    %c0_49 = arith.constant 0 : index
    %c0_50 = arith.constant 0 : index
    %48 = vector.load %arg20[%47, %c0_49, %c0_50] : memref<8x16x512xf32, #tpu.memory_space<vmem>>, vector<1x16x512xf32>
    %49 = vector.shape_cast %48 : vector<1x16x512xf32> to vector<16x512xf32>
    %50 = arith.truncf %39 : vector<16x128xf32> to vector<16x128xbf16>
    %cst_51 = arith.constant dense<0.000000e+00> : vector<16x512xf32>
    %51 = tpu.matmul %50, %33, %cst_51 {dimension_numbers = #tpu.dot_dimension_numbers<[1], [0], [0], [1], [0, 0, 1, 1], [], []>} : vector<16x128xbf16>, vector<128x512xbf16>, vector<16x512xf32> -> vector<16x512xf32>
    %52 = arith.addf %49, %51 : vector<16x512xf32>
    %53 = vector.extract_strided_slice %46 {offsets = [0, 0], sizes = [16, 128], strides = [1, 1]} : vector<16x512xf32> to vector<16x128xf32>
    %54 = arith.negf %53 : vector<16x128xf32>
    %55 = math.exp %54 : vector<16x128xf32>
    %cst_52 = arith.constant 1.000000e+00 : f32
    %56 = vector.broadcast %cst_52 : f32 to vector<16x128xf32>
    %57 = arith.addf %56, %55 : vector<16x128xf32>
    %58 = arith.divf %56, %57 : vector<16x128xf32>
    %59 = vector.extract_strided_slice %46 {offsets = [0, 128], sizes = [16, 128], strides = [1, 1]} : vector<16x512xf32> to vector<16x128xf32>
    %60 = arith.negf %59 : vector<16x128xf32>
    %61 = math.exp %60 : vector<16x128xf32>
    %cst_53 = arith.constant 1.000000e+00 : f32
    %62 = vector.broadcast %cst_53 : f32 to vector<16x128xf32>
    %63 = arith.addf %62, %61 : vector<16x128xf32>
    %64 = arith.divf %62, %63 : vector<16x128xf32>
    %65 = vector.extract_strided_slice %46 {offsets = [0, 256], sizes = [16, 128], strides = [1, 1]} : vector<16x512xf32> to vector<16x128xf32>
    %66 = math.tanh %65 : vector<16x128xf32>
    %67 = vector.extract_strided_slice %46 {offsets = [0, 384], sizes = [16, 128], strides = [1, 1]} : vector<16x512xf32> to vector<16x128xf32>
    %68 = arith.negf %67 : vector<16x128xf32>
    %69 = math.exp %68 : vector<16x128xf32>
    %cst_54 = arith.constant 1.000000e+00 : f32
    %70 = vector.broadcast %cst_54 : f32 to vector<16x128xf32>
    %71 = arith.addf %70, %69 : vector<16x128xf32>
    %72 = arith.divf %70, %71 : vector<16x128xf32>
    %73 = arith.mulf %64, %38 : vector<16x128xf32>
    %74 = arith.mulf %58, %66 : vector<16x128xf32>
    %75 = arith.addf %73, %74 : vector<16x128xf32>
    %76 = math.tanh %75 : vector<16x128xf32>
    %77 = arith.mulf %72, %76 : vector<16x128xf32>
    %78 = arith.addi %36, %c0_i32_45 : i32
    %79 = vector.broadcast %78 : i32 to vector<16x1xi32>
    %80 = arith.cmpi slt, %79, %34 : vector<16x1xi32>
    %81 = vector.shape_cast %80 : vector<16x1xi1> to vector<16x1xi1>
    %82 = vector.broadcast %81 : vector<16x1xi1> to vector<16x128xi1>
    %83 = arith.select %82, %77, %37 : vector<16x128xi1>, vector<16x128xf32>
    %84 = vector.shape_cast %80 : vector<16x1xi1> to vector<16x1xi1>
    %85 = vector.broadcast %84 : vector<16x1xi1> to vector<16x128xi1>
    %86 = arith.select %85, %75, %38 : vector<16x128xi1>, vector<16x128xf32>
    %87 = vector.extract_strided_slice %52 {offsets = [0, 0], sizes = [16, 128], strides = [1, 1]} : vector<16x512xf32> to vector<16x128xf32>
    %88 = arith.negf %87 : vector<16x128xf32>
    %89 = math.exp %88 : vector<16x128xf32>
    %cst_55 = arith.constant 1.000000e+00 : f32
    %90 = vector.broadcast %cst_55 : f32 to vector<16x128xf32>
    %91 = arith.addf %90, %89 : vector<16x128xf32>
    %92 = arith.divf %90, %91 : vector<16x128xf32>
    %93 = vector.extract_strided_slice %52 {offsets = [0, 128], sizes = [16, 128], strides = [1, 1]} : vector<16x512xf32> to vector<16x128xf32>
    %94 = arith.negf %93 : vector<16x128xf32>
    %95 = math.exp %94 : vector<16x128xf32>
    %cst_56 = arith.constant 1.000000e+00 : f32
    %96 = vector.broadcast %cst_56 : f32 to vector<16x128xf32>
    %97 = arith.addf %96, %95 : vector<16x128xf32>
    %98 = arith.divf %96, %97 : vector<16x128xf32>
    %99 = vector.extract_strided_slice %52 {offsets = [0, 256], sizes = [16, 128], strides = [1, 1]} : vector<16x512xf32> to vector<16x128xf32>
    %100 = math.tanh %99 : vector<16x128xf32>
    %101 = vector.extract_strided_slice %52 {offsets = [0, 384], sizes = [16, 128], strides = [1, 1]} : vector<16x512xf32> to vector<16x128xf32>
    %102 = arith.negf %101 : vector<16x128xf32>
    %103 = math.exp %102 : vector<16x128xf32>
    %cst_57 = arith.constant 1.000000e+00 : f32
    %104 = vector.broadcast %cst_57 : f32 to vector<16x128xf32>
    %105 = arith.addf %104, %103 : vector<16x128xf32>
    %106 = arith.divf %104, %105 : vector<16x128xf32>
    %107 = arith.mulf %98, %40 : vector<16x128xf32>
    %108 = arith.mulf %92, %100 : vector<16x128xf32>
    %109 = arith.addf %107, %108 : vector<16x128xf32>
    %110 = math.tanh %109 : vector<16x128xf32>
    %111 = arith.mulf %106, %110 : vector<16x128xf32>
    %112 = arith.addi %36, %c0_i32_45 : i32
    %113 = vector.broadcast %112 : i32 to vector<16x1xi32>
    %114 = arith.cmpi slt, %113, %35 : vector<16x1xi32>
    %115 = vector.shape_cast %114 : vector<16x1xi1> to vector<16x1xi1>
    %116 = vector.broadcast %115 : vector<16x1xi1> to vector<16x128xi1>
    %117 = arith.select %116, %111, %39 : vector<16x128xi1>, vector<16x128xf32>
    %118 = vector.shape_cast %114 : vector<16x1xi1> to vector<16x1xi1>
    %119 = vector.broadcast %118 : vector<16x1xi1> to vector<16x128xi1>
    %120 = arith.select %119, %109, %40 : vector<16x128xi1>, vector<16x128xf32>
    %c1_i32 = arith.constant 1 : i32
    %121 = arith.index_cast %c1_i32 : i32 to index
    %c0_58 = arith.constant 0 : index
    %c0_59 = arith.constant 0 : index
    %122 = vector.load %arg19[%121, %c0_58, %c0_59] : memref<8x16x512xf32, #tpu.memory_space<vmem>>, vector<1x16x512xf32>
    %123 = vector.shape_cast %122 : vector<1x16x512xf32> to vector<16x512xf32>
    %124 = arith.truncf %83 : vector<16x128xf32> to vector<16x128xbf16>
    %cst_60 = arith.constant dense<0.000000e+00> : vector<16x512xf32>
    %125 = tpu.matmul %124, %32, %cst_60 {dimension_numbers = #tpu.dot_dimension_numbers<[1], [0], [0], [1], [0, 0, 1, 1], [], []>} : vector<16x128xbf16>, vector<128x512xbf16>, vector<16x512xf32> -> vector<16x512xf32>
    %126 = arith.addf %123, %125 : vector<16x512xf32>
    %127 = arith.index_cast %c1_i32 : i32 to index
    %c0_61 = arith.constant 0 : index
    %c0_62 = arith.constant 0 : index
    %128 = vector.load %arg20[%127, %c0_61, %c0_62] : memref<8x16x512xf32, #tpu.memory_space<vmem>>, vector<1x16x512xf32>
    %129 = vector.shape_cast %128 : vector<1x16x512xf32> to vector<16x512xf32>
    %130 = arith.truncf %117 : vector<16x128xf32> to vector<16x128xbf16>
    %cst_63 = arith.constant dense<0.000000e+00> : vector<16x512xf32>
    %131 = tpu.matmul %130, %33, %cst_63 {dimension_numbers = #tpu.dot_dimension_numbers<[1], [0], [0], [1], [0, 0, 1, 1], [], []>} : vector<16x128xbf16>, vector<128x512xbf16>, vector<16x512xf32> -> vector<16x512xf32>
    %132 = arith.addf %129, %131 : vector<16x512xf32>
    %133 = vector.extract_strided_slice %126 {offsets = [0, 0], sizes = [16, 128], strides = [1, 1]} : vector<16x512xf32> to vector<16x128xf32>
    %134 = arith.negf %133 : vector<16x128xf32>
    %135 = math.exp %134 : vector<16x128xf32>
    %cst_64 = arith.constant 1.000000e+00 : f32
    %136 = vector.broadcast %cst_64 : f32 to vector<16x128xf32>
    %137 = arith.addf %136, %135 : vector<16x128xf32>
    %138 = arith.divf %136, %137 : vector<16x128xf32>
    %139 = vector.extract_strided_slice %126 {offsets = [0, 128], sizes = [16, 128], strides = [1, 1]} : vector<16x512xf32> to vector<16x128xf32>
    %140 = arith.negf %139 : vector<16x128xf32>
    %141 = math.exp %140 : vector<16x128xf32>
    %cst_65 = arith.constant 1.000000e+00 : f32
    %142 = vector.broadcast %cst_65 : f32 to vector<16x128xf32>
    %143 = arith.addf %142, %141 : vector<16x128xf32>
    %144 = arith.divf %142, %143 : vector<16x128xf32>
    %145 = vector.extract_strided_slice %126 {offsets = [0, 256], sizes = [16, 128], strides = [1, 1]} : vector<16x512xf32> to vector<16x128xf32>
    %146 = math.tanh %145 : vector<16x128xf32>
    %147 = vector.extract_strided_slice %126 {offsets = [0, 384], sizes = [16, 128], strides = [1, 1]} : vector<16x512xf32> to vector<16x128xf32>
    %148 = arith.negf %147 : vector<16x128xf32>
    %149 = math.exp %148 : vector<16x128xf32>
    %cst_66 = arith.constant 1.000000e+00 : f32
    %150 = vector.broadcast %cst_66 : f32 to vector<16x128xf32>
    %151 = arith.addf %150, %149 : vector<16x128xf32>
    %152 = arith.divf %150, %151 : vector<16x128xf32>
    %153 = arith.mulf %144, %86 : vector<16x128xf32>
    %154 = arith.mulf %138, %146 : vector<16x128xf32>
    %155 = arith.addf %153, %154 : vector<16x128xf32>
    %156 = math.tanh %155 : vector<16x128xf32>
    %157 = arith.mulf %152, %156 : vector<16x128xf32>
    %158 = arith.addi %36, %c1_i32 : i32
    %159 = vector.broadcast %158 : i32 to vector<16x1xi32>
    %160 = arith.cmpi slt, %159, %34 : vector<16x1xi32>
    %161 = vector.shape_cast %160 : vector<16x1xi1> to vector<16x1xi1>
    %162 = vector.broadcast %161 : vector<16x1xi1> to vector<16x128xi1>
    %163 = arith.select %162, %157, %83 : vector<16x128xi1>, vector<16x128xf32>
    %164 = vector.shape_cast %160 : vector<16x1xi1> to vector<16x1xi1>
    %165 = vector.broadcast %164 : vector<16x1xi1> to vector<16x128xi1>
    %166 = arith.select %165, %155, %86 : vector<16x128xi1>, vector<16x128xf32>
    %167 = vector.extract_strided_slice %132 {offsets = [0, 0], sizes = [16, 128], strides = [1, 1]} : vector<16x512xf32> to vector<16x128xf32>
    %168 = arith.negf %167 : vector<16x128xf32>
    %169 = math.exp %168 : vector<16x128xf32>
    %cst_67 = arith.constant 1.000000e+00 : f32
    %170 = vector.broadcast %cst_67 : f32 to vector<16x128xf32>
    %171 = arith.addf %170, %169 : vector<16x128xf32>
    %172 = arith.divf %170, %171 : vector<16x128xf32>
    %173 = vector.extract_strided_slice %132 {offsets = [0, 128], sizes = [16, 128], strides = [1, 1]} : vector<16x512xf32> to vector<16x128xf32>
    %174 = arith.negf %173 : vector<16x128xf32>
    %175 = math.exp %174 : vector<16x128xf32>
    %cst_68 = arith.constant 1.000000e+00 : f32
    %176 = vector.broadcast %cst_68 : f32 to vector<16x128xf32>
    %177 = arith.addf %176, %175 : vector<16x128xf32>
    %178 = arith.divf %176, %177 : vector<16x128xf32>
    %179 = vector.extract_strided_slice %132 {offsets = [0, 256], sizes = [16, 128], strides = [1, 1]} : vector<16x512xf32> to vector<16x128xf32>
    %180 = math.tanh %179 : vector<16x128xf32>
    %181 = vector.extract_strided_slice %132 {offsets = [0, 384], sizes = [16, 128], strides = [1, 1]} : vector<16x512xf32> to vector<16x128xf32>
    %182 = arith.negf %181 : vector<16x128xf32>
    %183 = math.exp %182 : vector<16x128xf32>
    %cst_69 = arith.constant 1.000000e+00 : f32
    %184 = vector.broadcast %cst_69 : f32 to vector<16x128xf32>
    %185 = arith.addf %184, %183 : vector<16x128xf32>
    %186 = arith.divf %184, %185 : vector<16x128xf32>
    %187 = arith.mulf %178, %120 : vector<16x128xf32>
    %188 = arith.mulf %172, %180 : vector<16x128xf32>
    %189 = arith.addf %187, %188 : vector<16x128xf32>
    %190 = math.tanh %189 : vector<16x128xf32>
    %191 = arith.mulf %186, %190 : vector<16x128xf32>
    %192 = arith.addi %36, %c1_i32 : i32
    %193 = vector.broadcast %192 : i32 to vector<16x1xi32>
    %194 = arith.cmpi slt, %193, %35 : vector<16x1xi32>
    %195 = vector.shape_cast %194 : vector<16x1xi1> to vector<16x1xi1>
    %196 = vector.broadcast %195 : vector<16x1xi1> to vector<16x128xi1>
    %197 = arith.select %196, %191, %117 : vector<16x128xi1>, vector<16x128xf32>
    %198 = vector.shape_cast %194 : vector<16x1xi1> to vector<16x1xi1>
    %199 = vector.broadcast %198 : vector<16x1xi1> to vector<16x128xi1>
    %200 = arith.select %199, %189, %120 : vector<16x128xi1>, vector<16x128xf32>
    %c2_i32 = arith.constant 2 : i32
    %201 = arith.index_cast %c2_i32 : i32 to index
    %c0_70 = arith.constant 0 : index
    %c0_71 = arith.constant 0 : index
    %202 = vector.load %arg19[%201, %c0_70, %c0_71] : memref<8x16x512xf32, #tpu.memory_space<vmem>>, vector<1x16x512xf32>
    %203 = vector.shape_cast %202 : vector<1x16x512xf32> to vector<16x512xf32>
    %204 = arith.truncf %163 : vector<16x128xf32> to vector<16x128xbf16>
    %cst_72 = arith.constant dense<0.000000e+00> : vector<16x512xf32>
    %205 = tpu.matmul %204, %32, %cst_72 {dimension_numbers = #tpu.dot_dimension_numbers<[1], [0], [0], [1], [0, 0, 1, 1], [], []>} : vector<16x128xbf16>, vector<128x512xbf16>, vector<16x512xf32> -> vector<16x512xf32>
    %206 = arith.addf %203, %205 : vector<16x512xf32>
    %207 = arith.index_cast %c2_i32 : i32 to index
    %c0_73 = arith.constant 0 : index
    %c0_74 = arith.constant 0 : index
    %208 = vector.load %arg20[%207, %c0_73, %c0_74] : memref<8x16x512xf32, #tpu.memory_space<vmem>>, vector<1x16x512xf32>
    %209 = vector.shape_cast %208 : vector<1x16x512xf32> to vector<16x512xf32>
    %210 = arith.truncf %197 : vector<16x128xf32> to vector<16x128xbf16>
    %cst_75 = arith.constant dense<0.000000e+00> : vector<16x512xf32>
    %211 = tpu.matmul %210, %33, %cst_75 {dimension_numbers = #tpu.dot_dimension_numbers<[1], [0], [0], [1], [0, 0, 1, 1], [], []>} : vector<16x128xbf16>, vector<128x512xbf16>, vector<16x512xf32> -> vector<16x512xf32>
    %212 = arith.addf %209, %211 : vector<16x512xf32>
    %213 = vector.extract_strided_slice %206 {offsets = [0, 0], sizes = [16, 128], strides = [1, 1]} : vector<16x512xf32> to vector<16x128xf32>
    %214 = arith.negf %213 : vector<16x128xf32>
    %215 = math.exp %214 : vector<16x128xf32>
    %cst_76 = arith.constant 1.000000e+00 : f32
    %216 = vector.broadcast %cst_76 : f32 to vector<16x128xf32>
    %217 = arith.addf %216, %215 : vector<16x128xf32>
    %218 = arith.divf %216, %217 : vector<16x128xf32>
    %219 = vector.extract_strided_slice %206 {offsets = [0, 128], sizes = [16, 128], strides = [1, 1]} : vector<16x512xf32> to vector<16x128xf32>
    %220 = arith.negf %219 : vector<16x128xf32>
    %221 = math.exp %220 : vector<16x128xf32>
    %cst_77 = arith.constant 1.000000e+00 : f32
    %222 = vector.broadcast %cst_77 : f32 to vector<16x128xf32>
    %223 = arith.addf %222, %221 : vector<16x128xf32>
    %224 = arith.divf %222, %223 : vector<16x128xf32>
    %225 = vector.extract_strided_slice %206 {offsets = [0, 256], sizes = [16, 128], strides = [1, 1]} : vector<16x512xf32> to vector<16x128xf32>
    %226 = math.tanh %225 : vector<16x128xf32>
    %227 = vector.extract_strided_slice %206 {offsets = [0, 384], sizes = [16, 128], strides = [1, 1]} : vector<16x512xf32> to vector<16x128xf32>
    %228 = arith.negf %227 : vector<16x128xf32>
    %229 = math.exp %228 : vector<16x128xf32>
    %cst_78 = arith.constant 1.000000e+00 : f32
    %230 = vector.broadcast %cst_78 : f32 to vector<16x128xf32>
    %231 = arith.addf %230, %229 : vector<16x128xf32>
    %232 = arith.divf %230, %231 : vector<16x128xf32>
    %233 = arith.mulf %224, %166 : vector<16x128xf32>
    %234 = arith.mulf %218, %226 : vector<16x128xf32>
    %235 = arith.addf %233, %234 : vector<16x128xf32>
    %236 = math.tanh %235 : vector<16x128xf32>
    %237 = arith.mulf %232, %236 : vector<16x128xf32>
    %238 = arith.addi %36, %c2_i32 : i32
    %239 = vector.broadcast %238 : i32 to vector<16x1xi32>
    %240 = arith.cmpi slt, %239, %34 : vector<16x1xi32>
    %241 = vector.shape_cast %240 : vector<16x1xi1> to vector<16x1xi1>
    %242 = vector.broadcast %241 : vector<16x1xi1> to vector<16x128xi1>
    %243 = arith.select %242, %237, %163 : vector<16x128xi1>, vector<16x128xf32>
    %244 = vector.shape_cast %240 : vector<16x1xi1> to vector<16x1xi1>
    %245 = vector.broadcast %244 : vector<16x1xi1> to vector<16x128xi1>
    %246 = arith.select %245, %235, %166 : vector<16x128xi1>, vector<16x128xf32>
    %247 = vector.extract_strided_slice %212 {offsets = [0, 0], sizes = [16, 128], strides = [1, 1]} : vector<16x512xf32> to vector<16x128xf32>
    %248 = arith.negf %247 : vector<16x128xf32>
    %249 = math.exp %248 : vector<16x128xf32>
    %cst_79 = arith.constant 1.000000e+00 : f32
    %250 = vector.broadcast %cst_79 : f32 to vector<16x128xf32>
    %251 = arith.addf %250, %249 : vector<16x128xf32>
    %252 = arith.divf %250, %251 : vector<16x128xf32>
    %253 = vector.extract_strided_slice %212 {offsets = [0, 128], sizes = [16, 128], strides = [1, 1]} : vector<16x512xf32> to vector<16x128xf32>
    %254 = arith.negf %253 : vector<16x128xf32>
    %255 = math.exp %254 : vector<16x128xf32>
    %cst_80 = arith.constant 1.000000e+00 : f32
    %256 = vector.broadcast %cst_80 : f32 to vector<16x128xf32>
    %257 = arith.addf %256, %255 : vector<16x128xf32>
    %258 = arith.divf %256, %257 : vector<16x128xf32>
    %259 = vector.extract_strided_slice %212 {offsets = [0, 256], sizes = [16, 128], strides = [1, 1]} : vector<16x512xf32> to vector<16x128xf32>
    %260 = math.tanh %259 : vector<16x128xf32>
    %261 = vector.extract_strided_slice %212 {offsets = [0, 384], sizes = [16, 128], strides = [1, 1]} : vector<16x512xf32> to vector<16x128xf32>
    %262 = arith.negf %261 : vector<16x128xf32>
    %263 = math.exp %262 : vector<16x128xf32>
    %cst_81 = arith.constant 1.000000e+00 : f32
    %264 = vector.broadcast %cst_81 : f32 to vector<16x128xf32>
    %265 = arith.addf %264, %263 : vector<16x128xf32>
    %266 = arith.divf %264, %265 : vector<16x128xf32>
    %267 = arith.mulf %258, %200 : vector<16x128xf32>
    %268 = arith.mulf %252, %260 : vector<16x128xf32>
    %269 = arith.addf %267, %268 : vector<16x128xf32>
    %270 = math.tanh %269 : vector<16x128xf32>
    %271 = arith.mulf %266, %270 : vector<16x128xf32>
    %272 = arith.addi %36, %c2_i32 : i32
    %273 = vector.broadcast %272 : i32 to vector<16x1xi32>
    %274 = arith.cmpi slt, %273, %35 : vector<16x1xi32>
    %275 = vector.shape_cast %274 : vector<16x1xi1> to vector<16x1xi1>
    %276 = vector.broadcast %275 : vector<16x1xi1> to vector<16x128xi1>
    %277 = arith.select %276, %271, %197 : vector<16x128xi1>, vector<16x128xf32>
    %278 = vector.shape_cast %274 : vector<16x1xi1> to vector<16x1xi1>
    %279 = vector.broadcast %278 : vector<16x1xi1> to vector<16x128xi1>
    %280 = arith.select %279, %269, %200 : vector<16x128xi1>, vector<16x128xf32>
    %c3_i32 = arith.constant 3 : i32
    %281 = arith.index_cast %c3_i32 : i32 to index
    %c0_82 = arith.constant 0 : index
    %c0_83 = arith.constant 0 : index
    %282 = vector.load %arg19[%281, %c0_82, %c0_83] : memref<8x16x512xf32, #tpu.memory_space<vmem>>, vector<1x16x512xf32>
    %283 = vector.shape_cast %282 : vector<1x16x512xf32> to vector<16x512xf32>
    %284 = arith.truncf %243 : vector<16x128xf32> to vector<16x128xbf16>
    %cst_84 = arith.constant dense<0.000000e+00> : vector<16x512xf32>
    %285 = tpu.matmul %284, %32, %cst_84 {dimension_numbers = #tpu.dot_dimension_numbers<[1], [0], [0], [1], [0, 0, 1, 1], [], []>} : vector<16x128xbf16>, vector<128x512xbf16>, vector<16x512xf32> -> vector<16x512xf32>
    %286 = arith.addf %283, %285 : vector<16x512xf32>
    %287 = arith.index_cast %c3_i32 : i32 to index
    %c0_85 = arith.constant 0 : index
    %c0_86 = arith.constant 0 : index
    %288 = vector.load %arg20[%287, %c0_85, %c0_86] : memref<8x16x512xf32, #tpu.memory_space<vmem>>, vector<1x16x512xf32>
    %289 = vector.shape_cast %288 : vector<1x16x512xf32> to vector<16x512xf32>
    %290 = arith.truncf %277 : vector<16x128xf32> to vector<16x128xbf16>
    %cst_87 = arith.constant dense<0.000000e+00> : vector<16x512xf32>
    %291 = tpu.matmul %290, %33, %cst_87 {dimension_numbers = #tpu.dot_dimension_numbers<[1], [0], [0], [1], [0, 0, 1, 1], [], []>} : vector<16x128xbf16>, vector<128x512xbf16>, vector<16x512xf32> -> vector<16x512xf32>
    %292 = arith.addf %289, %291 : vector<16x512xf32>
    %293 = vector.extract_strided_slice %286 {offsets = [0, 0], sizes = [16, 128], strides = [1, 1]} : vector<16x512xf32> to vector<16x128xf32>
    %294 = arith.negf %293 : vector<16x128xf32>
    %295 = math.exp %294 : vector<16x128xf32>
    %cst_88 = arith.constant 1.000000e+00 : f32
    %296 = vector.broadcast %cst_88 : f32 to vector<16x128xf32>
    %297 = arith.addf %296, %295 : vector<16x128xf32>
    %298 = arith.divf %296, %297 : vector<16x128xf32>
    %299 = vector.extract_strided_slice %286 {offsets = [0, 128], sizes = [16, 128], strides = [1, 1]} : vector<16x512xf32> to vector<16x128xf32>
    %300 = arith.negf %299 : vector<16x128xf32>
    %301 = math.exp %300 : vector<16x128xf32>
    %cst_89 = arith.constant 1.000000e+00 : f32
    %302 = vector.broadcast %cst_89 : f32 to vector<16x128xf32>
    %303 = arith.addf %302, %301 : vector<16x128xf32>
    %304 = arith.divf %302, %303 : vector<16x128xf32>
    %305 = vector.extract_strided_slice %286 {offsets = [0, 256], sizes = [16, 128], strides = [1, 1]} : vector<16x512xf32> to vector<16x128xf32>
    %306 = math.tanh %305 : vector<16x128xf32>
    %307 = vector.extract_strided_slice %286 {offsets = [0, 384], sizes = [16, 128], strides = [1, 1]} : vector<16x512xf32> to vector<16x128xf32>
    %308 = arith.negf %307 : vector<16x128xf32>
    %309 = math.exp %308 : vector<16x128xf32>
    %cst_90 = arith.constant 1.000000e+00 : f32
    %310 = vector.broadcast %cst_90 : f32 to vector<16x128xf32>
    %311 = arith.addf %310, %309 : vector<16x128xf32>
    %312 = arith.divf %310, %311 : vector<16x128xf32>
    %313 = arith.mulf %304, %246 : vector<16x128xf32>
    %314 = arith.mulf %298, %306 : vector<16x128xf32>
    %315 = arith.addf %313, %314 : vector<16x128xf32>
    %316 = math.tanh %315 : vector<16x128xf32>
    %317 = arith.mulf %312, %316 : vector<16x128xf32>
    %318 = arith.addi %36, %c3_i32 : i32
    %319 = vector.broadcast %318 : i32 to vector<16x1xi32>
    %320 = arith.cmpi slt, %319, %34 : vector<16x1xi32>
    %321 = vector.shape_cast %320 : vector<16x1xi1> to vector<16x1xi1>
    %322 = vector.broadcast %321 : vector<16x1xi1> to vector<16x128xi1>
    %323 = arith.select %322, %317, %243 : vector<16x128xi1>, vector<16x128xf32>
    %324 = vector.shape_cast %320 : vector<16x1xi1> to vector<16x1xi1>
    %325 = vector.broadcast %324 : vector<16x1xi1> to vector<16x128xi1>
    %326 = arith.select %325, %315, %246 : vector<16x128xi1>, vector<16x128xf32>
    %327 = vector.extract_strided_slice %292 {offsets = [0, 0], sizes = [16, 128], strides = [1, 1]} : vector<16x512xf32> to vector<16x128xf32>
    %328 = arith.negf %327 : vector<16x128xf32>
    %329 = math.exp %328 : vector<16x128xf32>
    %cst_91 = arith.constant 1.000000e+00 : f32
    %330 = vector.broadcast %cst_91 : f32 to vector<16x128xf32>
    %331 = arith.addf %330, %329 : vector<16x128xf32>
    %332 = arith.divf %330, %331 : vector<16x128xf32>
    %333 = vector.extract_strided_slice %292 {offsets = [0, 128], sizes = [16, 128], strides = [1, 1]} : vector<16x512xf32> to vector<16x128xf32>
    %334 = arith.negf %333 : vector<16x128xf32>
    %335 = math.exp %334 : vector<16x128xf32>
    %cst_92 = arith.constant 1.000000e+00 : f32
    %336 = vector.broadcast %cst_92 : f32 to vector<16x128xf32>
    %337 = arith.addf %336, %335 : vector<16x128xf32>
    %338 = arith.divf %336, %337 : vector<16x128xf32>
    %339 = vector.extract_strided_slice %292 {offsets = [0, 256], sizes = [16, 128], strides = [1, 1]} : vector<16x512xf32> to vector<16x128xf32>
    %340 = math.tanh %339 : vector<16x128xf32>
    %341 = vector.extract_strided_slice %292 {offsets = [0, 384], sizes = [16, 128], strides = [1, 1]} : vector<16x512xf32> to vector<16x128xf32>
    %342 = arith.negf %341 : vector<16x128xf32>
    %343 = math.exp %342 : vector<16x128xf32>
    %cst_93 = arith.constant 1.000000e+00 : f32
    %344 = vector.broadcast %cst_93 : f32 to vector<16x128xf32>
    %345 = arith.addf %344, %343 : vector<16x128xf32>
    %346 = arith.divf %344, %345 : vector<16x128xf32>
    %347 = arith.mulf %338, %280 : vector<16x128xf32>
    %348 = arith.mulf %332, %340 : vector<16x128xf32>
    %349 = arith.addf %347, %348 : vector<16x128xf32>
    %350 = math.tanh %349 : vector<16x128xf32>
    %351 = arith.mulf %346, %350 : vector<16x128xf32>
    %352 = arith.addi %36, %c3_i32 : i32
    %353 = vector.broadcast %352 : i32 to vector<16x1xi32>
    %354 = arith.cmpi slt, %353, %35 : vector<16x1xi32>
    %355 = vector.shape_cast %354 : vector<16x1xi1> to vector<16x1xi1>
    %356 = vector.broadcast %355 : vector<16x1xi1> to vector<16x128xi1>
    %357 = arith.select %356, %351, %277 : vector<16x128xi1>, vector<16x128xf32>
    %358 = vector.shape_cast %354 : vector<16x1xi1> to vector<16x1xi1>
    %359 = vector.broadcast %358 : vector<16x1xi1> to vector<16x128xi1>
    %360 = arith.select %359, %349, %280 : vector<16x128xi1>, vector<16x128xf32>
    %c4_i32 = arith.constant 4 : i32
    %361 = arith.index_cast %c4_i32 : i32 to index
    %c0_94 = arith.constant 0 : index
    %c0_95 = arith.constant 0 : index
    %362 = vector.load %arg19[%361, %c0_94, %c0_95] : memref<8x16x512xf32, #tpu.memory_space<vmem>>, vector<1x16x512xf32>
    %363 = vector.shape_cast %362 : vector<1x16x512xf32> to vector<16x512xf32>
    %364 = arith.truncf %323 : vector<16x128xf32> to vector<16x128xbf16>
    %cst_96 = arith.constant dense<0.000000e+00> : vector<16x512xf32>
    %365 = tpu.matmul %364, %32, %cst_96 {dimension_numbers = #tpu.dot_dimension_numbers<[1], [0], [0], [1], [0, 0, 1, 1], [], []>} : vector<16x128xbf16>, vector<128x512xbf16>, vector<16x512xf32> -> vector<16x512xf32>
    %366 = arith.addf %363, %365 : vector<16x512xf32>
    %367 = arith.index_cast %c4_i32 : i32 to index
    %c0_97 = arith.constant 0 : index
    %c0_98 = arith.constant 0 : index
    %368 = vector.load %arg20[%367, %c0_97, %c0_98] : memref<8x16x512xf32, #tpu.memory_space<vmem>>, vector<1x16x512xf32>
    %369 = vector.shape_cast %368 : vector<1x16x512xf32> to vector<16x512xf32>
    %370 = arith.truncf %357 : vector<16x128xf32> to vector<16x128xbf16>
    %cst_99 = arith.constant dense<0.000000e+00> : vector<16x512xf32>
    %371 = tpu.matmul %370, %33, %cst_99 {dimension_numbers = #tpu.dot_dimension_numbers<[1], [0], [0], [1], [0, 0, 1, 1], [], []>} : vector<16x128xbf16>, vector<128x512xbf16>, vector<16x512xf32> -> vector<16x512xf32>
    %372 = arith.addf %369, %371 : vector<16x512xf32>
    %373 = vector.extract_strided_slice %366 {offsets = [0, 0], sizes = [16, 128], strides = [1, 1]} : vector<16x512xf32> to vector<16x128xf32>
    %374 = arith.negf %373 : vector<16x128xf32>
    %375 = math.exp %374 : vector<16x128xf32>
    %cst_100 = arith.constant 1.000000e+00 : f32
    %376 = vector.broadcast %cst_100 : f32 to vector<16x128xf32>
    %377 = arith.addf %376, %375 : vector<16x128xf32>
    %378 = arith.divf %376, %377 : vector<16x128xf32>
    %379 = vector.extract_strided_slice %366 {offsets = [0, 128], sizes = [16, 128], strides = [1, 1]} : vector<16x512xf32> to vector<16x128xf32>
    %380 = arith.negf %379 : vector<16x128xf32>
    %381 = math.exp %380 : vector<16x128xf32>
    %cst_101 = arith.constant 1.000000e+00 : f32
    %382 = vector.broadcast %cst_101 : f32 to vector<16x128xf32>
    %383 = arith.addf %382, %381 : vector<16x128xf32>
    %384 = arith.divf %382, %383 : vector<16x128xf32>
    %385 = vector.extract_strided_slice %366 {offsets = [0, 256], sizes = [16, 128], strides = [1, 1]} : vector<16x512xf32> to vector<16x128xf32>
    %386 = math.tanh %385 : vector<16x128xf32>
    %387 = vector.extract_strided_slice %366 {offsets = [0, 384], sizes = [16, 128], strides = [1, 1]} : vector<16x512xf32> to vector<16x128xf32>
    %388 = arith.negf %387 : vector<16x128xf32>
    %389 = math.exp %388 : vector<16x128xf32>
    %cst_102 = arith.constant 1.000000e+00 : f32
    %390 = vector.broadcast %cst_102 : f32 to vector<16x128xf32>
    %391 = arith.addf %390, %389 : vector<16x128xf32>
    %392 = arith.divf %390, %391 : vector<16x128xf32>
    %393 = arith.mulf %384, %326 : vector<16x128xf32>
    %394 = arith.mulf %378, %386 : vector<16x128xf32>
    %395 = arith.addf %393, %394 : vector<16x128xf32>
    %396 = math.tanh %395 : vector<16x128xf32>
    %397 = arith.mulf %392, %396 : vector<16x128xf32>
    %398 = arith.addi %36, %c4_i32 : i32
    %399 = vector.broadcast %398 : i32 to vector<16x1xi32>
    %400 = arith.cmpi slt, %399, %34 : vector<16x1xi32>
    %401 = vector.shape_cast %400 : vector<16x1xi1> to vector<16x1xi1>
    %402 = vector.broadcast %401 : vector<16x1xi1> to vector<16x128xi1>
    %403 = arith.select %402, %397, %323 : vector<16x128xi1>, vector<16x128xf32>
    %404 = vector.shape_cast %400 : vector<16x1xi1> to vector<16x1xi1>
    %405 = vector.broadcast %404 : vector<16x1xi1> to vector<16x128xi1>
    %406 = arith.select %405, %395, %326 : vector<16x128xi1>, vector<16x128xf32>
    %407 = vector.extract_strided_slice %372 {offsets = [0, 0], sizes = [16, 128], strides = [1, 1]} : vector<16x512xf32> to vector<16x128xf32>
    %408 = arith.negf %407 : vector<16x128xf32>
    %409 = math.exp %408 : vector<16x128xf32>
    %cst_103 = arith.constant 1.000000e+00 : f32
    %410 = vector.broadcast %cst_103 : f32 to vector<16x128xf32>
    %411 = arith.addf %410, %409 : vector<16x128xf32>
    %412 = arith.divf %410, %411 : vector<16x128xf32>
    %413 = vector.extract_strided_slice %372 {offsets = [0, 128], sizes = [16, 128], strides = [1, 1]} : vector<16x512xf32> to vector<16x128xf32>
    %414 = arith.negf %413 : vector<16x128xf32>
    %415 = math.exp %414 : vector<16x128xf32>
    %cst_104 = arith.constant 1.000000e+00 : f32
    %416 = vector.broadcast %cst_104 : f32 to vector<16x128xf32>
    %417 = arith.addf %416, %415 : vector<16x128xf32>
    %418 = arith.divf %416, %417 : vector<16x128xf32>
    %419 = vector.extract_strided_slice %372 {offsets = [0, 256], sizes = [16, 128], strides = [1, 1]} : vector<16x512xf32> to vector<16x128xf32>
    %420 = math.tanh %419 : vector<16x128xf32>
    %421 = vector.extract_strided_slice %372 {offsets = [0, 384], sizes = [16, 128], strides = [1, 1]} : vector<16x512xf32> to vector<16x128xf32>
    %422 = arith.negf %421 : vector<16x128xf32>
    %423 = math.exp %422 : vector<16x128xf32>
    %cst_105 = arith.constant 1.000000e+00 : f32
    %424 = vector.broadcast %cst_105 : f32 to vector<16x128xf32>
    %425 = arith.addf %424, %423 : vector<16x128xf32>
    %426 = arith.divf %424, %425 : vector<16x128xf32>
    %427 = arith.mulf %418, %360 : vector<16x128xf32>
    %428 = arith.mulf %412, %420 : vector<16x128xf32>
    %429 = arith.addf %427, %428 : vector<16x128xf32>
    %430 = math.tanh %429 : vector<16x128xf32>
    %431 = arith.mulf %426, %430 : vector<16x128xf32>
    %432 = arith.addi %36, %c4_i32 : i32
    %433 = vector.broadcast %432 : i32 to vector<16x1xi32>
    %434 = arith.cmpi slt, %433, %35 : vector<16x1xi32>
    %435 = vector.shape_cast %434 : vector<16x1xi1> to vector<16x1xi1>
    %436 = vector.broadcast %435 : vector<16x1xi1> to vector<16x128xi1>
    %437 = arith.select %436, %431, %357 : vector<16x128xi1>, vector<16x128xf32>
    %438 = vector.shape_cast %434 : vector<16x1xi1> to vector<16x1xi1>
    %439 = vector.broadcast %438 : vector<16x1xi1> to vector<16x128xi1>
    %440 = arith.select %439, %429, %360 : vector<16x128xi1>, vector<16x128xf32>
    %c5_i32 = arith.constant 5 : i32
    %441 = arith.index_cast %c5_i32 : i32 to index
    %c0_106 = arith.constant 0 : index
    %c0_107 = arith.constant 0 : index
    %442 = vector.load %arg19[%441, %c0_106, %c0_107] : memref<8x16x512xf32, #tpu.memory_space<vmem>>, vector<1x16x512xf32>
    %443 = vector.shape_cast %442 : vector<1x16x512xf32> to vector<16x512xf32>
    %444 = arith.truncf %403 : vector<16x128xf32> to vector<16x128xbf16>
    %cst_108 = arith.constant dense<0.000000e+00> : vector<16x512xf32>
    %445 = tpu.matmul %444, %32, %cst_108 {dimension_numbers = #tpu.dot_dimension_numbers<[1], [0], [0], [1], [0, 0, 1, 1], [], []>} : vector<16x128xbf16>, vector<128x512xbf16>, vector<16x512xf32> -> vector<16x512xf32>
    %446 = arith.addf %443, %445 : vector<16x512xf32>
    %447 = arith.index_cast %c5_i32 : i32 to index
    %c0_109 = arith.constant 0 : index
    %c0_110 = arith.constant 0 : index
    %448 = vector.load %arg20[%447, %c0_109, %c0_110] : memref<8x16x512xf32, #tpu.memory_space<vmem>>, vector<1x16x512xf32>
    %449 = vector.shape_cast %448 : vector<1x16x512xf32> to vector<16x512xf32>
    %450 = arith.truncf %437 : vector<16x128xf32> to vector<16x128xbf16>
    %cst_111 = arith.constant dense<0.000000e+00> : vector<16x512xf32>
    %451 = tpu.matmul %450, %33, %cst_111 {dimension_numbers = #tpu.dot_dimension_numbers<[1], [0], [0], [1], [0, 0, 1, 1], [], []>} : vector<16x128xbf16>, vector<128x512xbf16>, vector<16x512xf32> -> vector<16x512xf32>
    %452 = arith.addf %449, %451 : vector<16x512xf32>
    %453 = vector.extract_strided_slice %446 {offsets = [0, 0], sizes = [16, 128], strides = [1, 1]} : vector<16x512xf32> to vector<16x128xf32>
    %454 = arith.negf %453 : vector<16x128xf32>
    %455 = math.exp %454 : vector<16x128xf32>
    %cst_112 = arith.constant 1.000000e+00 : f32
    %456 = vector.broadcast %cst_112 : f32 to vector<16x128xf32>
    %457 = arith.addf %456, %455 : vector<16x128xf32>
    %458 = arith.divf %456, %457 : vector<16x128xf32>
    %459 = vector.extract_strided_slice %446 {offsets = [0, 128], sizes = [16, 128], strides = [1, 1]} : vector<16x512xf32> to vector<16x128xf32>
    %460 = arith.negf %459 : vector<16x128xf32>
    %461 = math.exp %460 : vector<16x128xf32>
    %cst_113 = arith.constant 1.000000e+00 : f32
    %462 = vector.broadcast %cst_113 : f32 to vector<16x128xf32>
    %463 = arith.addf %462, %461 : vector<16x128xf32>
    %464 = arith.divf %462, %463 : vector<16x128xf32>
    %465 = vector.extract_strided_slice %446 {offsets = [0, 256], sizes = [16, 128], strides = [1, 1]} : vector<16x512xf32> to vector<16x128xf32>
    %466 = math.tanh %465 : vector<16x128xf32>
    %467 = vector.extract_strided_slice %446 {offsets = [0, 384], sizes = [16, 128], strides = [1, 1]} : vector<16x512xf32> to vector<16x128xf32>
    %468 = arith.negf %467 : vector<16x128xf32>
    %469 = math.exp %468 : vector<16x128xf32>
    %cst_114 = arith.constant 1.000000e+00 : f32
    %470 = vector.broadcast %cst_114 : f32 to vector<16x128xf32>
    %471 = arith.addf %470, %469 : vector<16x128xf32>
    %472 = arith.divf %470, %471 : vector<16x128xf32>
    %473 = arith.mulf %464, %406 : vector<16x128xf32>
    %474 = arith.mulf %458, %466 : vector<16x128xf32>
    %475 = arith.addf %473, %474 : vector<16x128xf32>
    %476 = math.tanh %475 : vector<16x128xf32>
    %477 = arith.mulf %472, %476 : vector<16x128xf32>
    %478 = arith.addi %36, %c5_i32 : i32
    %479 = vector.broadcast %478 : i32 to vector<16x1xi32>
    %480 = arith.cmpi slt, %479, %34 : vector<16x1xi32>
    %481 = vector.shape_cast %480 : vector<16x1xi1> to vector<16x1xi1>
    %482 = vector.broadcast %481 : vector<16x1xi1> to vector<16x128xi1>
    %483 = arith.select %482, %477, %403 : vector<16x128xi1>, vector<16x128xf32>
    %484 = vector.shape_cast %480 : vector<16x1xi1> to vector<16x1xi1>
    %485 = vector.broadcast %484 : vector<16x1xi1> to vector<16x128xi1>
    %486 = arith.select %485, %475, %406 : vector<16x128xi1>, vector<16x128xf32>
    %487 = vector.extract_strided_slice %452 {offsets = [0, 0], sizes = [16, 128], strides = [1, 1]} : vector<16x512xf32> to vector<16x128xf32>
    %488 = arith.negf %487 : vector<16x128xf32>
    %489 = math.exp %488 : vector<16x128xf32>
    %cst_115 = arith.constant 1.000000e+00 : f32
    %490 = vector.broadcast %cst_115 : f32 to vector<16x128xf32>
    %491 = arith.addf %490, %489 : vector<16x128xf32>
    %492 = arith.divf %490, %491 : vector<16x128xf32>
    %493 = vector.extract_strided_slice %452 {offsets = [0, 128], sizes = [16, 128], strides = [1, 1]} : vector<16x512xf32> to vector<16x128xf32>
    %494 = arith.negf %493 : vector<16x128xf32>
    %495 = math.exp %494 : vector<16x128xf32>
    %cst_116 = arith.constant 1.000000e+00 : f32
    %496 = vector.broadcast %cst_116 : f32 to vector<16x128xf32>
    %497 = arith.addf %496, %495 : vector<16x128xf32>
    %498 = arith.divf %496, %497 : vector<16x128xf32>
    %499 = vector.extract_strided_slice %452 {offsets = [0, 256], sizes = [16, 128], strides = [1, 1]} : vector<16x512xf32> to vector<16x128xf32>
    %500 = math.tanh %499 : vector<16x128xf32>
    %501 = vector.extract_strided_slice %452 {offsets = [0, 384], sizes = [16, 128], strides = [1, 1]} : vector<16x512xf32> to vector<16x128xf32>
    %502 = arith.negf %501 : vector<16x128xf32>
    %503 = math.exp %502 : vector<16x128xf32>
    %cst_117 = arith.constant 1.000000e+00 : f32
    %504 = vector.broadcast %cst_117 : f32 to vector<16x128xf32>
    %505 = arith.addf %504, %503 : vector<16x128xf32>
    %506 = arith.divf %504, %505 : vector<16x128xf32>
    %507 = arith.mulf %498, %440 : vector<16x128xf32>
    %508 = arith.mulf %492, %500 : vector<16x128xf32>
    %509 = arith.addf %507, %508 : vector<16x128xf32>
    %510 = math.tanh %509 : vector<16x128xf32>
    %511 = arith.mulf %506, %510 : vector<16x128xf32>
    %512 = arith.addi %36, %c5_i32 : i32
    %513 = vector.broadcast %512 : i32 to vector<16x1xi32>
    %514 = arith.cmpi slt, %513, %35 : vector<16x1xi32>
    %515 = vector.shape_cast %514 : vector<16x1xi1> to vector<16x1xi1>
    %516 = vector.broadcast %515 : vector<16x1xi1> to vector<16x128xi1>
    %517 = arith.select %516, %511, %437 : vector<16x128xi1>, vector<16x128xf32>
    %518 = vector.shape_cast %514 : vector<16x1xi1> to vector<16x1xi1>
    %519 = vector.broadcast %518 : vector<16x1xi1> to vector<16x128xi1>
    %520 = arith.select %519, %509, %440 : vector<16x128xi1>, vector<16x128xf32>
    %c6_i32 = arith.constant 6 : i32
    %521 = arith.index_cast %c6_i32 : i32 to index
    %c0_118 = arith.constant 0 : index
    %c0_119 = arith.constant 0 : index
    %522 = vector.load %arg19[%521, %c0_118, %c0_119] : memref<8x16x512xf32, #tpu.memory_space<vmem>>, vector<1x16x512xf32>
    %523 = vector.shape_cast %522 : vector<1x16x512xf32> to vector<16x512xf32>
    %524 = arith.truncf %483 : vector<16x128xf32> to vector<16x128xbf16>
    %cst_120 = arith.constant dense<0.000000e+00> : vector<16x512xf32>
    %525 = tpu.matmul %524, %32, %cst_120 {dimension_numbers = #tpu.dot_dimension_numbers<[1], [0], [0], [1], [0, 0, 1, 1], [], []>} : vector<16x128xbf16>, vector<128x512xbf16>, vector<16x512xf32> -> vector<16x512xf32>
    %526 = arith.addf %523, %525 : vector<16x512xf32>
    %527 = arith.index_cast %c6_i32 : i32 to index
    %c0_121 = arith.constant 0 : index
    %c0_122 = arith.constant 0 : index
    %528 = vector.load %arg20[%527, %c0_121, %c0_122] : memref<8x16x512xf32, #tpu.memory_space<vmem>>, vector<1x16x512xf32>
    %529 = vector.shape_cast %528 : vector<1x16x512xf32> to vector<16x512xf32>
    %530 = arith.truncf %517 : vector<16x128xf32> to vector<16x128xbf16>
    %cst_123 = arith.constant dense<0.000000e+00> : vector<16x512xf32>
    %531 = tpu.matmul %530, %33, %cst_123 {dimension_numbers = #tpu.dot_dimension_numbers<[1], [0], [0], [1], [0, 0, 1, 1], [], []>} : vector<16x128xbf16>, vector<128x512xbf16>, vector<16x512xf32> -> vector<16x512xf32>
    %532 = arith.addf %529, %531 : vector<16x512xf32>
    %533 = vector.extract_strided_slice %526 {offsets = [0, 0], sizes = [16, 128], strides = [1, 1]} : vector<16x512xf32> to vector<16x128xf32>
    %534 = arith.negf %533 : vector<16x128xf32>
    %535 = math.exp %534 : vector<16x128xf32>
    %cst_124 = arith.constant 1.000000e+00 : f32
    %536 = vector.broadcast %cst_124 : f32 to vector<16x128xf32>
    %537 = arith.addf %536, %535 : vector<16x128xf32>
    %538 = arith.divf %536, %537 : vector<16x128xf32>
    %539 = vector.extract_strided_slice %526 {offsets = [0, 128], sizes = [16, 128], strides = [1, 1]} : vector<16x512xf32> to vector<16x128xf32>
    %540 = arith.negf %539 : vector<16x128xf32>
    %541 = math.exp %540 : vector<16x128xf32>
    %cst_125 = arith.constant 1.000000e+00 : f32
    %542 = vector.broadcast %cst_125 : f32 to vector<16x128xf32>
    %543 = arith.addf %542, %541 : vector<16x128xf32>
    %544 = arith.divf %542, %543 : vector<16x128xf32>
    %545 = vector.extract_strided_slice %526 {offsets = [0, 256], sizes = [16, 128], strides = [1, 1]} : vector<16x512xf32> to vector<16x128xf32>
    %546 = math.tanh %545 : vector<16x128xf32>
    %547 = vector.extract_strided_slice %526 {offsets = [0, 384], sizes = [16, 128], strides = [1, 1]} : vector<16x512xf32> to vector<16x128xf32>
    %548 = arith.negf %547 : vector<16x128xf32>
    %549 = math.exp %548 : vector<16x128xf32>
    %cst_126 = arith.constant 1.000000e+00 : f32
    %550 = vector.broadcast %cst_126 : f32 to vector<16x128xf32>
    %551 = arith.addf %550, %549 : vector<16x128xf32>
    %552 = arith.divf %550, %551 : vector<16x128xf32>
    %553 = arith.mulf %544, %486 : vector<16x128xf32>
    %554 = arith.mulf %538, %546 : vector<16x128xf32>
    %555 = arith.addf %553, %554 : vector<16x128xf32>
    %556 = math.tanh %555 : vector<16x128xf32>
    %557 = arith.mulf %552, %556 : vector<16x128xf32>
    %558 = arith.addi %36, %c6_i32 : i32
    %559 = vector.broadcast %558 : i32 to vector<16x1xi32>
    %560 = arith.cmpi slt, %559, %34 : vector<16x1xi32>
    %561 = vector.shape_cast %560 : vector<16x1xi1> to vector<16x1xi1>
    %562 = vector.broadcast %561 : vector<16x1xi1> to vector<16x128xi1>
    %563 = arith.select %562, %557, %483 : vector<16x128xi1>, vector<16x128xf32>
    %564 = vector.shape_cast %560 : vector<16x1xi1> to vector<16x1xi1>
    %565 = vector.broadcast %564 : vector<16x1xi1> to vector<16x128xi1>
    %566 = arith.select %565, %555, %486 : vector<16x128xi1>, vector<16x128xf32>
    %567 = vector.extract_strided_slice %532 {offsets = [0, 0], sizes = [16, 128], strides = [1, 1]} : vector<16x512xf32> to vector<16x128xf32>
    %568 = arith.negf %567 : vector<16x128xf32>
    %569 = math.exp %568 : vector<16x128xf32>
    %cst_127 = arith.constant 1.000000e+00 : f32
    %570 = vector.broadcast %cst_127 : f32 to vector<16x128xf32>
    %571 = arith.addf %570, %569 : vector<16x128xf32>
    %572 = arith.divf %570, %571 : vector<16x128xf32>
    %573 = vector.extract_strided_slice %532 {offsets = [0, 128], sizes = [16, 128], strides = [1, 1]} : vector<16x512xf32> to vector<16x128xf32>
    %574 = arith.negf %573 : vector<16x128xf32>
    %575 = math.exp %574 : vector<16x128xf32>
    %cst_128 = arith.constant 1.000000e+00 : f32
    %576 = vector.broadcast %cst_128 : f32 to vector<16x128xf32>
    %577 = arith.addf %576, %575 : vector<16x128xf32>
    %578 = arith.divf %576, %577 : vector<16x128xf32>
    %579 = vector.extract_strided_slice %532 {offsets = [0, 256], sizes = [16, 128], strides = [1, 1]} : vector<16x512xf32> to vector<16x128xf32>
    %580 = math.tanh %579 : vector<16x128xf32>
    %581 = vector.extract_strided_slice %532 {offsets = [0, 384], sizes = [16, 128], strides = [1, 1]} : vector<16x512xf32> to vector<16x128xf32>
    %582 = arith.negf %581 : vector<16x128xf32>
    %583 = math.exp %582 : vector<16x128xf32>
    %cst_129 = arith.constant 1.000000e+00 : f32
    %584 = vector.broadcast %cst_129 : f32 to vector<16x128xf32>
    %585 = arith.addf %584, %583 : vector<16x128xf32>
    %586 = arith.divf %584, %585 : vector<16x128xf32>
    %587 = arith.mulf %578, %520 : vector<16x128xf32>
    %588 = arith.mulf %572, %580 : vector<16x128xf32>
    %589 = arith.addf %587, %588 : vector<16x128xf32>
    %590 = math.tanh %589 : vector<16x128xf32>
    %591 = arith.mulf %586, %590 : vector<16x128xf32>
    %592 = arith.addi %36, %c6_i32 : i32
    %593 = vector.broadcast %592 : i32 to vector<16x1xi32>
    %594 = arith.cmpi slt, %593, %35 : vector<16x1xi32>
    %595 = vector.shape_cast %594 : vector<16x1xi1> to vector<16x1xi1>
    %596 = vector.broadcast %595 : vector<16x1xi1> to vector<16x128xi1>
    %597 = arith.select %596, %591, %517 : vector<16x128xi1>, vector<16x128xf32>
    %598 = vector.shape_cast %594 : vector<16x1xi1> to vector<16x1xi1>
    %599 = vector.broadcast %598 : vector<16x1xi1> to vector<16x128xi1>
    %600 = arith.select %599, %589, %520 : vector<16x128xi1>, vector<16x128xf32>
    %c7_i32 = arith.constant 7 : i32
    %601 = arith.index_cast %c7_i32 : i32 to index
    %c0_130 = arith.constant 0 : index
    %c0_131 = arith.constant 0 : index
    %602 = vector.load %arg19[%601, %c0_130, %c0_131] : memref<8x16x512xf32, #tpu.memory_space<vmem>>, vector<1x16x512xf32>
    %603 = vector.shape_cast %602 : vector<1x16x512xf32> to vector<16x512xf32>
    %604 = arith.truncf %563 : vector<16x128xf32> to vector<16x128xbf16>
    %cst_132 = arith.constant dense<0.000000e+00> : vector<16x512xf32>
    %605 = tpu.matmul %604, %32, %cst_132 {dimension_numbers = #tpu.dot_dimension_numbers<[1], [0], [0], [1], [0, 0, 1, 1], [], []>} : vector<16x128xbf16>, vector<128x512xbf16>, vector<16x512xf32> -> vector<16x512xf32>
    %606 = arith.addf %603, %605 : vector<16x512xf32>
    %607 = arith.index_cast %c7_i32 : i32 to index
    %c0_133 = arith.constant 0 : index
    %c0_134 = arith.constant 0 : index
    %608 = vector.load %arg20[%607, %c0_133, %c0_134] : memref<8x16x512xf32, #tpu.memory_space<vmem>>, vector<1x16x512xf32>
    %609 = vector.shape_cast %608 : vector<1x16x512xf32> to vector<16x512xf32>
    %610 = arith.truncf %597 : vector<16x128xf32> to vector<16x128xbf16>
    %cst_135 = arith.constant dense<0.000000e+00> : vector<16x512xf32>
    %611 = tpu.matmul %610, %33, %cst_135 {dimension_numbers = #tpu.dot_dimension_numbers<[1], [0], [0], [1], [0, 0, 1, 1], [], []>} : vector<16x128xbf16>, vector<128x512xbf16>, vector<16x512xf32> -> vector<16x512xf32>
    %612 = arith.addf %609, %611 : vector<16x512xf32>
    %613 = vector.extract_strided_slice %606 {offsets = [0, 0], sizes = [16, 128], strides = [1, 1]} : vector<16x512xf32> to vector<16x128xf32>
    %614 = arith.negf %613 : vector<16x128xf32>
    %615 = math.exp %614 : vector<16x128xf32>
    %cst_136 = arith.constant 1.000000e+00 : f32
    %616 = vector.broadcast %cst_136 : f32 to vector<16x128xf32>
    %617 = arith.addf %616, %615 : vector<16x128xf32>
    %618 = arith.divf %616, %617 : vector<16x128xf32>
    %619 = vector.extract_strided_slice %606 {offsets = [0, 128], sizes = [16, 128], strides = [1, 1]} : vector<16x512xf32> to vector<16x128xf32>
    %620 = arith.negf %619 : vector<16x128xf32>
    %621 = math.exp %620 : vector<16x128xf32>
    %cst_137 = arith.constant 1.000000e+00 : f32
    %622 = vector.broadcast %cst_137 : f32 to vector<16x128xf32>
    %623 = arith.addf %622, %621 : vector<16x128xf32>
    %624 = arith.divf %622, %623 : vector<16x128xf32>
    %625 = vector.extract_strided_slice %606 {offsets = [0, 256], sizes = [16, 128], strides = [1, 1]} : vector<16x512xf32> to vector<16x128xf32>
    %626 = math.tanh %625 : vector<16x128xf32>
    %627 = vector.extract_strided_slice %606 {offsets = [0, 384], sizes = [16, 128], strides = [1, 1]} : vector<16x512xf32> to vector<16x128xf32>
    %628 = arith.negf %627 : vector<16x128xf32>
    %629 = math.exp %628 : vector<16x128xf32>
    %cst_138 = arith.constant 1.000000e+00 : f32
    %630 = vector.broadcast %cst_138 : f32 to vector<16x128xf32>
    %631 = arith.addf %630, %629 : vector<16x128xf32>
    %632 = arith.divf %630, %631 : vector<16x128xf32>
    %633 = arith.mulf %624, %566 : vector<16x128xf32>
    %634 = arith.mulf %618, %626 : vector<16x128xf32>
    %635 = arith.addf %633, %634 : vector<16x128xf32>
    %636 = math.tanh %635 : vector<16x128xf32>
    %637 = arith.mulf %632, %636 : vector<16x128xf32>
    %638 = arith.addi %36, %c7_i32 : i32
    %639 = vector.broadcast %638 : i32 to vector<16x1xi32>
    %640 = arith.cmpi slt, %639, %34 : vector<16x1xi32>
    %641 = vector.shape_cast %640 : vector<16x1xi1> to vector<16x1xi1>
    %642 = vector.broadcast %641 : vector<16x1xi1> to vector<16x128xi1>
    %643 = arith.select %642, %637, %563 : vector<16x128xi1>, vector<16x128xf32>
    %644 = vector.shape_cast %640 : vector<16x1xi1> to vector<16x1xi1>
    %645 = vector.broadcast %644 : vector<16x1xi1> to vector<16x128xi1>
    %646 = arith.select %645, %635, %566 : vector<16x128xi1>, vector<16x128xf32>
    %647 = vector.extract_strided_slice %612 {offsets = [0, 0], sizes = [16, 128], strides = [1, 1]} : vector<16x512xf32> to vector<16x128xf32>
    %648 = arith.negf %647 : vector<16x128xf32>
    %649 = math.exp %648 : vector<16x128xf32>
    %cst_139 = arith.constant 1.000000e+00 : f32
    %650 = vector.broadcast %cst_139 : f32 to vector<16x128xf32>
    %651 = arith.addf %650, %649 : vector<16x128xf32>
    %652 = arith.divf %650, %651 : vector<16x128xf32>
    %653 = vector.extract_strided_slice %612 {offsets = [0, 128], sizes = [16, 128], strides = [1, 1]} : vector<16x512xf32> to vector<16x128xf32>
    %654 = arith.negf %653 : vector<16x128xf32>
    %655 = math.exp %654 : vector<16x128xf32>
    %cst_140 = arith.constant 1.000000e+00 : f32
    %656 = vector.broadcast %cst_140 : f32 to vector<16x128xf32>
    %657 = arith.addf %656, %655 : vector<16x128xf32>
    %658 = arith.divf %656, %657 : vector<16x128xf32>
    %659 = vector.extract_strided_slice %612 {offsets = [0, 256], sizes = [16, 128], strides = [1, 1]} : vector<16x512xf32> to vector<16x128xf32>
    %660 = math.tanh %659 : vector<16x128xf32>
    %661 = vector.extract_strided_slice %612 {offsets = [0, 384], sizes = [16, 128], strides = [1, 1]} : vector<16x512xf32> to vector<16x128xf32>
    %662 = arith.negf %661 : vector<16x128xf32>
    %663 = math.exp %662 : vector<16x128xf32>
    %cst_141 = arith.constant 1.000000e+00 : f32
    %664 = vector.broadcast %cst_141 : f32 to vector<16x128xf32>
    %665 = arith.addf %664, %663 : vector<16x128xf32>
    %666 = arith.divf %664, %665 : vector<16x128xf32>
    %667 = arith.mulf %658, %600 : vector<16x128xf32>
    %668 = arith.mulf %652, %660 : vector<16x128xf32>
    %669 = arith.addf %667, %668 : vector<16x128xf32>
    %670 = math.tanh %669 : vector<16x128xf32>
    %671 = arith.mulf %666, %670 : vector<16x128xf32>
    %672 = arith.addi %36, %c7_i32 : i32
    %673 = vector.broadcast %672 : i32 to vector<16x1xi32>
    %674 = arith.cmpi slt, %673, %35 : vector<16x1xi32>
    %675 = vector.shape_cast %674 : vector<16x1xi1> to vector<16x1xi1>
    %676 = vector.broadcast %675 : vector<16x1xi1> to vector<16x128xi1>
    %677 = arith.select %676, %671, %597 : vector<16x128xi1>, vector<16x128xf32>
    %678 = vector.shape_cast %674 : vector<16x1xi1> to vector<16x1xi1>
    %679 = vector.broadcast %678 : vector<16x1xi1> to vector<16x128xi1>
    %680 = arith.select %679, %669, %600 : vector<16x128xi1>, vector<16x128xf32>
    %c8_i32_142 = arith.constant 8 : i32
    %c0_143 = arith.constant 0 : index
    %c0_144 = arith.constant 0 : index
    %681 = vector.load %arg21[%c0_143, %c0_144] : memref<16x128xf32, #tpu.memory_space<vmem>>, vector<16x128xf32>
    tpu.vector_store %arg21[%c0_143, %c0_144], %643 {strides = array<i32>} : memref<16x128xf32, #tpu.memory_space<vmem>>, vector<16x128xf32>,
    %c0_145 = arith.constant 0 : index
    %c0_146 = arith.constant 0 : index
    %682 = vector.load %arg22[%c0_145, %c0_146] : memref<16x128xf32, #tpu.memory_space<vmem>>, vector<16x128xf32>
    tpu.vector_store %arg22[%c0_145, %c0_146], %646 {strides = array<i32>} : memref<16x128xf32, #tpu.memory_space<vmem>>, vector<16x128xf32>,
    %c0_147 = arith.constant 0 : index
    %c0_148 = arith.constant 0 : index
    %683 = vector.load %arg23[%c0_147, %c0_148] : memref<16x128xf32, #tpu.memory_space<vmem>>, vector<16x128xf32>
    tpu.vector_store %arg23[%c0_147, %c0_148], %677 {strides = array<i32>} : memref<16x128xf32, #tpu.memory_space<vmem>>, vector<16x128xf32>,
    %c0_149 = arith.constant 0 : index
    %c0_150 = arith.constant 0 : index
    %684 = vector.load %arg24[%c0_149, %c0_150] : memref<16x128xf32, #tpu.memory_space<vmem>>, vector<16x128xf32>
    tpu.vector_store %arg24[%c0_149, %c0_150], %680 {strides = array<i32>} : memref<16x128xf32, #tpu.memory_space<vmem>>, vector<16x128xf32>,
    %c0_i32_151 = arith.constant 0 : i32
    %685 = arith.cmpi eq, %arg1, %c0_i32_151 : i32
    %686 = arith.extui %685 : i1 to i32
    %c0_i32_152 = arith.constant 0 : i32
    %687 = arith.cmpi ne, %686, %c0_i32_152 : i32
    scf.if %687 {
      %688 = arith.truncf %643 : vector<16x128xf32> to vector<16x128xbf16>
      %c0_153 = arith.constant 0 : index
      %c0_154 = arith.constant 0 : index
      %689 = vector.load %arg15[%c0_153, %c0_154] : memref<128x128xbf16, #tpu.memory_space<vmem>>, vector<128x128xbf16>
      %cst_155 = arith.constant dense<0.000000e+00> : vector<16x128xf32>
      %690 = tpu.matmul %688, %689, %cst_155 {dimension_numbers = #tpu.dot_dimension_numbers<[1], [0], [0], [1], [0, 0, 1, 1], [], []>} : vector<16x128xbf16>, vector<128x128xbf16>, vector<16x128xf32> -> vector<16x128xf32>
      %691 = arith.truncf %677 : vector<16x128xf32> to vector<16x128xbf16>
      %c0_156 = arith.constant 0 : index
      %c0_157 = arith.constant 0 : index
      %692 = vector.load %arg16[%c0_156, %c0_157] : memref<128x128xbf16, #tpu.memory_space<vmem>>, vector<128x128xbf16>
      %cst_158 = arith.constant dense<0.000000e+00> : vector<16x128xf32>
      %693 = tpu.matmul %691, %692, %cst_158 {dimension_numbers = #tpu.dot_dimension_numbers<[1], [0], [0], [1], [0, 0, 1, 1], [], []>} : vector<16x128xbf16>, vector<128x128xbf16>, vector<16x128xf32> -> vector<16x128xf32>
      %694 = arith.addf %690, %693 : vector<16x128xf32>
      %c0_159 = arith.constant 0 : index
      %c0_160 = arith.constant 0 : index
      %695 = vector.load %arg17[%c0_159, %c0_160] : memref<1x128xf32, #tpu.memory_space<vmem>>, vector<1x128xf32>
      %696 = vector.broadcast %695 : vector<1x128xf32> to vector<16x128xf32>
      %697 = arith.addf %694, %696 : vector<16x128xf32>
      %c0_161 = arith.constant 0 : index
      %c0_162 = arith.constant 0 : index
      %698 = vector.load %arg18[%c0_161, %c0_162] : memref<16x128xf32, #tpu.memory_space<vmem>>, vector<16x128xf32>
      tpu.vector_store %arg18[%c0_161, %c0_162], %697 {strides = array<i32>} : memref<16x128xf32, #tpu.memory_space<vmem>>, vector<16x128xf32>,
    } else {
    }
    return
  }
  func.func @transform_0(%arg0: i32, %arg1: i32) -> (i32, i32, i32) {
    %c0_i32 = arith.constant 0 : i32
    %c0_i32_0 = arith.constant 0 : i32
    return %arg1, %arg0, %c0_i32 : i32, i32, i32
  }
  func.func @transform_1(%arg0: i32, %arg1: i32) -> (i32, i32, i32) {
    %c0_i32 = arith.constant 0 : i32
    %c0_i32_0 = arith.constant 0 : i32
    return %arg1, %arg0, %c0_i32 : i32, i32, i32
  }
  func.func @transform_2(%arg0: i32, %arg1: i32) -> (i32, i32) {
    %c0_i32 = arith.constant 0 : i32
    %c0_i32_0 = arith.constant 0 : i32
    return %arg0, %c0_i32 : i32, i32
  }
  func.func @transform_3(%arg0: i32, %arg1: i32) -> (i32, i32) {
    %c0_i32 = arith.constant 0 : i32
    %c0_i32_0 = arith.constant 0 : i32
    return %arg0, %c0_i32 : i32, i32
  }
  func.func @transform_4(%arg0: i32, %arg1: i32) -> (i32, i32) {
    %c0_i32 = arith.constant 0 : i32
    %c0_i32_0 = arith.constant 0 : i32
    return %arg0, %c0_i32 : i32, i32
  }
  func.func @transform_5(%arg0: i32, %arg1: i32) -> (i32, i32) {
    %c0_i32 = arith.constant 0 : i32
    %c0_i32_0 = arith.constant 0 : i32
    %c0_i32_1 = arith.constant 0 : i32
    return %c0_i32, %c0_i32_0 : i32, i32
  }
  func.func @transform_6(%arg0: i32, %arg1: i32) -> (i32, i32) {
    %c0_i32 = arith.constant 0 : i32
    %c0_i32_0 = arith.constant 0 : i32
    %c0_i32_1 = arith.constant 0 : i32
    return %c0_i32, %c0_i32_0 : i32, i32
  }
  func.func @transform_7(%arg0: i32, %arg1: i32) -> (i32, i32) {
    %c0_i32 = arith.constant 0 : i32
    %c0_i32_0 = arith.constant 0 : i32
    %c0_i32_1 = arith.constant 0 : i32
    return %c0_i32, %c0_i32_0 : i32, i32
  }
  func.func @transform_8(%arg0: i32, %arg1: i32) -> (i32, i32) {
    %c0_i32 = arith.constant 0 : i32
    %c0_i32_0 = arith.constant 0 : i32
    %c0_i32_1 = arith.constant 0 : i32
    return %c0_i32, %c0_i32_0 : i32, i32
  }
  func.func @transform_9(%arg0: i32, %arg1: i32) -> (i32, i32) {
    %c0_i32 = arith.constant 0 : i32
    %c0_i32_0 = arith.constant 0 : i32
    %c0_i32_1 = arith.constant 0 : i32
    return %c0_i32, %c0_i32_0 : i32, i32
  }
  func.func @transform_10(%arg0: i32, %arg1: i32) -> (i32, i32) {
    %c0_i32 = arith.constant 0 : i32
    %c0_i32_0 = arith.constant 0 : i32
    %c0_i32_1 = arith.constant 0 : i32
    return %c0_i32, %c0_i32_0 : i32, i32
  }
  func.func @transform_11(%arg0: i32, %arg1: i32) -> (i32, i32) {
    %c0_i32 = arith.constant 0 : i32
    %c0_i32_0 = arith.constant 0 : i32
    %c0_i32_1 = arith.constant 0 : i32
    return %c0_i32, %c0_i32_0 : i32, i32
  }
  func.func @transform_12(%arg0: i32, %arg1: i32) -> (i32, i32) {
    %c0_i32 = arith.constant 0 : i32
    %c0_i32_0 = arith.constant 0 : i32
    %c0_i32_1 = arith.constant 0 : i32
    return %c0_i32, %c0_i32_0 : i32, i32
  }
  func.func @transform_13(%arg0: i32, %arg1: i32) -> (i32, i32) {
    %c0_i32 = arith.constant 0 : i32
    %c0_i32_0 = arith.constant 0 : i32
    %c0_i32_1 = arith.constant 0 : i32
    return %c0_i32, %c0_i32_0 : i32, i32
  }
  func.func @transform_14(%arg0: i32, %arg1: i32) -> (i32, i32) {
    %c0_i32 = arith.constant 0 : i32
    %c0_i32_0 = arith.constant 0 : i32
    %c0_i32_1 = arith.constant 0 : i32
    return %c0_i32, %c0_i32_0 : i32, i32
  }
  func.func @transform_15(%arg0: i32, %arg1: i32) -> (i32, i32) {
    %c0_i32 = arith.constant 0 : i32
    %c0_i32_0 = arith.constant 0 : i32
    %c0_i32_1 = arith.constant 0 : i32
    return %c0_i32, %c0_i32_0 : i32, i32
  }
  func.func @transform_16(%arg0: i32, %arg1: i32) -> (i32, i32) {
    %c0_i32 = arith.constant 0 : i32
    %c0_i32_0 = arith.constant 0 : i32
    return %arg0, %c0_i32 : i32, i32
  }
}

</mosaic_0001>

<llo_original>
// kernel: tc_lstm_forward.1
$region0: #{tc_lstm_forward.1}
  #allocation0 [shape = 'u32[]', space=smem, size = 0x4, offset = 0x4, fixed_abs, tag = 'smem constant byte address 0x4 - core index']
  #allocation1 [shape = 'u32[144,128]{1,0:T(1,128)}', space=vmem, size = 0x12000, scoped, tag = 'internal scratch']
  #allocation2 [shape = 'f32[8,16,512]{2,1,0:T(8,128)}', space=vmem, size = 0x40000, scoped, tag = 'scratch operand']
  #allocation3 [shape = 'f32[8,16,512]{2,1,0:T(8,128)}', space=vmem, size = 0x40000, scoped, tag = 'scratch operand']
  #allocation4 [shape = 'f32[16,128]{1,0:T(8,128)}', space=vmem, size = 0x2000, scoped, tag = 'scratch operand']
  #allocation5 [shape = 'f32[16,128]{1,0:T(8,128)}', space=vmem, size = 0x2000, scoped, tag = 'scratch operand']
  #allocation6 [shape = 'f32[16,128]{1,0:T(8,128)}', space=vmem, size = 0x2000, scoped, tag = 'scratch operand']
  #allocation7 [shape = 'f32[16,128]{1,0:T(8,128)}', space=vmem, size = 0x2000, scoped, tag = 'scratch operand']
  %s0 = inlined_call_operand.hbm [shape: bf16[8,16,16], index: 0, kind: input, shape index: {}]
  %s1 = inlined_call_operand.hbm [shape: bf16[8,16,16], index: 1, kind: input, shape index: {}]
  %s2 = inlined_call_operand.hbm [shape: bf16[16,16], index: 2, kind: input, shape index: {}]
  %s3 = inlined_call_operand.hbm [shape: s32[16,1], index: 3, kind: input, shape index: {}]
  %s4 = inlined_call_operand.hbm [shape: s32[16,1], index: 4, kind: input, shape index: {}]
  %s5 = inlined_call_operand.hbm [shape: bf16[16,512], index: 5, kind: input, shape index: {}]
  %s6 = inlined_call_operand.hbm [shape: bf16[16,512], index: 6, kind: input, shape index: {}]
  %s7 = inlined_call_operand.hbm [shape: bf16[128,512], index: 7, kind: input, shape index: {}]
  %s8 = inlined_call_operand.hbm [shape: f32[1,512], index: 8, kind: input, shape index: {}]
  %s9 = inlined_call_operand.hbm [shape: bf16[16,512], index: 9, kind: input, shape index: {}]
  %s10 = inlined_call_operand.hbm [shape: bf16[16,512], index: 10, kind: input, shape index: {}]
  %s11 = inlined_call_operand.hbm [shape: bf16[128,512], index: 11, kind: input, shape index: {}]
  %s12 = inlined_call_operand.hbm [shape: f32[1,512], index: 12, kind: input, shape index: {}]
  %s13 = inlined_call_operand.hbm [shape: bf16[128,128], index: 13, kind: input, shape index: {}]
  %s14 = inlined_call_operand.hbm [shape: bf16[128,128], index: 14, kind: input, shape index: {}]
  %s15 = inlined_call_operand.hbm [shape: f32[1,128], index: 15, kind: input, shape index: {}]
  %s16 = inlined_call_operand.hbm [shape: f32[16,128], index: 16, kind: output, shape index: {}]
  %s17 = sld [smem:[#allocation0]]
  $region146: #{tc_lstm_forward.1} parent=0
    _
  %s19 = ssub.s32 1, %s17
  %s20 = scalar_select 0, %s19, %s17
  $region1: #{tc_lstm_forward.1} parent=0
    #allocation8 [shape = 'u8[32768]{0}', space=vmem, size = 0x8000, scoped, tag = 'input window, operand 0, single buffered']
    #allocation9 [shape = 's32[1]{0}', space=sflag, size = 0x4, scoped, tag = 'scoped memory for tc_lstm_forward.1']
    #allocation10 [shape = 's32[1]{0}', space=sflag, size = 0x4, scoped, tag = 'scoped memory for tc_lstm_forward.1']
    #allocation11 [shape = 'u8[32768]{0}', space=vmem, size = 0x8000, scoped, tag = 'input window, operand 1, single buffered']
    #allocation12 [shape = 's32[1]{0}', space=sflag, size = 0x4, scoped, tag = 'scoped memory for tc_lstm_forward.1']
    #allocation13 [shape = 'u8[4096]{0}', space=vmem, size = 0x1000, scoped, tag = 'input window, operand 2, single buffered']
    #allocation14 [shape = 'u8[8192]{0}', space=vmem, size = 0x2000, scoped, tag = 'input window, operand 3, single buffered']
    #allocation15 [shape = 's32[1]{0}', space=sflag, size = 0x4, scoped, tag = 'scoped memory for tc_lstm_forward.1']
    #allocation16 [shape = 'u8[8192]{0}', space=vmem, size = 0x2000, scoped, tag = 'input window, operand 4, single buffered']
    #allocation17 [shape = 'u8[16384]{0}', space=vmem, size = 0x4000, scoped, tag = 'input window, operand 5, single buffered']
    #allocation18 [shape = 's32[1]{0}', space=sflag, size = 0x4, scoped, tag = 'scoped memory for tc_lstm_forward.1']
    #allocation19 [shape = 'u8[16384]{0}', space=vmem, size = 0x4000, scoped, tag = 'input window, operand 6, single buffered']
    #allocation20 [shape = 'u8[131072]{0}', space=vmem, size = 0x20000, scoped, tag = 'input window, operand 7, single buffered']
    #allocation21 [shape = 's32[1]{0}', space=sflag, size = 0x4, scoped, tag = 'scoped memory for tc_lstm_forward.1']
    #allocation22 [shape = 'u8[2048]{0}', space=vmem, size = 0x800, scoped, tag = 'input window, operand 8, single buffered']
    #allocation23 [shape = 'u8[16384]{0}', space=vmem, size = 0x4000, scoped, tag = 'input window, operand 9, single buffered']
    #allocation24 [shape = 's32[1]{0}', space=sflag, size = 0x4, scoped, tag = 'scoped memory for tc_lstm_forward.1']
    #allocation25 [shape = 'u8[16384]{0}', space=vmem, size = 0x4000, scoped, tag = 'input window, operand 10, single buffered']
    #allocation26 [shape = 'u8[131072]{0}', space=vmem, size = 0x20000, scoped, tag = 'input window, operand 11, single buffered']
    #allocation27 [shape = 's32[1]{0}', space=sflag, size = 0x4, scoped, tag = 'scoped memory for tc_lstm_forward.1']
    #allocation28 [shape = 'u8[2048]{0}', space=vmem, size = 0x800, scoped, tag = 'input window, operand 12, single buffered']
    #allocation29 [shape = 'u8[32768]{0}', space=vmem, size = 0x8000, scoped, tag = 'input window, operand 13, single buffered']
    #allocation30 [shape = 's32[1]{0}', space=sflag, size = 0x4, scoped, tag = 'scoped memory for tc_lstm_forward.1']
    #allocation31 [shape = 'u8[32768]{0}', space=vmem, size = 0x8000, scoped, tag = 'input window, operand 14, single buffered']
    #allocation32 [shape = 'u8[512]{0}', space=vmem, size = 0x400, scoped, tag = 'input window, operand 15, single buffered']
    #allocation33 [shape = 's32[1]{0}', space=sflag, size = 0x4, scoped, tag = 'scoped memory for tc_lstm_forward.1']
    #allocation34 [shape = 'u8[8192]{0}', space=vmem, size = 0x2000, scoped, tag = 'output window, operand 0, single buffered']
    %21 = vsyncpa [#allocation9], 0
    %22 = vsyncpa [#allocation12], 0
    %23 = vsyncpa [#allocation15], 0
    %24 = vsyncpa [#allocation18], 0
    %25 = vsyncpa [#allocation21], 0
    %26 = vsyncpa [#allocation24], 0
    %27 = vsyncpa [#allocation27], 0
    %28 = vsyncpa [#allocation30], 0
    %29 = vsyncpa [#allocation33], 0
    %30 = vsyncpa [#allocation10], 0
    // Predicated region
    $region2: #{tc_lstm_forward.1} parent=1 // pred_check
      _
    $region3: #{tc_lstm_forward.1} parent=1 // pred_check_branch
      %32 = sbr.rel (0) target = $region5
    $region4: #{tc_lstm_forward.1} parent=1 // pred_region
      %s34 = ssub.s32 1024, 1024
      %35 = vsyncadd [#allocation9], %s34
      %s36 = sshll.u32 [#allocation8], 4
      %s37 = int_to_ptr.vmem [resolvable:$true] %s36
      %42 = dma.hbm_to_vmem [thread:$0]  %s0, 1024, %s37, [#allocation9], 64, 64, 4
    $region5: #{tc_lstm_forward.1} parent=1 // pred_fallthru
      _
    // Predicated region
    $region6: #{tc_lstm_forward.1} parent=1 // pred_check
      _
    $region7: #{tc_lstm_forward.1} parent=1 // pred_check_branch
      %44 = sbr.rel (0) target = $region9
    $region8: #{tc_lstm_forward.1} parent=1 // pred_region
      %s46 = ssub.s32 1024, 1024
      %47 = vsyncadd [#allocation12], %s46
      %s48 = sshll.u32 [#allocation11], 4
      %s49 = int_to_ptr.vmem [resolvable:$true] %s48
      %54 = dma.hbm_to_vmem [thread:$0]  %s1, 1024, %s49, [#allocation12], 64, 64, 4
    $region9: #{tc_lstm_forward.1} parent=1 // pred_fallthru
      _
    // Predicated region
    $region10: #{tc_lstm_forward.1} parent=1 // pred_check
      _
    $region11: #{tc_lstm_forward.1} parent=1 // pred_check_branch
      %56 = sbr.rel (0) target = $region13
    $region12: #{tc_lstm_forward.1} parent=1 // pred_region
      %s58 = ssub.s32 128, 128
      %59 = vsyncadd [#allocation12], %s58
      %s60 = sshll.u32 [#allocation13], 4
      %s61 = int_to_ptr.vmem [resolvable:$true] %s60
      %66 = dma.hbm_to_vmem [thread:$0]  %s2, 128, %s61, [#allocation12], 64, 64, 4
    $region13: #{tc_lstm_forward.1} parent=1 // pred_fallthru
      _
    // Predicated region
    $region14: #{tc_lstm_forward.1} parent=1 // pred_check
      _
    $region15: #{tc_lstm_forward.1} parent=1 // pred_check_branch
      %68 = sbr.rel (0) target = $region17
    $region16: #{tc_lstm_forward.1} parent=1 // pred_region
      %s70 = ssub.s32 256, 256
      %71 = vsyncadd [#allocation15], %s70
      %s72 = sshll.u32 [#allocation14], 4
      %s73 = int_to_ptr.vmem [resolvable:$true] %s72
      %78 = dma.hbm_to_vmem [thread:$0]  %s3, 256, %s73, [#allocation15], 128, 128, 8
    $region17: #{tc_lstm_forward.1} parent=1 // pred_fallthru
      _
    // Predicated region
    $region18: #{tc_lstm_forward.1} parent=1 // pred_check
      _
    $region19: #{tc_lstm_forward.1} parent=1 // pred_check_branch
      %80 = sbr.rel (0) target = $region21
    $region20: #{tc_lstm_forward.1} parent=1 // pred_region
      %s82 = ssub.s32 256, 256
      %83 = vsyncadd [#allocation15], %s82
      %s84 = sshll.u32 [#allocation16], 4
      %s85 = int_to_ptr.vmem [resolvable:$true] %s84
      %90 = dma.hbm_to_vmem [thread:$0]  %s4, 256, %s85, [#allocation15], 128, 128, 8
    $region21: #{tc_lstm_forward.1} parent=1 // pred_fallthru
      _
    // Predicated region
    $region22: #{tc_lstm_forward.1} parent=1 // pred_check
      _
    $region23: #{tc_lstm_forward.1} parent=1 // pred_check_branch
      %92 = sbr.rel (0) target = $region25
    $region24: #{tc_lstm_forward.1} parent=1 // pred_region
      %s94 = ssub.s32 512, 512
      %95 = vsyncadd [#allocation18], %s94
      %s96 = sshll.u32 [#allocation17], 4
      %s97 = int_to_ptr.vmem [resolvable:$true] %s96
      %102 = dma.hbm_to_vmem [thread:$0]  %s5, 512, %s97, [#allocation18], 256, 256, 16
    $region25: #{tc_lstm_forward.1} parent=1 // pred_fallthru
      _
    // Predicated region
    $region26: #{tc_lstm_forward.1} parent=1 // pred_check
      _
    $region27: #{tc_lstm_forward.1} parent=1 // pred_check_branch
      %104 = sbr.rel (0) target = $region29
    $region28: #{tc_lstm_forward.1} parent=1 // pred_region
      %s106 = ssub.s32 512, 512
      %107 = vsyncadd [#allocation18], %s106
      %s108 = sshll.u32 [#allocation19], 4
      %s109 = int_to_ptr.vmem [resolvable:$true] %s108
      %114 = dma.hbm_to_vmem [thread:$0]  %s6, 512, %s109, [#allocation18], 256, 256, 16
    $region29: #{tc_lstm_forward.1} parent=1 // pred_fallthru
      _
    // Predicated region
    $region30: #{tc_lstm_forward.1} parent=1 // pred_check
      _
    $region31: #{tc_lstm_forward.1} parent=1 // pred_check_branch
      %116 = sbr.rel (0) target = $region33
    $region32: #{tc_lstm_forward.1} parent=1 // pred_region
      %s118 = ssub.s32 4096, 4096
      %119 = vsyncadd [#allocation21], %s118
      %s120 = sshll.u32 [#allocation20], 4
      %s121 = int_to_ptr.vmem [resolvable:$true] %s120
      %126 = dma.hbm_to_vmem [thread:$0]  %s7, 4096, %s121, [#allocation21], 256, 256, 16
    $region33: #{tc_lstm_forward.1} parent=1 // pred_fallthru
      _
    // Predicated region
    $region34: #{tc_lstm_forward.1} parent=1 // pred_check
      _
    $region35: #{tc_lstm_forward.1} parent=1 // pred_check_branch
      %128 = sbr.rel (0) target = $region37
    $region36: #{tc_lstm_forward.1} parent=1 // pred_region
      %s130 = ssub.s32 64, 64
      %131 = vsyncadd [#allocation21], %s130
      %s133 = sshll.u32 [#allocation22], 4
      %s134 = int_to_ptr.vmem [resolvable:$true] %s133
      %136 = dma.hbm_to_vmem [thread:$0]  %s8, 64, %s134, [#allocation21]
    $region37: #{tc_lstm_forward.1} parent=1 // pred_fallthru
      _
    // Predicated region
    $region38: #{tc_lstm_forward.1} parent=1 // pred_check
      _
    $region39: #{tc_lstm_forward.1} parent=1 // pred_check_branch
      %138 = sbr.rel (0) target = $region41
    $region40: #{tc_lstm_forward.1} parent=1 // pred_region
      %s140 = ssub.s32 512, 512
      %141 = vsyncadd [#allocation24], %s140
      %s142 = sshll.u32 [#allocation23], 4
      %s143 = int_to_ptr.vmem [resolvable:$true] %s142
      %148 = dma.hbm_to_vmem [thread:$0]  %s9, 512, %s143, [#allocation24], 256, 256, 16
    $region41: #{tc_lstm_forward.1} parent=1 // pred_fallthru
      _
    // Predicated region
    $region42: #{tc_lstm_forward.1} parent=1 // pred_check
      _
    $region43: #{tc_lstm_forward.1} parent=1 // pred_check_branch
      %150 = sbr.rel (0) target = $region45
    $region44: #{tc_lstm_forward.1} parent=1 // pred_region
      %s152 = ssub.s32 512, 512
      %153 = vsyncadd [#allocation24], %s152
      %s154 = sshll.u32 [#allocation25], 4
      %s155 = int_to_ptr.vmem [resolvable:$true] %s154
      %160 = dma.hbm_to_vmem [thread:$0]  %s10, 512, %s155, [#allocation24], 256, 256, 16
    $region45: #{tc_lstm_forward.1} parent=1 // pred_fallthru
      _
    // Predicated region
    $region46: #{tc_lstm_forward.1} parent=1 // pred_check
      _
    $region47: #{tc_lstm_forward.1} parent=1 // pred_check_branch
      %162 = sbr.rel (0) target = $region49
    $region48: #{tc_lstm_forward.1} parent=1 // pred_region
      %s164 = ssub.s32 4096, 4096
      %165 = vsyncadd [#allocation27], %s164
      %s166 = sshll.u32 [#allocation26], 4
      %s167 = int_to_ptr.vmem [resolvable:$true] %s166
      %172 = dma.hbm_to_vmem [thread:$0]  %s11, 4096, %s167, [#allocation27], 256, 256, 16
    $region49: #{tc_lstm_forward.1} parent=1 // pred_fallthru
      _
    // Predicated region
    $region50: #{tc_lstm_forward.1} parent=1 // pred_check
      _
    $region51: #{tc_lstm_forward.1} parent=1 // pred_check_branch
      %174 = sbr.rel (0) target = $region53
    $region52: #{tc_lstm_forward.1} parent=1 // pred_region
      %s176 = ssub.s32 64, 64
      %177 = vsyncadd [#allocation27], %s176
      %s179 = sshll.u32 [#allocation28], 4
      %s180 = int_to_ptr.vmem [resolvable:$true] %s179
      %182 = dma.hbm_to_vmem [thread:$0]  %s12, 64, %s180, [#allocation27]
    $region53: #{tc_lstm_forward.1} parent=1 // pred_fallthru
      _
    // Predicated region
    $region54: #{tc_lstm_forward.1} parent=1 // pred_check
      _
    $region55: #{tc_lstm_forward.1} parent=1 // pred_check_branch
      %184 = sbr.rel (0) target = $region57
    $region56: #{tc_lstm_forward.1} parent=1 // pred_region
      %s186 = ssub.s32 1024, 1024
      %187 = vsyncadd [#allocation30], %s186
      %s188 = sshll.u32 [#allocation29], 4
      %s189 = int_to_ptr.vmem [resolvable:$true] %s188
      %194 = dma.hbm_to_vmem [thread:$0]  %s13, 1024, %s189, [#allocation30], 64, 64, 4
    $region57: #{tc_lstm_forward.1} parent=1 // pred_fallthru
      _
    // Predicated region
    $region58: #{tc_lstm_forward.1} parent=1 // pred_check
      _
    $region59: #{tc_lstm_forward.1} parent=1 // pred_check_branch
      %196 = sbr.rel (0) target = $region61
    $region60: #{tc_lstm_forward.1} parent=1 // pred_region
      %s198 = ssub.s32 1024, 1024
      %199 = vsyncadd [#allocation30], %s198
      %s200 = sshll.u32 [#allocation31], 4
      %s201 = int_to_ptr.vmem [resolvable:$true] %s200
      %206 = dma.hbm_to_vmem [thread:$0]  %s14, 1024, %s201, [#allocation30], 64, 64, 4
    $region61: #{tc_lstm_forward.1} parent=1 // pred_fallthru
      _
    // Predicated region
    $region62: #{tc_lstm_forward.1} parent=1 // pred_check
      _
    $region63: #{tc_lstm_forward.1} parent=1 // pred_check_branch
      %208 = sbr.rel (0) target = $region65
    $region64: #{tc_lstm_forward.1} parent=1 // pred_region
      %s210 = ssub.s32 16, 16
      %211 = vsyncadd [#allocation33], %s210
      %s213 = sshll.u32 [#allocation32], 4
      %s214 = int_to_ptr.vmem [resolvable:$true] %s213
      %216 = dma.hbm_to_vmem [thread:$0]  %s15, 16, %s214, [#allocation33]
    $region65: #{tc_lstm_forward.1} parent=1 // pred_fallthru
      _
    // Predicated region
    $region66: #{tc_lstm_forward.1} parent=1 // pred_check
      _
    $region67: #{tc_lstm_forward.1} parent=1 // pred_check_branch
      %218 = sbr.rel (0) target = $region69
    $region68: #{tc_lstm_forward.1} parent=1 // pred_region
      %219 = dma.done [#allocation9], 1024
    $region69: #{tc_lstm_forward.1} parent=1 // pred_fallthru
      _
    // Predicated region
    $region70: #{tc_lstm_forward.1} parent=1 // pred_check
      _
    $region71: #{tc_lstm_forward.1} parent=1 // pred_check_branch
      %221 = sbr.rel (0) target = $region73
    $region72: #{tc_lstm_forward.1} parent=1 // pred_region
      %222 = dma.done [#allocation12], 1024
    $region73: #{tc_lstm_forward.1} parent=1 // pred_fallthru
      _
    // Predicated region
    $region74: #{tc_lstm_forward.1} parent=1 // pred_check
      _
    $region75: #{tc_lstm_forward.1} parent=1 // pred_check_branch
      %224 = sbr.rel (0) target = $region77
    $region76: #{tc_lstm_forward.1} parent=1 // pred_region
      %225 = dma.done [#allocation12], 128
    $region77: #{tc_lstm_forward.1} parent=1 // pred_fallthru
      _
    // Predicated region
    $region78: #{tc_lstm_forward.1} parent=1 // pred_check
      _
    $region79: #{tc_lstm_forward.1} parent=1 // pred_check_branch
      %227 = sbr.rel (0) target = $region81
    $region80: #{tc_lstm_forward.1} parent=1 // pred_region
      %228 = dma.done [#allocation15], 256
    $region81: #{tc_lstm_forward.1} parent=1 // pred_fallthru
      _
    // Predicated region
    $region82: #{tc_lstm_forward.1} parent=1 // pred_check
      _
    $region83: #{tc_lstm_forward.1} parent=1 // pred_check_branch
      %230 = sbr.rel (0) target = $region85
    $region84: #{tc_lstm_forward.1} parent=1 // pred_region
      %231 = dma.done [#allocation15], 256
    $region85: #{tc_lstm_forward.1} parent=1 // pred_fallthru
      _
    // Predicated region
    $region86: #{tc_lstm_forward.1} parent=1 // pred_check
      _
    $region87: #{tc_lstm_forward.1} parent=1 // pred_check_branch
      %233 = sbr.rel (0) target = $region89
    $region88: #{tc_lstm_forward.1} parent=1 // pred_region
      %234 = dma.done [#allocation18], 512
    $region89: #{tc_lstm_forward.1} parent=1 // pred_fallthru
      _
    // Predicated region
    $region90: #{tc_lstm_forward.1} parent=1 // pred_check
      _
    $region91: #{tc_lstm_forward.1} parent=1 // pred_check_branch
      %236 = sbr.rel (0) target = $region93
    $region92: #{tc_lstm_forward.1} parent=1 // pred_region
      %237 = dma.done [#allocation18], 512
    $region93: #{tc_lstm_forward.1} parent=1 // pred_fallthru
      _
    // Predicated region
    $region94: #{tc_lstm_forward.1} parent=1 // pred_check
      _
    $region95: #{tc_lstm_forward.1} parent=1 // pred_check_branch
      %239 = sbr.rel (0) target = $region97
    $region96: #{tc_lstm_forward.1} parent=1 // pred_region
      %240 = dma.done [#allocation21], 4096
    $region97: #{tc_lstm_forward.1} parent=1 // pred_fallthru
      _
    // Predicated region
    $region98: #{tc_lstm_forward.1} parent=1 // pred_check
      _
    $region99: #{tc_lstm_forward.1} parent=1 // pred_check_branch
      %242 = sbr.rel (0) target = $region101
    $region100: #{tc_lstm_forward.1} parent=1 // pred_region
      %243 = dma.done [#allocation21], 64
    $region101: #{tc_lstm_forward.1} parent=1 // pred_fallthru
      _
    // Predicated region
    $region102: #{tc_lstm_forward.1} parent=1 // pred_check
      _
    $region103: #{tc_lstm_forward.1} parent=1 // pred_check_branch
      %245 = sbr.rel (0) target = $region105
    $region104: #{tc_lstm_forward.1} parent=1 // pred_region
      %246 = dma.done [#allocation24], 512
    $region105: #{tc_lstm_forward.1} parent=1 // pred_fallthru
      _
    // Predicated region
    $region106: #{tc_lstm_forward.1} parent=1 // pred_check
      _
    $region107: #{tc_lstm_forward.1} parent=1 // pred_check_branch
      %248 = sbr.rel (0) target = $region109
    $region108: #{tc_lstm_forward.1} parent=1 // pred_region
      %249 = dma.done [#allocation24], 512
    $region109: #{tc_lstm_forward.1} parent=1 // pred_fallthru
      _
    // Predicated region
    $region110: #{tc_lstm_forward.1} parent=1 // pred_check
      _
    $region111: #{tc_lstm_forward.1} parent=1 // pred_check_branch
      %251 = sbr.rel (0) target = $region113
    $region112: #{tc_lstm_forward.1} parent=1 // pred_region
      %252 = dma.done [#allocation27], 4096
    $region113: #{tc_lstm_forward.1} parent=1 // pred_fallthru
      _
    // Predicated region
    $region114: #{tc_lstm_forward.1} parent=1 // pred_check
      _
    $region115: #{tc_lstm_forward.1} parent=1 // pred_check_branch
      %254 = sbr.rel (0) target = $region117
    $region116: #{tc_lstm_forward.1} parent=1 // pred_region
      %255 = dma.done [#allocation27], 64
    $region117: #{tc_lstm_forward.1} parent=1 // pred_fallthru
      _
    // Predicated region
    $region118: #{tc_lstm_forward.1} parent=1 // pred_check
      _
    $region119: #{tc_lstm_forward.1} parent=1 // pred_check_branch
      %257 = sbr.rel (0) target = $region121
    $region120: #{tc_lstm_forward.1} parent=1 // pred_region
      %258 = dma.done [#allocation30], 1024
    $region121: #{tc_lstm_forward.1} parent=1 // pred_fallthru
      _
    // Predicated region
    $region122: #{tc_lstm_forward.1} parent=1 // pred_check
      _
    $region123: #{tc_lstm_forward.1} parent=1 // pred_check_branch
      %260 = sbr.rel (0) target = $region125
    $region124: #{tc_lstm_forward.1} parent=1 // pred_region
      %261 = dma.done [#allocation30], 1024
    $region125: #{tc_lstm_forward.1} parent=1 // pred_fallthru
      _
    // Predicated region
    $region126: #{tc_lstm_forward.1} parent=1 // pred_check
      _
    $region127: #{tc_lstm_forward.1} parent=1 // pred_check_branch
      %263 = sbr.rel (0) target = $region129
    $region128: #{tc_lstm_forward.1} parent=1 // pred_region
      %264 = dma.done [#allocation33], 16
    $region129: #{tc_lstm_forward.1} parent=1 // pred_fallthru
      _
    %p266 = scmp.eq.s32.totalorder 0, 0
    // Predicated region
    $region130: #{tc_lstm_forward.1} parent=1 // pred_check
      %p267 = pneg %p266
    $region131: #{tc_lstm_forward.1} parent=1 // pred_check_branch
      %269 = sbr.rel (%p267) target = $region133
    $region132: #{tc_lstm_forward.1} parent=1 // pred_region
      %270 = vst [vmem:[#allocation4] sm:$0xff] 0.0
      %271 = vst [vmem:[#allocation4 + $0x8] sm:$0xff] 0.0
      %272 = vst [vmem:[#allocation5] sm:$0xff] 0.0
      %273 = vst [vmem:[#allocation5 + $0x8] sm:$0xff] 0.0
      %274 = vst [vmem:[#allocation6] sm:$0xff] 0.0
      %275 = vst [vmem:[#allocation6 + $0x8] sm:$0xff] 0.0
      %276 = vst [vmem:[#allocation7] sm:$0xff] 0.0
      %277 = vst [vmem:[#allocation7 + $0x8] sm:$0xff] 0.0
    $region133: #{tc_lstm_forward.1} parent=1 // pred_fallthru
      _
    %v278 = vld [vmem:[#allocation13] sm:$0xf]
    %v279 = vld [vmem:[#allocation13 + $0x4] sm:$0xf]
    %v280 = vld [vmem:[#allocation19] sm:$0xff]
    %v281 = vld [vmem:[#allocation19 + $0x8] sm:$0xff]
    %v282 = vld [vmem:[#allocation19 + $0x10] sm:$0xff]
    %v283 = vld [vmem:[#allocation19 + $0x18] sm:$0xff]
    %v284 = vld [vmem:[#allocation22] sm:$0xf]
    %v286 = vlaneseq
    %v287 = vshrl.u32 %v286, 7
    %v288 = vsub.s32 0, %v287
    %v289 = vrot.slane %v284, %v288
    %v290 = vlaneseq
    %v291 = vshrl.u32 %v290, 7
    %v292 = vsub.s32 1, %v291
    %v293 = vrot.slane %v284, %v292
    %v294 = vlaneseq
    %v295 = vshrl.u32 %v294, 7
    %v296 = vsub.s32 2, %v295
    %v297 = vrot.slane %v284, %v296
    %v298 = vlaneseq
    %v299 = vshrl.u32 %v298, 7
    %v300 = vsub.s32 3, %v299
    %v301 = vrot.slane %v284, %v300
    %v308 = vunpack.c.l.b16 %v278
    %v309 = vunpack.c.l.b16 %v279
    %v310 = vpack.c.b16 %v309, %v308
    %v315 = vunpack.c.l.b16 %v280
    %v316 = vunpack.c.h.b16 %v280
    %v317 = vunpack.c.l.b16 %v281
    %v318 = vunpack.c.h.b16 %v281
    %v319 = vunpack.c.l.b16 %v282
    %v320 = vunpack.c.h.b16 %v282
    %v321 = vunpack.c.l.b16 %v283
    %v322 = vunpack.c.h.b16 %v283
    %v323 = vpack.c.b16 %v319, %v315
    %v324 = vpack.c.b16 %v320, %v316
    %v325 = vpack.c.b16 %v321, %v317
    %v326 = vpack.c.b16 %v322, %v318
    %vm331 = vcmask 130048
    %v333 = vsel %vm331, %v310, 0
    %335 = vmatprep.subr.bf16.mxu0 %v324
    %336 = vmatpush1.bf16.msra.mxu0 %v323
    %337 = vmatprep.subr.bf16.mxu0 0
    %338 = vmatpush1.bf16.msra.mxu0 0
    %339 = vmatprep.subr.bf16.mxu0 0
    %340 = vmatpush1.bf16.msra.mxu0 0
    %341 = vmatprep.subr.bf16.mxu0 0
    %342 = vmatpush1.bf16.msra.mxu0 0
    %343 = vmatprep.subr.bf16.mxu0 0
    %344 = vmatpush1.bf16.msra.mxu0 0
    %345 = vmatprep.subr.bf16.mxu0 0
    %346 = vmatpush1.bf16.msra.mxu0 0
    %347 = vmatprep.subr.bf16.mxu0 0
    %348 = vmatpush1.bf16.msra.mxu0 0
    %349 = vmatprep.subr.bf16.mxu0 0
    %350 = vmatpush1.bf16.msra.mxu0 0
    %351 = vmatprep.subr.bf16.mxu0 0
    %352 = vmatpush1.bf16.msra.mxu0 0
    %353 = vmatprep.subr.bf16.mxu0 0
    %354 = vmatpush1.bf16.msra.mxu0 0
    %355 = vmatprep.subr.bf16.mxu0 0
    %356 = vmatpush1.bf16.msra.mxu0 0
    %357 = vmatprep.subr.bf16.mxu0 0
    %358 = vmatpush1.bf16.msra.mxu0 0
    %359 = vmatprep.subr.bf16.mxu0 0
    %360 = vmatpush1.bf16.msra.mxu0 0
    %361 = vmatprep.subr.bf16.mxu0 0
    %362 = vmatpush1.bf16.msra.mxu0 0
    %363 = vmatprep.subr.bf16.mxu0 0
    %364 = vmatpush1.bf16.msra.mxu0 0
    %365 = vmatprep.subr.bf16.mxu0 0
    %366 = vmatpush1.bf16.msra.mxu0 0
    %367 = vmatprep.mubr.bf16.mxu0 0
    %368 = vmatmul.mubr.bf16.gmra.mrb[0].mxu0 %v333
    %v369 = vpop.f32.mrb[0].mxu0
    %v370 = vadd.f32 %v289, %v369
    %v371 = vpop.f32.mrb[0].mxu0
    %v372 = vadd.f32 %v293, %v371
    %v373 = vpop.f32.mrb[0].mxu0
    %v374 = vadd.f32 %v289, %v373
    %v375 = vpop.f32.mrb[0].mxu0
    %v376 = vadd.f32 %v293, %v375
    %377 = vdwg.mxu0
    %378 = vmatprep.subr.bf16.mxu0 %v326
    %379 = vmatpush1.bf16.msra.mxu0 %v325
    %380 = vmatprep.subr.bf16.mxu0 0
    %381 = vmatpush1.bf16.msra.mxu0 0
    %382 = vmatprep.subr.bf16.mxu0 0
    %383 = vmatpush1.bf16.msra.mxu0 0
    %384 = vmatprep.subr.bf16.mxu0 0
    %385 = vmatpush1.bf16.msra.mxu0 0
    %386 = vmatprep.subr.bf16.mxu0 0
    %387 = vmatpush1.bf16.msra.mxu0 0
    %388 = vmatprep.subr.bf16.mxu0 0
    %389 = vmatpush1.bf16.msra.mxu0 0
    %390 = vmatprep.subr.bf16.mxu0 0
    %391 = vmatpush1.bf16.msra.mxu0 0
    %392 = vmatprep.subr.bf16.mxu0 0
    %393 = vmatpush1.bf16.msra.mxu0 0
    %394 = vmatprep.subr.bf16.mxu0 0
    %395 = vmatpush1.bf16.msra.mxu0 0
    %396 = vmatprep.subr.bf16.mxu0 0
    %397 = vmatpush1.bf16.msra.mxu0 0
    %398 = vmatprep.subr.bf16.mxu0 0
    %399 = vmatpush1.bf16.msra.mxu0 0
    %400 = vmatprep.subr.bf16.mxu0 0
    %401 = vmatpush1.bf16.msra.mxu0 0
    %402 = vmatprep.subr.bf16.mxu0 0
    %403 = vmatpush1.bf16.msra.mxu0 0
    %404 = vmatprep.subr.bf16.mxu0 0
    %405 = vmatpush1.bf16.msra.mxu0 0
    %406 = vmatprep.subr.bf16.mxu0 0
    %407 = vmatpush1.bf16.msra.mxu0 0
    %408 = vmatprep.subr.bf16.mxu0 0
    %409 = vmatpush1.bf16.msra.mxu0 0
    %410 = vmatprep.mubr.bf16.mxu0 0
    %411 = vmatmul.mubr.bf16.gmra.mrb[0].mxu0 %v333
    %v412 = vpop.f32.mrb[0].mxu0
    %v413 = vadd.f32 %v297, %v412
    %v414 = vpop.f32.mrb[0].mxu0
    %v415 = vadd.f32 %v301, %v414
    %v416 = vpop.f32.mrb[0].mxu0
    %v417 = vadd.f32 %v297, %v416
    %v418 = vpop.f32.mrb[0].mxu0
    %v419 = vadd.f32 %v301, %v418
    %420 = vdwg.mxu0
    %v421 = vld [vmem:[#allocation25] sm:$0xff]
    %v422 = vld [vmem:[#allocation25 + $0x8] sm:$0xff]
    %v423 = vld [vmem:[#allocation25 + $0x10] sm:$0xff]
    %v424 = vld [vmem:[#allocation25 + $0x18] sm:$0xff]
    %v425 = vld [vmem:[#allocation28] sm:$0xf]
    %v427 = vlaneseq
    %v428 = vshrl.u32 %v427, 7
    %v429 = vsub.s32 0, %v428
    %v430 = vrot.slane %v425, %v429
    %v431 = vlaneseq
    %v432 = vshrl.u32 %v431, 7
    %v433 = vsub.s32 1, %v432
    %v434 = vrot.slane %v425, %v433
    %v435 = vlaneseq
    %v436 = vshrl.u32 %v435, 7
    %v437 = vsub.s32 2, %v436
    %v438 = vrot.slane %v425, %v437
    %v439 = vlaneseq
    %v440 = vshrl.u32 %v439, 7
    %v441 = vsub.s32 3, %v440
    %v442 = vrot.slane %v425, %v441
    %v451 = vunpack.c.l.b16 %v421
    %v452 = vunpack.c.h.b16 %v421
    %v453 = vunpack.c.l.b16 %v422
    %v454 = vunpack.c.h.b16 %v422
    %v455 = vunpack.c.l.b16 %v423
    %v456 = vunpack.c.h.b16 %v423
    %v457 = vunpack.c.l.b16 %v424
    %v458 = vunpack.c.h.b16 %v424
    %v459 = vpack.c.b16 %v455, %v451
    %v460 = vpack.c.b16 %v456, %v452
    %v461 = vpack.c.b16 %v457, %v453
    %v462 = vpack.c.b16 %v458, %v454
    %467 = vmatprep.subr.bf16.mxu0 %v460
    %468 = vmatpush1.bf16.msra.mxu0 %v459
    %469 = vmatprep.subr.bf16.mxu0 0
    %470 = vmatpush1.bf16.msra.mxu0 0
    %471 = vmatprep.subr.bf16.mxu0 0
    %472 = vmatpush1.bf16.msra.mxu0 0
    %473 = vmatprep.subr.bf16.mxu0 0
    %474 = vmatpush1.bf16.msra.mxu0 0
    %475 = vmatprep.subr.bf16.mxu0 0
    %476 = vmatpush1.bf16.msra.mxu0 0
    %477 = vmatprep.subr.bf16.mxu0 0
    %478 = vmatpush1.bf16.msra.mxu0 0
    %479 = vmatprep.subr.bf16.mxu0 0
    %480 = vmatpush1.bf16.msra.mxu0 0
    %481 = vmatprep.subr.bf16.mxu0 0
    %482 = vmatpush1.bf16.msra.mxu0 0
    %483 = vmatprep.subr.bf16.mxu0 0
    %484 = vmatpush1.bf16.msra.mxu0 0
    %485 = vmatprep.subr.bf16.mxu0 0
    %486 = vmatpush1.bf16.msra.mxu0 0
    %487 = vmatprep.subr.bf16.mxu0 0
    %488 = vmatpush1.bf16.msra.mxu0 0
    %489 = vmatprep.subr.bf16.mxu0 0
    %490 = vmatpush1.bf16.msra.mxu0 0
    %491 = vmatprep.subr.bf16.mxu0 0
    %492 = vmatpush1.bf16.msra.mxu0 0
    %493 = vmatprep.subr.bf16.mxu0 0
    %494 = vmatpush1.bf16.msra.mxu0 0
    %495 = vmatprep.subr.bf16.mxu0 0
    %496 = vmatpush1.bf16.msra.mxu0 0
    %497 = vmatprep.subr.bf16.mxu0 0
    %498 = vmatpush1.bf16.msra.mxu0 0
    %499 = vmatprep.mubr.bf16.mxu0 0
    %500 = vmatmul.mubr.bf16.gmra.mrb[0].mxu0 %v333
    %v501 = vpop.f32.mrb[0].mxu0
    %v502 = vadd.f32 %v430, %v501
    %v503 = vpop.f32.mrb[0].mxu0
    %v504 = vadd.f32 %v434, %v503
    %v505 = vpop.f32.mrb[0].mxu0
    %v506 = vadd.f32 %v430, %v505
    %v507 = vpop.f32.mrb[0].mxu0
    %v508 = vadd.f32 %v434, %v507
    %509 = vdwg.mxu0
    %510 = vmatprep.subr.bf16.mxu0 %v462
    %511 = vmatpush1.bf16.msra.mxu0 %v461
    %512 = vmatprep.subr.bf16.mxu0 0
    %513 = vmatpush1.bf16.msra.mxu0 0
    %514 = vmatprep.subr.bf16.mxu0 0
    %515 = vmatpush1.bf16.msra.mxu0 0
    %516 = vmatprep.subr.bf16.mxu0 0
    %517 = vmatpush1.bf16.msra.mxu0 0
    %518 = vmatprep.subr.bf16.mxu0 0
    %519 = vmatpush1.bf16.msra.mxu0 0
    %520 = vmatprep.subr.bf16.mxu0 0
    %521 = vmatpush1.bf16.msra.mxu0 0
    %522 = vmatprep.subr.bf16.mxu0 0
    %523 = vmatpush1.bf16.msra.mxu0 0
    %524 = vmatprep.subr.bf16.mxu0 0
    %525 = vmatpush1.bf16.msra.mxu0 0
    %526 = vmatprep.subr.bf16.mxu0 0
    %527 = vmatpush1.bf16.msra.mxu0 0
    %528 = vmatprep.subr.bf16.mxu0 0
    %529 = vmatpush1.bf16.msra.mxu0 0
    %530 = vmatprep.subr.bf16.mxu0 0
    %531 = vmatpush1.bf16.msra.mxu0 0
    %532 = vmatprep.subr.bf16.mxu0 0
    %533 = vmatpush1.bf16.msra.mxu0 0
    %534 = vmatprep.subr.bf16.mxu0 0
    %535 = vmatpush1.bf16.msra.mxu0 0
    %536 = vmatprep.subr.bf16.mxu0 0
    %537 = vmatpush1.bf16.msra.mxu0 0
    %538 = vmatprep.subr.bf16.mxu0 0
    %539 = vmatpush1.bf16.msra.mxu0 0
    %540 = vmatprep.subr.bf16.mxu0 0
    %541 = vmatpush1.bf16.msra.mxu0 0
    %542 = vmatprep.mubr.bf16.mxu0 0
    %543 = vmatmul.mubr.bf16.gmra.mrb[0].mxu0 %v333
    %v544 = vpop.f32.mrb[0].mxu0
    %v545 = vadd.f32 %v438, %v544
    %v546 = vpop.f32.mrb[0].mxu0
    %v547 = vadd.f32 %v442, %v546
    %v548 = vpop.f32.mrb[0].mxu0
    %v549 = vadd.f32 %v438, %v548
    %v550 = vpop.f32.mrb[0].mxu0
    %v551 = vadd.f32 %v442, %v550
    %552 = vdwg.mxu0
    %v553 = vld [vmem:[#allocation8] sm:$0xf]
    %v554 = vld [vmem:[#allocation8 + $0x4] sm:$0xf]
    %v555 = vld [vmem:[#allocation8 + $0x8] sm:$0xf]
    %v556 = vld [vmem:[#allocation8 + $0xc] sm:$0xf]
    %v557 = vld [vmem:[#allocation8 + $0x10] sm:$0xf]
    %v558 = vld [vmem:[#allocation8 + $0x14] sm:$0xf]
    %v559 = vld [vmem:[#allocation8 + $0x18] sm:$0xf]
    %v560 = vld [vmem:[#allocation8 + $0x1c] sm:$0xf]
    %v561 = vld [vmem:[#allocation8 + $0x20] sm:$0xf]
    %v562 = vld [vmem:[#allocation8 + $0x24] sm:$0xf]
    %v563 = vld [vmem:[#allocation8 + $0x28] sm:$0xf]
    %v564 = vld [vmem:[#allocation8 + $0x2c] sm:$0xf]
    %v565 = vld [vmem:[#allocation8 + $0x30] sm:$0xf]
    %v566 = vld [vmem:[#allocation8 + $0x34] sm:$0xf]
    %v567 = vld [vmem:[#allocation8 + $0x38] sm:$0xf]
    %v568 = vld [vmem:[#allocation8 + $0x3c] sm:$0xf]
    %v569 = vld [vmem:[#allocation11] sm:$0xf]
    %v570 = vld [vmem:[#allocation11 + $0x4] sm:$0xf]
    %v571 = vld [vmem:[#allocation11 + $0x8] sm:$0xf]
    %v572 = vld [vmem:[#allocation11 + $0xc] sm:$0xf]
    %v573 = vld [vmem:[#allocation11 + $0x10] sm:$0xf]
    %v574 = vld [vmem:[#allocation11 + $0x14] sm:$0xf]
    %v575 = vld [vmem:[#allocation11 + $0x18] sm:$0xf]
    %v576 = vld [vmem:[#allocation11 + $0x1c] sm:$0xf]
    %v577 = vld [vmem:[#allocation11 + $0x20] sm:$0xf]
    %v578 = vld [vmem:[#allocation11 + $0x24] sm:$0xf]
    %v579 = vld [vmem:[#allocation11 + $0x28] sm:$0xf]
    %v580 = vld [vmem:[#allocation11 + $0x2c] sm:$0xf]
    %v581 = vld [vmem:[#allocation11 + $0x30] sm:$0xf]
    %v582 = vld [vmem:[#allocation11 + $0x34] sm:$0xf]
    %v583 = vld [vmem:[#allocation11 + $0x38] sm:$0xf]
    %v584 = vld [vmem:[#allocation11 + $0x3c] sm:$0xf]
    %v585 = vld [vmem:[#allocation17] sm:$0xff]
    %v586 = vld [vmem:[#allocation17 + $0x8] sm:$0xff]
    %v587 = vld [vmem:[#allocation17 + $0x10] sm:$0xff]
    %v588 = vld [vmem:[#allocation17 + $0x18] sm:$0xff]
    %v605 = vunpack.c.l.b16 %v553
    %v606 = vunpack.c.l.b16 %v554
    %v607 = vunpack.c.l.b16 %v555
    %v608 = vunpack.c.l.b16 %v556
    %v609 = vunpack.c.l.b16 %v557
    %v610 = vunpack.c.l.b16 %v558
    %v611 = vunpack.c.l.b16 %v559
    %v612 = vunpack.c.l.b16 %v560
    %v613 = vunpack.c.l.b16 %v561
    %v614 = vunpack.c.l.b16 %v562
    %v615 = vunpack.c.l.b16 %v563
    %v616 = vunpack.c.l.b16 %v564
    %v617 = vunpack.c.l.b16 %v565
    %v618 = vunpack.c.l.b16 %v566
    %v619 = vunpack.c.l.b16 %v567
    %v620 = vunpack.c.l.b16 %v568
    %v621 = vpack.c.b16 %v606, %v605
    %v622 = vpack.c.b16 %v608, %v607
    %v623 = vpack.c.b16 %v610, %v609
    %v624 = vpack.c.b16 %v612, %v611
    %v625 = vpack.c.b16 %v614, %v613
    %v626 = vpack.c.b16 %v616, %v615
    %v627 = vpack.c.b16 %v618, %v617
    %v628 = vpack.c.b16 %v620, %v619
    %v633 = vunpack.c.l.b16 %v585
    %v634 = vunpack.c.h.b16 %v585
    %v635 = vunpack.c.l.b16 %v586
    %v636 = vunpack.c.h.b16 %v586
    %v637 = vunpack.c.l.b16 %v587
    %v638 = vunpack.c.h.b16 %v587
    %v639 = vunpack.c.l.b16 %v588
    %v640 = vunpack.c.h.b16 %v588
    %v641 = vpack.c.b16 %v637, %v633
    %v642 = vpack.c.b16 %v638, %v634
    %v643 = vpack.c.b16 %v639, %v635
    %v644 = vpack.c.b16 %v640, %v636
    %v650 = vsel %vm331, %v621, 0
    %v653 = vsel %vm331, %v622, 0
    %v656 = vsel %vm331, %v623, 0
    %v659 = vsel %vm331, %v624, 0
    %v662 = vsel %vm331, %v625, 0
    %v665 = vsel %vm331, %v626, 0
    %v668 = vsel %vm331, %v627, 0
    %v671 = vsel %vm331, %v628, 0
    %673 = vmatprep.subr.bf16.mxu0 %v642
    %674 = vmatpush1.bf16.msra.mxu0 %v641
    %675 = vmatprep.subr.bf16.mxu0 0
    %676 = vmatpush1.bf16.msra.mxu0 0
    %677 = vmatprep.subr.bf16.mxu0 0
    %678 = vmatpush1.bf16.msra.mxu0 0
    %679 = vmatprep.subr.bf16.mxu0 0
    %680 = vmatpush1.bf16.msra.mxu0 0
    %681 = vmatprep.subr.bf16.mxu0 0
    %682 = vmatpush1.bf16.msra.mxu0 0
    %683 = vmatprep.subr.bf16.mxu0 0
    %684 = vmatpush1.bf16.msra.mxu0 0
    %685 = vmatprep.subr.bf16.mxu0 0
    %686 = vmatpush1.bf16.msra.mxu0 0
    %687 = vmatprep.subr.bf16.mxu0 0
    %688 = vmatpush1.bf16.msra.mxu0 0
    %689 = vmatprep.subr.bf16.mxu0 0
    %690 = vmatpush1.bf16.msra.mxu0 0
    %691 = vmatprep.subr.bf16.mxu0 0
    %692 = vmatpush1.bf16.msra.mxu0 0
    %693 = vmatprep.subr.bf16.mxu0 0
    %694 = vmatpush1.bf16.msra.mxu0 0
    %695 = vmatprep.subr.bf16.mxu0 0
    %696 = vmatpush1.bf16.msra.mxu0 0
    %697 = vmatprep.subr.bf16.mxu0 0
    %698 = vmatpush1.bf16.msra.mxu0 0
    %699 = vmatprep.subr.bf16.mxu0 0
    %700 = vmatpush1.bf16.msra.mxu0 0
    %701 = vmatprep.subr.bf16.mxu0 0
    %702 = vmatpush1.bf16.msra.mxu0 0
    %703 = vmatprep.subr.bf16.mxu0 0
    %704 = vmatpush1.bf16.msra.mxu0 0
    %705 = vmatprep.mubr.bf16.mxu0 0
    %706 = vmatmul.mubr.bf16.gmra.mrb[0].mxu0 %v650
    %v707 = vpop.f32.mrb[0].mxu0
    %v708 = vadd.f32 0.0, %v707
    %v709 = vpop.f32.mrb[0].mxu0
    %v710 = vadd.f32 0.0, %v709
    %v711 = vpop.f32.mrb[0].mxu0
    %v712 = vadd.f32 0.0, %v711
    %v713 = vpop.f32.mrb[0].mxu0
    %v714 = vadd.f32 0.0, %v713
    %715 = vmatprep.mubr.bf16.mxu0 0
    %716 = vmatmul.mubr.bf16.gmra.mrb[0].mxu0 %v653
    %v717 = vpop.f32.mrb[0].mxu0
    %v718 = vadd.f32 0.0, %v717
    %v719 = vpop.f32.mrb[0].mxu0
    %v720 = vadd.f32 0.0, %v719
    %v721 = vpop.f32.mrb[0].mxu0
    %v722 = vadd.f32 0.0, %v721
    %v723 = vpop.f32.mrb[0].mxu0
    %v724 = vadd.f32 0.0, %v723
    %725 = vmatprep.mubr.bf16.mxu0 0
    %726 = vmatmul.mubr.bf16.gmra.mrb[0].mxu0 %v656
    %v727 = vpop.f32.mrb[0].mxu0
    %v728 = vadd.f32 0.0, %v727
    %v729 = vpop.f32.mrb[0].mxu0
    %v730 = vadd.f32 0.0, %v729
    %v731 = vpop.f32.mrb[0].mxu0
    %v732 = vadd.f32 0.0, %v731
    %v733 = vpop.f32.mrb[0].mxu0
    %v734 = vadd.f32 0.0, %v733
    %735 = vmatprep.mubr.bf16.mxu0 0
    %736 = vmatmul.mubr.bf16.gmra.mrb[0].mxu0 %v659
    %v737 = vpop.f32.mrb[0].mxu0
    %v738 = vadd.f32 0.0, %v737
    %v739 = vpop.f32.mrb[0].mxu0
    %v740 = vadd.f32 0.0, %v739
    %v741 = vpop.f32.mrb[0].mxu0
    %v742 = vadd.f32 0.0, %v741
    %v743 = vpop.f32.mrb[0].mxu0
    %v744 = vadd.f32 0.0, %v743
    %745 = vmatprep.mubr.bf16.mxu0 0
    %746 = vmatmul.mubr.bf16.gmra.mrb[0].mxu0 %v662
    %v747 = vpop.f32.mrb[0].mxu0
    %v748 = vadd.f32 0.0, %v747
    %v749 = vpop.f32.mrb[0].mxu0
    %v750 = vadd.f32 0.0, %v749
    %v751 = vpop.f32.mrb[0].mxu0
    %v752 = vadd.f32 0.0, %v751
    %v753 = vpop.f32.mrb[0].mxu0
    %v754 = vadd.f32 0.0, %v753
    %755 = vmatprep.mubr.bf16.mxu0 0
    %756 = vmatmul.mubr.bf16.gmra.mrb[0].mxu0 %v665
    %v757 = vpop.f32.mrb[0].mxu0
    %v758 = vadd.f32 0.0, %v757
    %v759 = vpop.f32.mrb[0].mxu0
    %v760 = vadd.f32 0.0, %v759
    %v761 = vpop.f32.mrb[0].mxu0
    %v762 = vadd.f32 0.0, %v761
    %v763 = vpop.f32.mrb[0].mxu0
    %v764 = vadd.f32 0.0, %v763
    %765 = vmatprep.mubr.bf16.mxu0 0
    %766 = vmatmul.mubr.bf16.gmra.mrb[0].mxu0 %v668
    %v767 = vpop.f32.mrb[0].mxu0
    %v768 = vadd.f32 0.0, %v767
    %v769 = vpop.f32.mrb[0].mxu0
    %v770 = vadd.f32 0.0, %v769
    %v771 = vpop.f32.mrb[0].mxu0
    %v772 = vadd.f32 0.0, %v771
    %v773 = vpop.f32.mrb[0].mxu0
    %v774 = vadd.f32 0.0, %v773
    %775 = vmatprep.mubr.bf16.mxu0 0
    %776 = vmatmul.mubr.bf16.gmra.mrb[0].mxu0 %v671
    %v777 = vpop.f32.mrb[0].mxu0
    %v778 = vadd.f32 0.0, %v777
    %v779 = vpop.f32.mrb[0].mxu0
    %v780 = vadd.f32 0.0, %v779
    %v781 = vpop.f32.mrb[0].mxu0
    %v782 = vadd.f32 0.0, %v781
    %v783 = vpop.f32.mrb[0].mxu0
    %v784 = vadd.f32 0.0, %v783
    %785 = vdwg.mxu0
    %786 = vmatprep.subr.bf16.mxu0 %v644
    %787 = vmatpush1.bf16.msra.mxu0 %v643
    %788 = vmatprep.subr.bf16.mxu0 0
    %789 = vmatpush1.bf16.msra.mxu0 0
    %790 = vmatprep.subr.bf16.mxu0 0
    %791 = vmatpush1.bf16.msra.mxu0 0
    %792 = vmatprep.subr.bf16.mxu0 0
    %793 = vmatpush1.bf16.msra.mxu0 0
    %794 = vmatprep.subr.bf16.mxu0 0
    %795 = vmatpush1.bf16.msra.mxu0 0
    %796 = vmatprep.subr.bf16.mxu0 0
    %797 = vmatpush1.bf16.msra.mxu0 0
    %798 = vmatprep.subr.bf16.mxu0 0
    %799 = vmatpush1.bf16.msra.mxu0 0
    %800 = vmatprep.subr.bf16.mxu0 0
    %801 = vmatpush1.bf16.msra.mxu0 0
    %802 = vmatprep.subr.bf16.mxu0 0
    %803 = vmatpush1.bf16.msra.mxu0 0
    %804 = vmatprep.subr.bf16.mxu0 0
    %805 = vmatpush1.bf16.msra.mxu0 0
    %806 = vmatprep.subr.bf16.mxu0 0
    %807 = vmatpush1.bf16.msra.mxu0 0
    %808 = vmatprep.subr.bf16.mxu0 0
    %809 = vmatpush1.bf16.msra.mxu0 0
    %810 = vmatprep.subr.bf16.mxu0 0
    %811 = vmatpush1.bf16.msra.mxu0 0
    %812 = vmatprep.subr.bf16.mxu0 0
    %813 = vmatpush1.bf16.msra.mxu0 0
    %814 = vmatprep.subr.bf16.mxu0 0
    %815 = vmatpush1.bf16.msra.mxu0 0
    %816 = vmatprep.subr.bf16.mxu0 0
    %817 = vmatpush1.bf16.msra.mxu0 0
    %818 = vmatprep.mubr.bf16.mxu0 0
    %819 = vmatmul.mubr.bf16.gmra.mrb[0].mxu0 %v650
    %v820 = vpop.f32.mrb[0].mxu0
    %v821 = vadd.f32 0.0, %v820
    %v822 = vpop.f32.mrb[0].mxu0
    %v823 = vadd.f32 0.0, %v822
    %v824 = vpop.f32.mrb[0].mxu0
    %v825 = vadd.f32 0.0, %v824
    %v826 = vpop.f32.mrb[0].mxu0
    %v827 = vadd.f32 0.0, %v826
    %828 = vmatprep.mubr.bf16.mxu0 0
    %829 = vmatmul.mubr.bf16.gmra.mrb[0].mxu0 %v653
    %v830 = vpop.f32.mrb[0].mxu0
    %v831 = vadd.f32 0.0, %v830
    %v832 = vpop.f32.mrb[0].mxu0
    %v833 = vadd.f32 0.0, %v832
    %v834 = vpop.f32.mrb[0].mxu0
    %v835 = vadd.f32 0.0, %v834
    %v836 = vpop.f32.mrb[0].mxu0
    %v837 = vadd.f32 0.0, %v836
    %838 = vmatprep.mubr.bf16.mxu0 0
    %839 = vmatmul.mubr.bf16.gmra.mrb[0].mxu0 %v656
    %v840 = vpop.f32.mrb[0].mxu0
    %v841 = vadd.f32 0.0, %v840
    %v842 = vpop.f32.mrb[0].mxu0
    %v843 = vadd.f32 0.0, %v842
    %v844 = vpop.f32.mrb[0].mxu0
    %v845 = vadd.f32 0.0, %v844
    %v846 = vpop.f32.mrb[0].mxu0
    %v847 = vadd.f32 0.0, %v846
    %848 = vmatprep.mubr.bf16.mxu0 0
    %849 = vmatmul.mubr.bf16.gmra.mrb[0].mxu0 %v659
    %v850 = vpop.f32.mrb[0].mxu0
    %v851 = vadd.f32 0.0, %v850
    %v852 = vpop.f32.mrb[0].mxu0
    %v853 = vadd.f32 0.0, %v852
    %v854 = vpop.f32.mrb[0].mxu0
    %v855 = vadd.f32 0.0, %v854
    %v856 = vpop.f32.mrb[0].mxu0
    %v857 = vadd.f32 0.0, %v856
    %858 = vmatprep.mubr.bf16.mxu0 0
    %859 = vmatmul.mubr.bf16.gmra.mrb[0].mxu0 %v662
    %v860 = vpop.f32.mrb[0].mxu0
    %v861 = vadd.f32 0.0, %v860
    %v862 = vpop.f32.mrb[0].mxu0
    %v863 = vadd.f32 0.0, %v862
    %v864 = vpop.f32.mrb[0].mxu0
    %v865 = vadd.f32 0.0, %v864
    %v866 = vpop.f32.mrb[0].mxu0
    %v867 = vadd.f32 0.0, %v866
    %868 = vmatprep.mubr.bf16.mxu0 0
    %869 = vmatmul.mubr.bf16.gmra.mrb[0].mxu0 %v665
    %v870 = vpop.f32.mrb[0].mxu0
    %v871 = vadd.f32 0.0, %v870
    %v872 = vpop.f32.mrb[0].mxu0
    %v873 = vadd.f32 0.0, %v872
    %v874 = vpop.f32.mrb[0].mxu0
    %v875 = vadd.f32 0.0, %v874
    %v876 = vpop.f32.mrb[0].mxu0
    %v877 = vadd.f32 0.0, %v876
    %878 = vmatprep.mubr.bf16.mxu0 0
    %879 = vmatmul.mubr.bf16.gmra.mrb[0].mxu0 %v668
    %v880 = vpop.f32.mrb[0].mxu0
    %v881 = vadd.f32 0.0, %v880
    %v882 = vpop.f32.mrb[0].mxu0
    %v883 = vadd.f32 0.0, %v882
    %v884 = vpop.f32.mrb[0].mxu0
    %v885 = vadd.f32 0.0, %v884
    %v886 = vpop.f32.mrb[0].mxu0
    %v887 = vadd.f32 0.0, %v886
    %888 = vmatprep.mubr.bf16.mxu0 0
    %889 = vmatmul.mubr.bf16.gmra.mrb[0].mxu0 %v671
    %v890 = vpop.f32.mrb[0].mxu0
    %v891 = vadd.f32 0.0, %v890
    %v892 = vpop.f32.mrb[0].mxu0
    %v893 = vadd.f32 0.0, %v892
    %v894 = vpop.f32.mrb[0].mxu0
    %v895 = vadd.f32 0.0, %v894
    %v896 = vpop.f32.mrb[0].mxu0
    %v897 = vadd.f32 0.0, %v896
    %898 = vdwg.mxu0
    %v899 = vld [vmem:[#allocation23] sm:$0xff]
    %v900 = vld [vmem:[#allocation23 + $0x8] sm:$0xff]
    %v901 = vld [vmem:[#allocation23 + $0x10] sm:$0xff]
    %v902 = vld [vmem:[#allocation23 + $0x18] sm:$0xff]
    %v919 = vunpack.c.l.b16 %v569
    %v920 = vunpack.c.l.b16 %v570
    %v921 = vunpack.c.l.b16 %v571
    %v922 = vunpack.c.l.b16 %v572
    %v923 = vunpack.c.l.b16 %v573
    %v924 = vunpack.c.l.b16 %v574
    %v925 = vunpack.c.l.b16 %v575
    %v926 = vunpack.c.l.b16 %v576
    %v927 = vunpack.c.l.b16 %v577
    %v928 = vunpack.c.l.b16 %v578
    %v929 = vunpack.c.l.b16 %v579
    %v930 = vunpack.c.l.b16 %v580
    %v931 = vunpack.c.l.b16 %v581
    %v932 = vunpack.c.l.b16 %v582
    %v933 = vunpack.c.l.b16 %v583
    %v934 = vunpack.c.l.b16 %v584
    %v935 = vpack.c.b16 %v920, %v919
    %v936 = vpack.c.b16 %v922, %v921
    %v937 = vpack.c.b16 %v924, %v923
    %v938 = vpack.c.b16 %v926, %v925
    %v939 = vpack.c.b16 %v928, %v927
    %v940 = vpack.c.b16 %v930, %v929
    %v941 = vpack.c.b16 %v932, %v931
    %v942 = vpack.c.b16 %v934, %v933
    %v947 = vunpack.c.l.b16 %v899
    %v948 = vunpack.c.h.b16 %v899
    %v949 = vunpack.c.l.b16 %v900
    %v950 = vunpack.c.h.b16 %v900
    %v951 = vunpack.c.l.b16 %v901
    %v952 = vunpack.c.h.b16 %v901
    %v953 = vunpack.c.l.b16 %v902
    %v954 = vunpack.c.h.b16 %v902
    %v955 = vpack.c.b16 %v951, %v947
    %v956 = vpack.c.b16 %v952, %v948
    %v957 = vpack.c.b16 %v953, %v949
    %v958 = vpack.c.b16 %v954, %v950
    %v964 = vsel %vm331, %v935, 0
    %v967 = vsel %vm331, %v936, 0
    %v970 = vsel %vm331, %v937, 0
    %v973 = vsel %vm331, %v938, 0
    %v976 = vsel %vm331, %v939, 0
    %v979 = vsel %vm331, %v940, 0
    %v982 = vsel %vm331, %v941, 0
    %v985 = vsel %vm331, %v942, 0
    %987 = vmatprep.subr.bf16.mxu0 %v956
    %988 = vmatpush1.bf16.msra.mxu0 %v955
    %989 = vmatprep.subr.bf16.mxu0 0
    %990 = vmatpush1.bf16.msra.mxu0 0
    %991 = vmatprep.subr.bf16.mxu0 0
    %992 = vmatpush1.bf16.msra.mxu0 0
    %993 = vmatprep.subr.bf16.mxu0 0
    %994 = vmatpush1.bf16.msra.mxu0 0
    %995 = vmatprep.subr.bf16.mxu0 0
    %996 = vmatpush1.bf16.msra.mxu0 0
    %997 = vmatprep.subr.bf16.mxu0 0
    %998 = vmatpush1.bf16.msra.mxu0 0
    %999 = vmatprep.subr.bf16.mxu0 0
    %1000 = vmatpush1.bf16.msra.mxu0 0
    %1001 = vmatprep.subr.bf16.mxu0 0
    %1002 = vmatpush1.bf16.msra.mxu0 0
    %1003 = vmatprep.subr.bf16.mxu0 0
    %1004 = vmatpush1.bf16.msra.mxu0 0
    %1005 = vmatprep.subr.bf16.mxu0 0
    %1006 = vmatpush1.bf16.msra.mxu0 0
    %1007 = vmatprep.subr.bf16.mxu0 0
    %1008 = vmatpush1.bf16.msra.mxu0 0
    %1009 = vmatprep.subr.bf16.mxu0 0
    %1010 = vmatpush1.bf16.msra.mxu0 0
    %1011 = vmatprep.subr.bf16.mxu0 0
    %1012 = vmatpush1.bf16.msra.mxu0 0
    %1013 = vmatprep.subr.bf16.mxu0 0
    %1014 = vmatpush1.bf16.msra.mxu0 0
    %1015 = vmatprep.subr.bf16.mxu0 0
    %1016 = vmatpush1.bf16.msra.mxu0 0
    %1017 = vmatprep.subr.bf16.mxu0 0
    %1018 = vmatpush1.bf16.msra.mxu0 0
    %1019 = vmatprep.mubr.bf16.mxu0 0
    %1020 = vmatmul.mubr.bf16.gmra.mrb[0].mxu0 %v964
    %v1021 = vpop.f32.mrb[0].mxu0
    %v1022 = vadd.f32 0.0, %v1021
    %v1023 = vpop.f32.mrb[0].mxu0
    %v1024 = vadd.f32 0.0, %v1023
    %v1025 = vpop.f32.mrb[0].mxu0
    %v1026 = vadd.f32 0.0, %v1025
    %v1027 = vpop.f32.mrb[0].mxu0
    %v1028 = vadd.f32 0.0, %v1027
    %1029 = vmatprep.mubr.bf16.mxu0 0
    %1030 = vmatmul.mubr.bf16.gmra.mrb[0].mxu0 %v967
    %v1031 = vpop.f32.mrb[0].mxu0
    %v1032 = vadd.f32 0.0, %v1031
    %v1033 = vpop.f32.mrb[0].mxu0
    %v1034 = vadd.f32 0.0, %v1033
    %v1035 = vpop.f32.mrb[0].mxu0
    %v1036 = vadd.f32 0.0, %v1035
    %v1037 = vpop.f32.mrb[0].mxu0
    %v1038 = vadd.f32 0.0, %v1037
    %1039 = vmatprep.mubr.bf16.mxu0 0
    %1040 = vmatmul.mubr.bf16.gmra.mrb[0].mxu0 %v970
    %v1041 = vpop.f32.mrb[0].mxu0
    %v1042 = vadd.f32 0.0, %v1041
    %v1043 = vpop.f32.mrb[0].mxu0
    %v1044 = vadd.f32 0.0, %v1043
    %v1045 = vpop.f32.mrb[0].mxu0
    %v1046 = vadd.f32 0.0, %v1045
    %v1047 = vpop.f32.mrb[0].mxu0
    %v1048 = vadd.f32 0.0, %v1047
    %1049 = vmatprep.mubr.bf16.mxu0 0
    %1050 = vmatmul.mubr.bf16.gmra.mrb[0].mxu0 %v973
    %v1051 = vpop.f32.mrb[0].mxu0
    %v1052 = vadd.f32 0.0, %v1051
    %v1053 = vpop.f32.mrb[0].mxu0
    %v1054 = vadd.f32 0.0, %v1053
    %v1055 = vpop.f32.mrb[0].mxu0
    %v1056 = vadd.f32 0.0, %v1055
    %v1057 = vpop.f32.mrb[0].mxu0
    %v1058 = vadd.f32 0.0, %v1057
    %1059 = vmatprep.mubr.bf16.mxu0 0
    %1060 = vmatmul.mubr.bf16.gmra.mrb[0].mxu0 %v976
    %v1061 = vpop.f32.mrb[0].mxu0
    %v1062 = vadd.f32 0.0, %v1061
    %v1063 = vpop.f32.mrb[0].mxu0
    %v1064 = vadd.f32 0.0, %v1063
    %v1065 = vpop.f32.mrb[0].mxu0
    %v1066 = vadd.f32 0.0, %v1065
    %v1067 = vpop.f32.mrb[0].mxu0
    %v1068 = vadd.f32 0.0, %v1067
    %1069 = vmatprep.mubr.bf16.mxu0 0
    %1070 = vmatmul.mubr.bf16.gmra.mrb[0].mxu0 %v979
    %v1071 = vpop.f32.mrb[0].mxu0
    %v1072 = vadd.f32 0.0, %v1071
    %v1073 = vpop.f32.mrb[0].mxu0
    %v1074 = vadd.f32 0.0, %v1073
    %v1075 = vpop.f32.mrb[0].mxu0
    %v1076 = vadd.f32 0.0, %v1075
    %v1077 = vpop.f32.mrb[0].mxu0
    %v1078 = vadd.f32 0.0, %v1077
    %1079 = vmatprep.mubr.bf16.mxu0 0
    %1080 = vmatmul.mubr.bf16.gmra.mrb[0].mxu0 %v982
    %v1081 = vpop.f32.mrb[0].mxu0
    %v1082 = vadd.f32 0.0, %v1081
    %v1083 = vpop.f32.mrb[0].mxu0
    %v1084 = vadd.f32 0.0, %v1083
    %v1085 = vpop.f32.mrb[0].mxu0
    %v1086 = vadd.f32 0.0, %v1085
    %v1087 = vpop.f32.mrb[0].mxu0
    %v1088 = vadd.f32 0.0, %v1087
    %1089 = vmatprep.mubr.bf16.mxu0 0
    %1090 = vmatmul.mubr.bf16.gmra.mrb[0].mxu0 %v985
    %v1091 = vpop.f32.mrb[0].mxu0
    %v1092 = vadd.f32 0.0, %v1091
    %v1093 = vpop.f32.mrb[0].mxu0
    %v1094 = vadd.f32 0.0, %v1093
    %v1095 = vpop.f32.mrb[0].mxu0
    %v1096 = vadd.f32 0.0, %v1095
    %v1097 = vpop.f32.mrb[0].mxu0
    %v1098 = vadd.f32 0.0, %v1097
    %1099 = vdwg.mxu0
    %1100 = vmatprep.subr.bf16.mxu0 %v958
    %1101 = vmatpush1.bf16.msra.mxu0 %v957
    %1102 = vmatprep.subr.bf16.mxu0 0
    %1103 = vmatpush1.bf16.msra.mxu0 0
    %1104 = vmatprep.subr.bf16.mxu0 0
    %1105 = vmatpush1.bf16.msra.mxu0 0
    %1106 = vmatprep.subr.bf16.mxu0 0
    %1107 = vmatpush1.bf16.msra.mxu0 0
    %1108 = vmatprep.subr.bf16.mxu0 0
    %1109 = vmatpush1.bf16.msra.mxu0 0
    %1110 = vmatprep.subr.bf16.mxu0 0
    %1111 = vmatpush1.bf16.msra.mxu0 0
    %1112 = vmatprep.subr.bf16.mxu0 0
    %1113 = vmatpush1.bf16.msra.mxu0 0
    %1114 = vmatprep.subr.bf16.mxu0 0
    %1115 = vmatpush1.bf16.msra.mxu0 0
    %1116 = vmatprep.subr.bf16.mxu0 0
    %1117 = vmatpush1.bf16.msra.mxu0 0
    %1118 = vmatprep.subr.bf16.mxu0 0
    %1119 = vmatpush1.bf16.msra.mxu0 0
    %1120 = vmatprep.subr.bf16.mxu0 0
    %1121 = vmatpush1.bf16.msra.mxu0 0
    %1122 = vmatprep.subr.bf16.mxu0 0
    %1123 = vmatpush1.bf16.msra.mxu0 0
    %1124 = vmatprep.subr.bf16.mxu0 0
    %1125 = vmatpush1.bf16.msra.mxu0 0
    %1126 = vmatprep.subr.bf16.mxu0 0
    %1127 = vmatpush1.bf16.msra.mxu0 0
    %1128 = vmatprep.subr.bf16.mxu0 0
    %1129 = vmatpush1.bf16.msra.mxu0 0
    %1130 = vmatprep.subr.bf16.mxu0 0
    %1131 = vmatpush1.bf16.msra.mxu0 0
    %1132 = vmatprep.mubr.bf16.mxu0 0
    %1133 = vmatmul.mubr.bf16.gmra.mrb[0].mxu0 %v964
    %v1134 = vpop.f32.mrb[0].mxu0
    %v1135 = vadd.f32 0.0, %v1134
    %v1136 = vpop.f32.mrb[0].mxu0
    %v1137 = vadd.f32 0.0, %v1136
    %v1138 = vpop.f32.mrb[0].mxu0
    %v1139 = vadd.f32 0.0, %v1138
    %v1140 = vpop.f32.mrb[0].mxu0
    %v1141 = vadd.f32 0.0, %v1140
    %1142 = vmatprep.mubr.bf16.mxu0 0
    %1143 = vmatmul.mubr.bf16.gmra.mrb[0].mxu0 %v967
    %v1144 = vpop.f32.mrb[0].mxu0
    %v1145 = vadd.f32 0.0, %v1144
    %v1146 = vpop.f32.mrb[0].mxu0
    %v1147 = vadd.f32 0.0, %v1146
    %v1148 = vpop.f32.mrb[0].mxu0
    %v1149 = vadd.f32 0.0, %v1148
    %v1150 = vpop.f32.mrb[0].mxu0
    %v1151 = vadd.f32 0.0, %v1150
    %1152 = vmatprep.mubr.bf16.mxu0 0
    %1153 = vmatmul.mubr.bf16.gmra.mrb[0].mxu0 %v970
    %v1154 = vpop.f32.mrb[0].mxu0
    %v1155 = vadd.f32 0.0, %v1154
    %v1156 = vpop.f32.mrb[0].mxu0
    %v1157 = vadd.f32 0.0, %v1156
    %v1158 = vpop.f32.mrb[0].mxu0
    %v1159 = vadd.f32 0.0, %v1158
    %v1160 = vpop.f32.mrb[0].mxu0
    %v1161 = vadd.f32 0.0, %v1160
    %1162 = vmatprep.mubr.bf16.mxu0 0
    %1163 = vmatmul.mubr.bf16.gmra.mrb[0].mxu0 %v973
    %v1164 = vpop.f32.mrb[0].mxu0
    %v1165 = vadd.f32 0.0, %v1164
    %v1166 = vpop.f32.mrb[0].mxu0
    %v1167 = vadd.f32 0.0, %v1166
    %v1168 = vpop.f32.mrb[0].mxu0
    %v1169 = vadd.f32 0.0, %v1168
    %v1170 = vpop.f32.mrb[0].mxu0
    %v1171 = vadd.f32 0.0, %v1170
    %1172 = vmatprep.mubr.bf16.mxu0 0
    %1173 = vmatmul.mubr.bf16.gmra.mrb[0].mxu0 %v976
    %v1174 = vpop.f32.mrb[0].mxu0
    %v1175 = vadd.f32 0.0, %v1174
    %v1176 = vpop.f32.mrb[0].mxu0
    %v1177 = vadd.f32 0.0, %v1176
    %v1178 = vpop.f32.mrb[0].mxu0
    %v1179 = vadd.f32 0.0, %v1178
    %v1180 = vpop.f32.mrb[0].mxu0
    %v1181 = vadd.f32 0.0, %v1180
    %1182 = vmatprep.mubr.bf16.mxu0 0
    %1183 = vmatmul.mubr.bf16.gmra.mrb[0].mxu0 %v979
    %v1184 = vpop.f32.mrb[0].mxu0
    %v1185 = vadd.f32 0.0, %v1184
    %v1186 = vpop.f32.mrb[0].mxu0
    %v1187 = vadd.f32 0.0, %v1186
    %v1188 = vpop.f32.mrb[0].mxu0
    %v1189 = vadd.f32 0.0, %v1188
    %v1190 = vpop.f32.mrb[0].mxu0
    %v1191 = vadd.f32 0.0, %v1190
    %1192 = vmatprep.mubr.bf16.mxu0 0
    %1193 = vmatmul.mubr.bf16.gmra.mrb[0].mxu0 %v982
    %v1194 = vpop.f32.mrb[0].mxu0
    %v1195 = vadd.f32 0.0, %v1194
    %v1196 = vpop.f32.mrb[0].mxu0
    %v1197 = vadd.f32 0.0, %v1196
    %v1198 = vpop.f32.mrb[0].mxu0
    %v1199 = vadd.f32 0.0, %v1198
    %v1200 = vpop.f32.mrb[0].mxu0
    %v1201 = vadd.f32 0.0, %v1200
    %1202 = vmatprep.mubr.bf16.mxu0 0
    %1203 = vmatmul.mubr.bf16.gmra.mrb[0].mxu0 %v985
    %v1204 = vpop.f32.mrb[0].mxu0
    %v1205 = vadd.f32 0.0, %v1204
    %v1206 = vpop.f32.mrb[0].mxu0
    %v1207 = vadd.f32 0.0, %v1206
    %v1208 = vpop.f32.mrb[0].mxu0
    %v1209 = vadd.f32 0.0, %v1208
    %v1210 = vpop.f32.mrb[0].mxu0
    %v1211 = vadd.f32 0.0, %v1210
    %1212 = vdwg.mxu0
    %v1213 = vadd.f32 %v708, %v370
    %v1214 = vadd.f32 %v710, %v372
    %v1215 = vadd.f32 %v821, %v413
    %v1216 = vadd.f32 %v823, %v415
    %v1217 = vadd.f32 %v712, %v374
    %v1218 = vadd.f32 %v714, %v376
    %v1219 = vadd.f32 %v825, %v417
    %v1220 = vadd.f32 %v827, %v419
    %v1221 = vadd.f32 %v718, %v370
    %v1222 = vadd.f32 %v720, %v372
    %v1223 = vadd.f32 %v831, %v413
    %v1224 = vadd.f32 %v833, %v415
    %v1225 = vadd.f32 %v722, %v374
    %v1226 = vadd.f32 %v724, %v376
    %v1227 = vadd.f32 %v835, %v417
    %v1228 = vadd.f32 %v837, %v419
    %v1229 = vadd.f32 %v728, %v370
    %v1230 = vadd.f32 %v730, %v372
    %v1231 = vadd.f32 %v841, %v413
    %v1232 = vadd.f32 %v843, %v415
    %v1233 = vadd.f32 %v732, %v374
    %v1234 = vadd.f32 %v734, %v376
    %v1235 = vadd.f32 %v845, %v417
    %v1236 = vadd.f32 %v847, %v419
    %v1237 = vadd.f32 %v738, %v370
    %v1238 = vadd.f32 %v740, %v372
    %v1239 = vadd.f32 %v851, %v413
    %v1240 = vadd.f32 %v853, %v415
    %v1241 = vadd.f32 %v742, %v374
    %v1242 = vadd.f32 %v744, %v376
    %v1243 = vadd.f32 %v855, %v417
    %v1244 = vadd.f32 %v857, %v419
    %v1245 = vadd.f32 %v748, %v370
    %v1246 = vadd.f32 %v750, %v372
    %v1247 = vadd.f32 %v861, %v413
    %v1248 = vadd.f32 %v863, %v415
    %v1249 = vadd.f32 %v752, %v374
    %v1250 = vadd.f32 %v754, %v376
    %v1251 = vadd.f32 %v865, %v417
    %v1252 = vadd.f32 %v867, %v419
    %v1253 = vadd.f32 %v758, %v370
    %v1254 = vadd.f32 %v760, %v372
    %v1255 = vadd.f32 %v871, %v413
    %v1256 = vadd.f32 %v873, %v415
    %v1257 = vadd.f32 %v762, %v374
    %v1258 = vadd.f32 %v764, %v376
    %v1259 = vadd.f32 %v875, %v417
    %v1260 = vadd.f32 %v877, %v419
    %v1261 = vadd.f32 %v768, %v370
    %v1262 = vadd.f32 %v770, %v372
    %v1263 = vadd.f32 %v881, %v413
    %v1264 = vadd.f32 %v883, %v415
    %v1265 = vadd.f32 %v772, %v374
    %v1266 = vadd.f32 %v774, %v376
    %v1267 = vadd.f32 %v885, %v417
    %v1268 = vadd.f32 %v887, %v419
    %v1269 = vadd.f32 %v778, %v370
    %v1270 = vadd.f32 %v780, %v372
    %v1271 = vadd.f32 %v891, %v413
    %v1272 = vadd.f32 %v893, %v415
    %v1273 = vadd.f32 %v782, %v374
    %v1274 = vadd.f32 %v784, %v376
    %v1275 = vadd.f32 %v895, %v417
    %v1276 = vadd.f32 %v897, %v419
    %1277 = vst [vmem:[#allocation2] sm:$0xff] %v1213
    %1278 = vst [vmem:[#allocation2 + $0x8] sm:$0xff] %v1214
    %1279 = vst [vmem:[#allocation2 + $0x10] sm:$0xff] %v1215
    %1280 = vst [vmem:[#allocation2 + $0x18] sm:$0xff] %v1216
    %1281 = vst [vmem:[#allocation2 + $0x20] sm:$0xff] %v1217
    %1282 = vst [vmem:[#allocation2 + $0x28] sm:$0xff] %v1218
    %1283 = vst [vmem:[#allocation2 + $0x30] sm:$0xff] %v1219
    %1284 = vst [vmem:[#allocation2 + $0x38] sm:$0xff] %v1220
    %1285 = vst [vmem:[#allocation2 + $0x40] sm:$0xff] %v1221
    %1286 = vst [vmem:[#allocation2 + $0x48] sm:$0xff] %v1222
    %1287 = vst [vmem:[#allocation2 + $0x50] sm:$0xff] %v1223
    %1288 = vst [vmem:[#allocation2 + $0x58] sm:$0xff] %v1224
    %1289 = vst [vmem:[#allocation2 + $0x60] sm:$0xff] %v1225
    %1290 = vst [vmem:[#allocation2 + $0x68] sm:$0xff] %v1226
    %1291 = vst [vmem:[#allocation2 + $0x70] sm:$0xff] %v1227
    %1292 = vst [vmem:[#allocation2 + $0x78] sm:$0xff] %v1228
    %1293 = vst [vmem:[#allocation2 + $0x80] sm:$0xff] %v1229
    %1294 = vst [vmem:[#allocation2 + $0x88] sm:$0xff] %v1230
    %1295 = vst [vmem:[#allocation2 + $0x90] sm:$0xff] %v1231
    %1296 = vst [vmem:[#allocation2 + $0x98] sm:$0xff] %v1232
    %1297 = vst [vmem:[#allocation2 + $0xa0] sm:$0xff] %v1233
    %1298 = vst [vmem:[#allocation2 + $0xa8] sm:$0xff] %v1234
    %1299 = vst [vmem:[#allocation2 + $0xb0] sm:$0xff] %v1235
    %1300 = vst [vmem:[#allocation2 + $0xb8] sm:$0xff] %v1236
    %1301 = vst [vmem:[#allocation2 + $0xc0] sm:$0xff] %v1237
    %1302 = vst [vmem:[#allocation2 + $0xc8] sm:$0xff] %v1238
    %1303 = vst [vmem:[#allocation2 + $0xd0] sm:$0xff] %v1239
    %1304 = vst [vmem:[#allocation2 + $0xd8] sm:$0xff] %v1240
    %1305 = vst [vmem:[#allocation2 + $0xe0] sm:$0xff] %v1241
    %1306 = vst [vmem:[#allocation2 + $0xe8] sm:$0xff] %v1242
    %1307 = vst [vmem:[#allocation2 + $0xf0] sm:$0xff] %v1243
    %1308 = vst [vmem:[#allocation2 + $0xf8] sm:$0xff] %v1244
    %1309 = vst [vmem:[#allocation2 + $0x100] sm:$0xff] %v1245
    %1310 = vst [vmem:[#allocation2 + $0x108] sm:$0xff] %v1246
    %1311 = vst [vmem:[#allocation2 + $0x110] sm:$0xff] %v1247
    %1312 = vst [vmem:[#allocation2 + $0x118] sm:$0xff] %v1248
    %1313 = vst [vmem:[#allocation2 + $0x120] sm:$0xff] %v1249
    %1314 = vst [vmem:[#allocation2 + $0x128] sm:$0xff] %v1250
    %1315 = vst [vmem:[#allocation2 + $0x130] sm:$0xff] %v1251
    %1316 = vst [vmem:[#allocation2 + $0x138] sm:$0xff] %v1252
    %1317 = vst [vmem:[#allocation2 + $0x140] sm:$0xff] %v1253
    %1318 = vst [vmem:[#allocation2 + $0x148] sm:$0xff] %v1254
    %1319 = vst [vmem:[#allocation2 + $0x150] sm:$0xff] %v1255
    %1320 = vst [vmem:[#allocation2 + $0x158] sm:$0xff] %v1256
    %1321 = vst [vmem:[#allocation2 + $0x160] sm:$0xff] %v1257
    %1322 = vst [vmem:[#allocation2 + $0x168] sm:$0xff] %v1258
    %1323 = vst [vmem:[#allocation2 + $0x170] sm:$0xff] %v1259
    %1324 = vst [vmem:[#allocation2 + $0x178] sm:$0xff] %v1260
    %1325 = vst [vmem:[#allocation2 + $0x180] sm:$0xff] %v1261
    %1326 = vst [vmem:[#allocation2 + $0x188] sm:$0xff] %v1262
    %1327 = vst [vmem:[#allocation2 + $0x190] sm:$0xff] %v1263
    %1328 = vst [vmem:[#allocation2 + $0x198] sm:$0xff] %v1264
    %1329 = vst [vmem:[#allocation2 + $0x1a0] sm:$0xff] %v1265
    %1330 = vst [vmem:[#allocation2 + $0x1a8] sm:$0xff] %v1266
    %1331 = vst [vmem:[#allocation2 + $0x1b0] sm:$0xff] %v1267
    %1332 = vst [vmem:[#allocation2 + $0x1b8] sm:$0xff] %v1268
    %1333 = vst [vmem:[#allocation2 + $0x1c0] sm:$0xff] %v1269
    %1334 = vst [vmem:[#allocation2 + $0x1c8] sm:$0xff] %v1270
    %1335 = vst [vmem:[#allocation2 + $0x1d0] sm:$0xff] %v1271
    %1336 = vst [vmem:[#allocation2 + $0x1d8] sm:$0xff] %v1272
    %1337 = vst [vmem:[#allocation2 + $0x1e0] sm:$0xff] %v1273
    %1338 = vst [vmem:[#allocation2 + $0x1e8] sm:$0xff] %v1274
    %1339 = vst [vmem:[#allocation2 + $0x1f0] sm:$0xff] %v1275
    %1340 = vst [vmem:[#allocation2 + $0x1f8] sm:$0xff] %v1276
    %v1341 = vadd.f32 %v1022, %v502
    %v1342 = vadd.f32 %v1024, %v504
    %v1343 = vadd.f32 %v1135, %v545
    %v1344 = vadd.f32 %v1137, %v547
    %v1345 = vadd.f32 %v1026, %v506
    %v1346 = vadd.f32 %v1028, %v508
    %v1347 = vadd.f32 %v1139, %v549
    %v1348 = vadd.f32 %v1141, %v551
    %v1349 = vadd.f32 %v1032, %v502
    %v1350 = vadd.f32 %v1034, %v504
    %v1351 = vadd.f32 %v1145, %v545
    %v1352 = vadd.f32 %v1147, %v547
    %v1353 = vadd.f32 %v1036, %v506
    %v1354 = vadd.f32 %v1038, %v508
    %v1355 = vadd.f32 %v1149, %v549
    %v1356 = vadd.f32 %v1151, %v551
    %v1357 = vadd.f32 %v1042, %v502
    %v1358 = vadd.f32 %v1044, %v504
    %v1359 = vadd.f32 %v1155, %v545
    %v1360 = vadd.f32 %v1157, %v547
    %v1361 = vadd.f32 %v1046, %v506
    %v1362 = vadd.f32 %v1048, %v508
    %v1363 = vadd.f32 %v1159, %v549
    %v1364 = vadd.f32 %v1161, %v551
    %v1365 = vadd.f32 %v1052, %v502
    %v1366 = vadd.f32 %v1054, %v504
    %v1367 = vadd.f32 %v1165, %v545
    %v1368 = vadd.f32 %v1167, %v547
    %v1369 = vadd.f32 %v1056, %v506
    %v1370 = vadd.f32 %v1058, %v508
    %v1371 = vadd.f32 %v1169, %v549
    %v1372 = vadd.f32 %v1171, %v551
    %v1373 = vadd.f32 %v1062, %v502
    %v1374 = vadd.f32 %v1064, %v504
    %v1375 = vadd.f32 %v1175, %v545
    %v1376 = vadd.f32 %v1177, %v547
    %v1377 = vadd.f32 %v1066, %v506
    %v1378 = vadd.f32 %v1068, %v508
    %v1379 = vadd.f32 %v1179, %v549
    %v1380 = vadd.f32 %v1181, %v551
    %v1381 = vadd.f32 %v1072, %v502
    %v1382 = vadd.f32 %v1074, %v504
    %v1383 = vadd.f32 %v1185, %v545
    %v1384 = vadd.f32 %v1187, %v547
    %v1385 = vadd.f32 %v1076, %v506
    %v1386 = vadd.f32 %v1078, %v508
    %v1387 = vadd.f32 %v1189, %v549
    %v1388 = vadd.f32 %v1191, %v551
    %v1389 = vadd.f32 %v1082, %v502
    %v1390 = vadd.f32 %v1084, %v504
    %v1391 = vadd.f32 %v1195, %v545
    %v1392 = vadd.f32 %v1197, %v547
    %v1393 = vadd.f32 %v1086, %v506
    %v1394 = vadd.f32 %v1088, %v508
    %v1395 = vadd.f32 %v1199, %v549
    %v1396 = vadd.f32 %v1201, %v551
    %v1397 = vadd.f32 %v1092, %v502
    %v1398 = vadd.f32 %v1094, %v504
    %v1399 = vadd.f32 %v1205, %v545
    %v1400 = vadd.f32 %v1207, %v547
    %v1401 = vadd.f32 %v1096, %v506
    %v1402 = vadd.f32 %v1098, %v508
    %v1403 = vadd.f32 %v1209, %v549
    %v1404 = vadd.f32 %v1211, %v551
    %1405 = vst [vmem:[#allocation3] sm:$0xff] %v1341
    %1406 = vst [vmem:[#allocation3 + $0x8] sm:$0xff] %v1342
    %1407 = vst [vmem:[#allocation3 + $0x10] sm:$0xff] %v1343
    %1408 = vst [vmem:[#allocation3 + $0x18] sm:$0xff] %v1344
    %1409 = vst [vmem:[#allocation3 + $0x20] sm:$0xff] %v1345
    %1410 = vst [vmem:[#allocation3 + $0x28] sm:$0xff] %v1346
    %1411 = vst [vmem:[#allocation3 + $0x30] sm:$0xff] %v1347
    %1412 = vst [vmem:[#allocation3 + $0x38] sm:$0xff] %v1348
    %1413 = vst [vmem:[#allocation3 + $0x40] sm:$0xff] %v1349
    %1414 = vst [vmem:[#allocation3 + $0x48] sm:$0xff] %v1350
    %1415 = vst [vmem:[#allocation3 + $0x50] sm:$0xff] %v1351
    %1416 = vst [vmem:[#allocation3 + $0x58] sm:$0xff] %v1352
    %1417 = vst [vmem:[#allocation3 + $0x60] sm:$0xff] %v1353
    %1418 = vst [vmem:[#allocation3 + $0x68] sm:$0xff] %v1354
    %1419 = vst [vmem:[#allocation3 + $0x70] sm:$0xff] %v1355
    %1420 = vst [vmem:[#allocation3 + $0x78] sm:$0xff] %v1356
    %1421 = vst [vmem:[#allocation3 + $0x80] sm:$0xff] %v1357
    %1422 = vst [vmem:[#allocation3 + $0x88] sm:$0xff] %v1358
    %1423 = vst [vmem:[#allocation3 + $0x90] sm:$0xff] %v1359
    %1424 = vst [vmem:[#allocation3 + $0x98] sm:$0xff] %v1360
    %1425 = vst [vmem:[#allocation3 + $0xa0] sm:$0xff] %v1361
    %1426 = vst [vmem:[#allocation3 + $0xa8] sm:$0xff] %v1362
    %1427 = vst [vmem:[#allocation3 + $0xb0] sm:$0xff] %v1363
    %1428 = vst [vmem:[#allocation3 + $0xb8] sm:$0xff] %v1364
    %1429 = vst [vmem:[#allocation3 + $0xc0] sm:$0xff] %v1365
    %1430 = vst [vmem:[#allocation3 + $0xc8] sm:$0xff] %v1366
    %1431 = vst [vmem:[#allocation3 + $0xd0] sm:$0xff] %v1367
    %1432 = vst [vmem:[#allocation3 + $0xd8] sm:$0xff] %v1368
    %1433 = vst [vmem:[#allocation3 + $0xe0] sm:$0xff] %v1369
    %1434 = vst [vmem:[#allocation3 + $0xe8] sm:$0xff] %v1370
    %1435 = vst [vmem:[#allocation3 + $0xf0] sm:$0xff] %v1371
    %1436 = vst [vmem:[#allocation3 + $0xf8] sm:$0xff] %v1372
    %1437 = vst [vmem:[#allocation3 + $0x100] sm:$0xff] %v1373
    %1438 = vst [vmem:[#allocation3 + $0x108] sm:$0xff] %v1374
    %1439 = vst [vmem:[#allocation3 + $0x110] sm:$0xff] %v1375
    %1440 = vst [vmem:[#allocation3 + $0x118] sm:$0xff] %v1376
    %1441 = vst [vmem:[#allocation3 + $0x120] sm:$0xff] %v1377
    %1442 = vst [vmem:[#allocation3 + $0x128] sm:$0xff] %v1378
    %1443 = vst [vmem:[#allocation3 + $0x130] sm:$0xff] %v1379
    %1444 = vst [vmem:[#allocation3 + $0x138] sm:$0xff] %v1380
    %1445 = vst [vmem:[#allocation3 + $0x140] sm:$0xff] %v1381
    %1446 = vst [vmem:[#allocation3 + $0x148] sm:$0xff] %v1382
    %1447 = vst [vmem:[#allocation3 + $0x150] sm:$0xff] %v1383
    %1448 = vst [vmem:[#allocation3 + $0x158] sm:$0xff] %v1384
    %1449 = vst [vmem:[#allocation3 + $0x160] sm:$0xff] %v1385
    %1450 = vst [vmem:[#allocation3 + $0x168] sm:$0xff] %v1386
    %1451 = vst [vmem:[#allocation3 + $0x170] sm:$0xff] %v1387
    %1452 = vst [vmem:[#allocation3 + $0x178] sm:$0xff] %v1388
    %1453 = vst [vmem:[#allocation3 + $0x180] sm:$0xff] %v1389
    %1454 = vst [vmem:[#allocation3 + $0x188] sm:$0xff] %v1390
    %1455 = vst [vmem:[#allocation3 + $0x190] sm:$0xff] %v1391
    %1456 = vst [vmem:[#allocation3 + $0x198] sm:$0xff] %v1392
    %1457 = vst [vmem:[#allocation3 + $0x1a0] sm:$0xff] %v1393
    %1458 = vst [vmem:[#allocation3 + $0x1a8] sm:$0xff] %v1394
    %1459 = vst [vmem:[#allocation3 + $0x1b0] sm:$0xff] %v1395
    %1460 = vst [vmem:[#allocation3 + $0x1b8] sm:$0xff] %v1396
    %1461 = vst [vmem:[#allocation3 + $0x1c0] sm:$0xff] %v1397
    %1462 = vst [vmem:[#allocation3 + $0x1c8] sm:$0xff] %v1398
    %1463 = vst [vmem:[#allocation3 + $0x1d0] sm:$0xff] %v1399
    %1464 = vst [vmem:[#allocation3 + $0x1d8] sm:$0xff] %v1400
    %1465 = vst [vmem:[#allocation3 + $0x1e0] sm:$0xff] %v1401
    %1466 = vst [vmem:[#allocation3 + $0x1e8] sm:$0xff] %v1402
    %1467 = vst [vmem:[#allocation3 + $0x1f0] sm:$0xff] %v1403
    %1468 = vst [vmem:[#allocation3 + $0x1f8] sm:$0xff] %v1404
    %v1469 = vld [vmem:[#allocation20] sm:$0xff]
    %v1470 = vld [vmem:[#allocation20 + $0x8] sm:$0xff]
    %v1471 = vld [vmem:[#allocation20 + $0x10] sm:$0xff]
    %v1472 = vld [vmem:[#allocation20 + $0x18] sm:$0xff]
    %v1473 = vld [vmem:[#allocation20 + $0x20] sm:$0xff]
    %v1474 = vld [vmem:[#allocation20 + $0x28] sm:$0xff]
    %v1475 = vld [vmem:[#allocation20 + $0x30] sm:$0xff]
    %v1476 = vld [vmem:[#allocation20 + $0x38] sm:$0xff]
    %v1477 = vld [vmem:[#allocation20 + $0x40] sm:$0xff]
    %v1478 = vld [vmem:[#allocation20 + $0x48] sm:$0xff]
    %v1479 = vld [vmem:[#allocation20 + $0x50] sm:$0xff]
    %v1480 = vld [vmem:[#allocation20 + $0x58] sm:$0xff]
    %v1481 = vld [vmem:[#allocation20 + $0x60] sm:$0xff]
    %v1482 = vld [vmem:[#allocation20 + $0x68] sm:$0xff]
    %v1483 = vld [vmem:[#allocation20 + $0x70] sm:$0xff]
    %v1484 = vld [vmem:[#allocation20 + $0x78] sm:$0xff]
    %v1485 = vld [vmem:[#allocation20 + $0x80] sm:$0xff]
    %v1486 = vld [vmem:[#allocation20 + $0x88] sm:$0xff]
    %v1487 = vld [vmem:[#allocation20 + $0x90] sm:$0xff]
    %v1488 = vld [vmem:[#allocation20 + $0x98] sm:$0xff]
    %v1489 = vld [vmem:[#allocation20 + $0xa0] sm:$0xff]
    %v1490 = vld [vmem:[#allocation20 + $0xa8] sm:$0xff]
    %v1491 = vld [vmem:[#allocation20 + $0xb0] sm:$0xff]
    %v1492 = vld [vmem:[#allocation20 + $0xb8] sm:$0xff]
    %v1493 = vld [vmem:[#allocation20 + $0xc0] sm:$0xff]
    %v1494 = vld [vmem:[#allocation20 + $0xc8] sm:$0xff]
    %v1495 = vld [vmem:[#allocation20 + $0xd0] sm:$0xff]
    %v1496 = vld [vmem:[#allocation20 + $0xd8] sm:$0xff]
    %v1497 = vld [vmem:[#allocation20 + $0xe0] sm:$0xff]
    %v1498 = vld [vmem:[#allocation20 + $0xe8] sm:$0xff]
    %v1499 = vld [vmem:[#allocation20 + $0xf0] sm:$0xff]
    %v1500 = vld [vmem:[#allocation20 + $0xf8] sm:$0xff]
    %v1501 = vld [vmem:[#allocation26] sm:$0xff]
    %v1502 = vld [vmem:[#allocation26 + $0x8] sm:$0xff]
    %v1503 = vld [vmem:[#allocation26 + $0x10] sm:$0xff]
    %v1504 = vld [vmem:[#allocation26 + $0x18] sm:$0xff]
    %v1505 = vld [vmem:[#allocation26 + $0x20] sm:$0xff]
    %v1506 = vld [vmem:[#allocation26 + $0x28] sm:$0xff]
    %v1507 = vld [vmem:[#allocation26 + $0x30] sm:$0xff]
    %v1508 = vld [vmem:[#allocation26 + $0x38] sm:$0xff]
    %v1509 = vld [vmem:[#allocation26 + $0x40] sm:$0xff]
    %v1510 = vld [vmem:[#allocation26 + $0x48] sm:$0xff]
    %v1511 = vld [vmem:[#allocation26 + $0x50] sm:$0xff]
    %v1512 = vld [vmem:[#allocation26 + $0x58] sm:$0xff]
    %v1513 = vld [vmem:[#allocation26 + $0x60] sm:$0xff]
    %v1514 = vld [vmem:[#allocation26 + $0x68] sm:$0xff]
    %v1515 = vld [vmem:[#allocation26 + $0x70] sm:$0xff]
    %v1516 = vld [vmem:[#allocation26 + $0x78] sm:$0xff]
    %v1517 = vld [vmem:[#allocation26 + $0x80] sm:$0xff]
    %v1518 = vld [vmem:[#allocation26 + $0x88] sm:$0xff]
    %v1519 = vld [vmem:[#allocation26 + $0x90] sm:$0xff]
    %v1520 = vld [vmem:[#allocation26 + $0x98] sm:$0xff]
    %v1521 = vld [vmem:[#allocation26 + $0xa0] sm:$0xff]
    %v1522 = vld [vmem:[#allocation26 + $0xa8] sm:$0xff]
    %v1523 = vld [vmem:[#allocation26 + $0xb0] sm:$0xff]
    %v1524 = vld [vmem:[#allocation26 + $0xb8] sm:$0xff]
    %v1525 = vld [vmem:[#allocation26 + $0xc0] sm:$0xff]
    %v1526 = vld [vmem:[#allocation26 + $0xc8] sm:$0xff]
    %v1527 = vld [vmem:[#allocation26 + $0xd0] sm:$0xff]
    %v1528 = vld [vmem:[#allocation26 + $0xd8] sm:$0xff]
    %v1529 = vld [vmem:[#allocation26 + $0xe0] sm:$0xff]
    %v1530 = vld [vmem:[#allocation26 + $0xe8] sm:$0xff]
    %v1531 = vld [vmem:[#allocation26 + $0xf0] sm:$0xff]
    %v1532 = vld [vmem:[#allocation26 + $0xf8] sm:$0xff]
    %v1533 = vld [vmem:[#allocation14] sm:$0xff]
    %v1534 = vld [vmem:[#allocation14 + $0x8] sm:$0xff]
    %v1535 = vld [vmem:[#allocation16] sm:$0xff]
    %v1536 = vld [vmem:[#allocation16 + $0x8] sm:$0xff]
    %s1537 = smul.u32 0, 8
    %v1538 = vld [vmem:[#allocation4] sm:$0xff]
    %v1539 = vld [vmem:[#allocation4 + $0x8] sm:$0xff]
    %v1540 = vld [vmem:[#allocation5] sm:$0xff]
    %v1541 = vld [vmem:[#allocation5 + $0x8] sm:$0xff]
    %v1542 = vld [vmem:[#allocation6] sm:$0xff]
    %v1543 = vld [vmem:[#allocation6 + $0x8] sm:$0xff]
    %v1544 = vld [vmem:[#allocation7] sm:$0xff]
    %v1545 = vld [vmem:[#allocation7 + $0x8] sm:$0xff]
    %v1546 = vld [vmem:[#allocation2] sm:$0xff]
    %v1547 = vld [vmem:[#allocation2 + $0x8] sm:$0xff]
    %v1548 = vld [vmem:[#allocation2 + $0x10] sm:$0xff]
    %v1549 = vld [vmem:[#allocation2 + $0x18] sm:$0xff]
    %v1550 = vld [vmem:[#allocation2 + $0x20] sm:$0xff]
    %v1551 = vld [vmem:[#allocation2 + $0x28] sm:$0xff]
    %v1552 = vld [vmem:[#allocation2 + $0x30] sm:$0xff]
    %v1553 = vld [vmem:[#allocation2 + $0x38] sm:$0xff]
    %v1554 = vpack.c.bf16 %v1539, %v1538
    %v1587 = vunpack.c.l.b16 %v1469
    %v1588 = vunpack.c.h.b16 %v1469
    %v1589 = vunpack.c.l.b16 %v1470
    %v1590 = vunpack.c.h.b16 %v1470
    %v1591 = vunpack.c.l.b16 %v1471
    %v1592 = vunpack.c.h.b16 %v1471
    %v1593 = vunpack.c.l.b16 %v1472
    %v1594 = vunpack.c.h.b16 %v1472
    %v1595 = vunpack.c.l.b16 %v1473
    %v1596 = vunpack.c.h.b16 %v1473
    %v1597 = vunpack.c.l.b16 %v1474
    %v1598 = vunpack.c.h.b16 %v1474
    %v1599 = vunpack.c.l.b16 %v1475
    %v1600 = vunpack.c.h.b16 %v1475
    %v1601 = vunpack.c.l.b16 %v1476
    %v1602 = vunpack.c.h.b16 %v1476
    %v1603 = vunpack.c.l.b16 %v1477
    %v1604 = vunpack.c.h.b16 %v1477
    %v1605 = vunpack.c.l.b16 %v1478
    %v1606 = vunpack.c.h.b16 %v1478
    %v1607 = vunpack.c.l.b16 %v1479
    %v1608 = vunpack.c.h.b16 %v1479
    %v1609 = vunpack.c.l.b16 %v1480
    %v1610 = vunpack.c.h.b16 %v1480
    %v1611 = vunpack.c.l.b16 %v1481
    %v1612 = vunpack.c.h.b16 %v1481
    %v1613 = vunpack.c.l.b16 %v1482
    %v1614 = vunpack.c.h.b16 %v1482
    %v1615 = vunpack.c.l.b16 %v1483
    %v1616 = vunpack.c.h.b16 %v1483
    %v1617 = vunpack.c.l.b16 %v1484
    %v1618 = vunpack.c.h.b16 %v1484
    %v1619 = vunpack.c.l.b16 %v1485
    %v1620 = vunpack.c.h.b16 %v1485
    %v1621 = vunpack.c.l.b16 %v1486
    %v1622 = vunpack.c.h.b16 %v1486
    %v1623 = vunpack.c.l.b16 %v1487
    %v1624 = vunpack.c.h.b16 %v1487
    %v1625 = vunpack.c.l.b16 %v1488
    %v1626 = vunpack.c.h.b16 %v1488
    %v1627 = vunpack.c.l.b16 %v1489
    %v1628 = vunpack.c.h.b16 %v1489
    %v1629 = vunpack.c.l.b16 %v1490
    %v1630 = vunpack.c.h.b16 %v1490
    %v1631 = vunpack.c.l.b16 %v1491
    %v1632 = vunpack.c.h.b16 %v1491
    %v1633 = vunpack.c.l.b16 %v1492
    %v1634 = vunpack.c.h.b16 %v1492
    %v1635 = vunpack.c.l.b16 %v1493
    %v1636 = vunpack.c.h.b16 %v1493
    %v1637 = vunpack.c.l.b16 %v1494
    %v1638 = vunpack.c.h.b16 %v1494
    %v1639 = vunpack.c.l.b16 %v1495
    %v1640 = vunpack.c.h.b16 %v1495
    %v1641 = vunpack.c.l.b16 %v1496
    %v1642 = vunpack.c.h.b16 %v1496
    %v1643 = vunpack.c.l.b16 %v1497
    %v1644 = vunpack.c.h.b16 %v1497
    %v1645 = vunpack.c.l.b16 %v1498
    %v1646 = vunpack.c.h.b16 %v1498
    %v1647 = vunpack.c.l.b16 %v1499
    %v1648 = vunpack.c.h.b16 %v1499
    %v1649 = vunpack.c.l.b16 %v1500
    %v1650 = vunpack.c.h.b16 %v1500
    %v1651 = vpack.c.b16 %v1591, %v1587
    %v1652 = vpack.c.b16 %v1592, %v1588
    %v1653 = vpack.c.b16 %v1593, %v1589
    %v1654 = vpack.c.b16 %v1594, %v1590
    %v1655 = vpack.c.b16 %v1599, %v1595
    %v1656 = vpack.c.b16 %v1600, %v1596
    %v1657 = vpack.c.b16 %v1601, %v1597
    %v1658 = vpack.c.b16 %v1602, %v1598
    %v1659 = vpack.c.b16 %v1607, %v1603
    %v1660 = vpack.c.b16 %v1608, %v1604
    %v1661 = vpack.c.b16 %v1609, %v1605
    %v1662 = vpack.c.b16 %v1610, %v1606
    %v1663 = vpack.c.b16 %v1615, %v1611
    %v1664 = vpack.c.b16 %v1616, %v1612
    %v1665 = vpack.c.b16 %v1617, %v1613
    %v1666 = vpack.c.b16 %v1618, %v1614
    %v1667 = vpack.c.b16 %v1623, %v1619
    %v1668 = vpack.c.b16 %v1624, %v1620
    %v1669 = vpack.c.b16 %v1625, %v1621
    %v1670 = vpack.c.b16 %v1626, %v1622
    %v1671 = vpack.c.b16 %v1631, %v1627
    %v1672 = vpack.c.b16 %v1632, %v1628
    %v1673 = vpack.c.b16 %v1633, %v1629
    %v1674 = vpack.c.b16 %v1634, %v1630
    %v1675 = vpack.c.b16 %v1639, %v1635
    %v1676 = vpack.c.b16 %v1640, %v1636
    %v1677 = vpack.c.b16 %v1641, %v1637
    %v1678 = vpack.c.b16 %v1642, %v1638
    %v1679 = vpack.c.b16 %v1647, %v1643
    %v1680 = vpack.c.b16 %v1648, %v1644
    %v1681 = vpack.c.b16 %v1649, %v1645
    %v1682 = vpack.c.b16 %v1650, %v1646
    %1715 = vmatprep.subr.bf16.mxu0 %v1652
    %1716 = vmatpush1.bf16.msra.mxu0 %v1651
    %1717 = vmatprep.subr.bf16.mxu0 %v1656
    %1718 = vmatpush1.bf16.msra.mxu0 %v1655
    %1719 = vmatprep.subr.bf16.mxu0 %v1660
    %1720 = vmatpush1.bf16.msra.mxu0 %v1659
    %1721 = vmatprep.subr.bf16.mxu0 %v1664
    %1722 = vmatpush1.bf16.msra.mxu0 %v1663
    %1723 = vmatprep.subr.bf16.mxu0 %v1668
    %1724 = vmatpush1.bf16.msra.mxu0 %v1667
    %1725 = vmatprep.subr.bf16.mxu0 %v1672
    %1726 = vmatpush1.bf16.msra.mxu0 %v1671
    %1727 = vmatprep.subr.bf16.mxu0 %v1676
    %1728 = vmatpush1.bf16.msra.mxu0 %v1675
    %1729 = vmatprep.subr.bf16.mxu0 %v1680
    %1730 = vmatpush1.bf16.msra.mxu0 %v1679
    %1731 = vmatprep.subr.bf16.mxu0 0
    %1732 = vmatpush1.bf16.msra.mxu0 0
    %1733 = vmatprep.subr.bf16.mxu0 0
    %1734 = vmatpush1.bf16.msra.mxu0 0
    %1735 = vmatprep.subr.bf16.mxu0 0
    %1736 = vmatpush1.bf16.msra.mxu0 0
    %1737 = vmatprep.subr.bf16.mxu0 0
    %1738 = vmatpush1.bf16.msra.mxu0 0
    %1739 = vmatprep.subr.bf16.mxu0 0
    %1740 = vmatpush1.bf16.msra.mxu0 0
    %1741 = vmatprep.subr.bf16.mxu0 0
    %1742 = vmatpush1.bf16.msra.mxu0 0
    %1743 = vmatprep.subr.bf16.mxu0 0
    %1744 = vmatpush1.bf16.msra.mxu0 0
    %1745 = vmatprep.subr.bf16.mxu0 0
    %1746 = vmatpush1.bf16.msra.mxu0 0
    %1747 = vmatprep.mubr.bf16.mxu0 0
    %1748 = vmatmul.mubr.bf16.gmra.mrb[0].mxu0 %v1554
    %v1749 = vpop.f32.mrb[0].mxu0
    %v1750 = vadd.f32 0.0, %v1749
    %v1751 = vpop.f32.mrb[0].mxu0
    %v1752 = vadd.f32 0.0, %v1751
    %v1753 = vpop.f32.mrb[0].mxu0
    %v1754 = vadd.f32 0.0, %v1753
    %v1755 = vpop.f32.mrb[0].mxu0
    %v1756 = vadd.f32 0.0, %v1755
    %1757 = vdwg.mxu0
    %1758 = vmatprep.subr.bf16.mxu0 %v1654
    %1759 = vmatpush1.bf16.msra.mxu0 %v1653
    %1760 = vmatprep.subr.bf16.mxu0 %v1658
    %1761 = vmatpush1.bf16.msra.mxu0 %v1657
    %1762 = vmatprep.subr.bf16.mxu0 %v1662
    %1763 = vmatpush1.bf16.msra.mxu0 %v1661
    %1764 = vmatprep.subr.bf16.mxu0 %v1666
    %1765 = vmatpush1.bf16.msra.mxu0 %v1665
    %1766 = vmatprep.subr.bf16.mxu0 %v1670
    %1767 = vmatpush1.bf16.msra.mxu0 %v1669
    %1768 = vmatprep.subr.bf16.mxu0 %v1674
    %1769 = vmatpush1.bf16.msra.mxu0 %v1673
    %1770 = vmatprep.subr.bf16.mxu0 %v1678
    %1771 = vmatpush1.bf16.msra.mxu0 %v1677
    %1772 = vmatprep.subr.bf16.mxu0 %v1682
    %1773 = vmatpush1.bf16.msra.mxu0 %v1681
    %1774 = vmatprep.subr.bf16.mxu0 0
    %1775 = vmatpush1.bf16.msra.mxu0 0
    %1776 = vmatprep.subr.bf16.mxu0 0
    %1777 = vmatpush1.bf16.msra.mxu0 0
    %1778 = vmatprep.subr.bf16.mxu0 0
    %1779 = vmatpush1.bf16.msra.mxu0 0
    %1780 = vmatprep.subr.bf16.mxu0 0
    %1781 = vmatpush1.bf16.msra.mxu0 0
    %1782 = vmatprep.subr.bf16.mxu0 0
    %1783 = vmatpush1.bf16.msra.mxu0 0
    %1784 = vmatprep.subr.bf16.mxu0 0
    %1785 = vmatpush1.bf16.msra.mxu0 0
    %1786 = vmatprep.subr.bf16.mxu0 0
    %1787 = vmatpush1.bf16.msra.mxu0 0
    %1788 = vmatprep.subr.bf16.mxu0 0
    %1789 = vmatpush1.bf16.msra.mxu0 0
    %1790 = vmatprep.mubr.bf16.mxu0 0
    %1791 = vmatmul.mubr.bf16.gmra.mrb[0].mxu0 %v1554
    %v1792 = vpop.f32.mrb[0].mxu0
    %v1793 = vadd.f32 0.0, %v1792
    %v1794 = vpop.f32.mrb[0].mxu0
    %v1795 = vadd.f32 0.0, %v1794
    %v1796 = vpop.f32.mrb[0].mxu0
    %v1797 = vadd.f32 0.0, %v1796
    %v1798 = vpop.f32.mrb[0].mxu0
    %v1799 = vadd.f32 0.0, %v1798
    %1800 = vdwg.mxu0
    %v1801 = vadd.f32 %v1546, %v1750
    %v1802 = vadd.f32 %v1547, %v1752
    %v1803 = vadd.f32 %v1548, %v1793
    %v1804 = vadd.f32 %v1549, %v1795
    %v1805 = vadd.f32 %v1550, %v1754
    %v1806 = vadd.f32 %v1551, %v1756
    %v1807 = vadd.f32 %v1552, %v1797
    %v1808 = vadd.f32 %v1553, %v1799
    %v1809 = vld [vmem:[#allocation3] sm:$0xff]
    %v1810 = vld [vmem:[#allocation3 + $0x8] sm:$0xff]
    %v1811 = vld [vmem:[#allocation3 + $0x10] sm:$0xff]
    %v1812 = vld [vmem:[#allocation3 + $0x18] sm:$0xff]
    %v1813 = vld [vmem:[#allocation3 + $0x20] sm:$0xff]
    %v1814 = vld [vmem:[#allocation3 + $0x28] sm:$0xff]
    %v1815 = vld [vmem:[#allocation3 + $0x30] sm:$0xff]
    %v1816 = vld [vmem:[#allocation3 + $0x38] sm:$0xff]
    %v1817 = vpack.c.bf16 %v1543, %v1542
    %v1850 = vunpack.c.l.b16 %v1501
    %v1851 = vunpack.c.h.b16 %v1501
    %v1852 = vunpack.c.l.b16 %v1502
    %v1853 = vunpack.c.h.b16 %v1502
    %v1854 = vunpack.c.l.b16 %v1503
    %v1855 = vunpack.c.h.b16 %v1503
    %v1856 = vunpack.c.l.b16 %v1504
    %v1857 = vunpack.c.h.b16 %v1504
    %v1858 = vunpack.c.l.b16 %v1505
    %v1859 = vunpack.c.h.b16 %v1505
    %v1860 = vunpack.c.l.b16 %v1506
    %v1861 = vunpack.c.h.b16 %v1506
    %v1862 = vunpack.c.l.b16 %v1507
    %v1863 = vunpack.c.h.b16 %v1507
    %v1864 = vunpack.c.l.b16 %v1508
    %v1865 = vunpack.c.h.b16 %v1508
    %v1866 = vunpack.c.l.b16 %v1509
    %v1867 = vunpack.c.h.b16 %v1509
    %v1868 = vunpack.c.l.b16 %v1510
    %v1869 = vunpack.c.h.b16 %v1510
    %v1870 = vunpack.c.l.b16 %v1511
    %v1871 = vunpack.c.h.b16 %v1511
    %v1872 = vunpack.c.l.b16 %v1512
    %v1873 = vunpack.c.h.b16 %v1512
    %v1874 = vunpack.c.l.b16 %v1513
    %v1875 = vunpack.c.h.b16 %v1513
    %v1876 = vunpack.c.l.b16 %v1514
    %v1877 = vunpack.c.h.b16 %v1514
    %v1878 = vunpack.c.l.b16 %v1515
    %v1879 = vunpack.c.h.b16 %v1515
    %v1880 = vunpack.c.l.b16 %v1516
    %v1881 = vunpack.c.h.b16 %v1516
    %v1882 = vunpack.c.l.b16 %v1517
    %v1883 = vunpack.c.h.b16 %v1517
    %v1884 = vunpack.c.l.b16 %v1518
    %v1885 = vunpack.c.h.b16 %v1518
    %v1886 = vunpack.c.l.b16 %v1519
    %v1887 = vunpack.c.h.b16 %v1519
    %v1888 = vunpack.c.l.b16 %v1520
    %v1889 = vunpack.c.h.b16 %v1520
    %v1890 = vunpack.c.l.b16 %v1521
    %v1891 = vunpack.c.h.b16 %v1521
    %v1892 = vunpack.c.l.b16 %v1522
    %v1893 = vunpack.c.h.b16 %v1522
    %v1894 = vunpack.c.l.b16 %v1523
    %v1895 = vunpack.c.h.b16 %v1523
    %v1896 = vunpack.c.l.b16 %v1524
    %v1897 = vunpack.c.h.b16 %v1524
    %v1898 = vunpack.c.l.b16 %v1525
    %v1899 = vunpack.c.h.b16 %v1525
    %v1900 = vunpack.c.l.b16 %v1526
    %v1901 = vunpack.c.h.b16 %v1526
    %v1902 = vunpack.c.l.b16 %v1527
    %v1903 = vunpack.c.h.b16 %v1527
    %v1904 = vunpack.c.l.b16 %v1528
    %v1905 = vunpack.c.h.b16 %v1528
    %v1906 = vunpack.c.l.b16 %v1529
    %v1907 = vunpack.c.h.b16 %v1529
    %v1908 = vunpack.c.l.b16 %v1530
    %v1909 = vunpack.c.h.b16 %v1530
    %v1910 = vunpack.c.l.b16 %v1531
    %v1911 = vunpack.c.h.b16 %v1531
    %v1912 = vunpack.c.l.b16 %v1532
    %v1913 = vunpack.c.h.b16 %v1532
    %v1914 = vpack.c.b16 %v1854, %v1850
    %v1915 = vpack.c.b16 %v1855, %v1851
    %v1916 = vpack.c.b16 %v1856, %v1852
    %v1917 = vpack.c.b16 %v1857, %v1853
    %v1918 = vpack.c.b16 %v1862, %v1858
    %v1919 = vpack.c.b16 %v1863, %v1859
    %v1920 = vpack.c.b16 %v1864, %v1860
    %v1921 = vpack.c.b16 %v1865, %v1861
    %v1922 = vpack.c.b16 %v1870, %v1866
    %v1923 = vpack.c.b16 %v1871, %v1867
    %v1924 = vpack.c.b16 %v1872, %v1868
    %v1925 = vpack.c.b16 %v1873, %v1869
    %v1926 = vpack.c.b16 %v1878, %v1874
    %v1927 = vpack.c.b16 %v1879, %v1875
    %v1928 = vpack.c.b16 %v1880, %v1876
    %v1929 = vpack.c.b16 %v1881, %v1877
    %v1930 = vpack.c.b16 %v1886, %v1882
    %v1931 = vpack.c.b16 %v1887, %v1883
    %v1932 = vpack.c.b16 %v1888, %v1884
    %v1933 = vpack.c.b16 %v1889, %v1885
    %v1934 = vpack.c.b16 %v1894, %v1890
    %v1935 = vpack.c.b16 %v1895, %v1891
    %v1936 = vpack.c.b16 %v1896, %v1892
    %v1937 = vpack.c.b16 %v1897, %v1893
    %v1938 = vpack.c.b16 %v1902, %v1898
    %v1939 = vpack.c.b16 %v1903, %v1899
    %v1940 = vpack.c.b16 %v1904, %v1900
    %v1941 = vpack.c.b16 %v1905, %v1901
    %v1942 = vpack.c.b16 %v1910, %v1906
    %v1943 = vpack.c.b16 %v1911, %v1907
    %v1944 = vpack.c.b16 %v1912, %v1908
    %v1945 = vpack.c.b16 %v1913, %v1909
    %1978 = vmatprep.subr.bf16.mxu0 %v1915
    %1979 = vmatpush1.bf16.msra.mxu0 %v1914
    %1980 = vmatprep.subr.bf16.mxu0 %v1919
    %1981 = vmatpush1.bf16.msra.mxu0 %v1918
    %1982 = vmatprep.subr.bf16.mxu0 %v1923
    %1983 = vmatpush1.bf16.msra.mxu0 %v1922
    %1984 = vmatprep.subr.bf16.mxu0 %v1927
    %1985 = vmatpush1.bf16.msra.mxu0 %v1926
    %1986 = vmatprep.subr.bf16.mxu0 %v1931
    %1987 = vmatpush1.bf16.msra.mxu0 %v1930
    %1988 = vmatprep.subr.bf16.mxu0 %v1935
    %1989 = vmatpush1.bf16.msra.mxu0 %v1934
    %1990 = vmatprep.subr.bf16.mxu0 %v1939
    %1991 = vmatpush1.bf16.msra.mxu0 %v1938
    %1992 = vmatprep.subr.bf16.mxu0 %v1943
    %1993 = vmatpush1.bf16.msra.mxu0 %v1942
    %1994 = vmatprep.subr.bf16.mxu0 0
    %1995 = vmatpush1.bf16.msra.mxu0 0
    %1996 = vmatprep.subr.bf16.mxu0 0
    %1997 = vmatpush1.bf16.msra.mxu0 0
    %1998 = vmatprep.subr.bf16.mxu0 0
    %1999 = vmatpush1.bf16.msra.mxu0 0
    %2000 = vmatprep.subr.bf16.mxu0 0
    %2001 = vmatpush1.bf16.msra.mxu0 0
    %2002 = vmatprep.subr.bf16.mxu0 0
    %2003 = vmatpush1.bf16.msra.mxu0 0
    %2004 = vmatprep.subr.bf16.mxu0 0
    %2005 = vmatpush1.bf16.msra.mxu0 0
    %2006 = vmatprep.subr.bf16.mxu0 0
    %2007 = vmatpush1.bf16.msra.mxu0 0
    %2008 = vmatprep.subr.bf16.mxu0 0
    %2009 = vmatpush1.bf16.msra.mxu0 0
    %2010 = vmatprep.mubr.bf16.mxu0 0
    %2011 = vmatmul.mubr.bf16.gmra.mrb[0].mxu0 %v1817
    %v2012 = vpop.f32.mrb[0].mxu0
    %v2013 = vadd.f32 0.0, %v2012
    %v2014 = vpop.f32.mrb[0].mxu0
    %v2015 = vadd.f32 0.0, %v2014
    %v2016 = vpop.f32.mrb[0].mxu0
    %v2017 = vadd.f32 0.0, %v2016
    %v2018 = vpop.f32.mrb[0].mxu0
    %v2019 = vadd.f32 0.0, %v2018
    %2020 = vdwg.mxu0
    %2021 = vmatprep.subr.bf16.mxu0 %v1917
    %2022 = vmatpush1.bf16.msra.mxu0 %v1916
    %2023 = vmatprep.subr.bf16.mxu0 %v1921
    %2024 = vmatpush1.bf16.msra.mxu0 %v1920
    %2025 = vmatprep.subr.bf16.mxu0 %v1925
    %2026 = vmatpush1.bf16.msra.mxu0 %v1924
    %2027 = vmatprep.subr.bf16.mxu0 %v1929
    %2028 = vmatpush1.bf16.msra.mxu0 %v1928
    %2029 = vmatprep.subr.bf16.mxu0 %v1933
    %2030 = vmatpush1.bf16.msra.mxu0 %v1932
    %2031 = vmatprep.subr.bf16.mxu0 %v1937
    %2032 = vmatpush1.bf16.msra.mxu0 %v1936
    %2033 = vmatprep.subr.bf16.mxu0 %v1941
    %2034 = vmatpush1.bf16.msra.mxu0 %v1940
    %2035 = vmatprep.subr.bf16.mxu0 %v1945
    %2036 = vmatpush1.bf16.msra.mxu0 %v1944
    %2037 = vmatprep.subr.bf16.mxu0 0
    %2038 = vmatpush1.bf16.msra.mxu0 0
    %2039 = vmatprep.subr.bf16.mxu0 0
    %2040 = vmatpush1.bf16.msra.mxu0 0
    %2041 = vmatprep.subr.bf16.mxu0 0
    %2042 = vmatpush1.bf16.msra.mxu0 0
    %2043 = vmatprep.subr.bf16.mxu0 0
    %2044 = vmatpush1.bf16.msra.mxu0 0
    %2045 = vmatprep.subr.bf16.mxu0 0
    %2046 = vmatpush1.bf16.msra.mxu0 0
    %2047 = vmatprep.subr.bf16.mxu0 0
    %2048 = vmatpush1.bf16.msra.mxu0 0
    %2049 = vmatprep.subr.bf16.mxu0 0
    %2050 = vmatpush1.bf16.msra.mxu0 0
    %2051 = vmatprep.subr.bf16.mxu0 0
    %2052 = vmatpush1.bf16.msra.mxu0 0
    %2053 = vmatprep.mubr.bf16.mxu0 0
    %2054 = vmatmul.mubr.bf16.gmra.mrb[0].mxu0 %v1817
    %v2055 = vpop.f32.mrb[0].mxu0
    %v2056 = vadd.f32 0.0, %v2055
    %v2057 = vpop.f32.mrb[0].mxu0
    %v2058 = vadd.f32 0.0, %v2057
    %v2059 = vpop.f32.mrb[0].mxu0
    %v2060 = vadd.f32 0.0, %v2059
    %v2061 = vpop.f32.mrb[0].mxu0
    %v2062 = vadd.f32 0.0, %v2061
    %2063 = vdwg.mxu0
    %v2064 = vadd.f32 %v1809, %v2013
    %v2065 = vadd.f32 %v1810, %v2015
    %v2066 = vadd.f32 %v1811, %v2056
    %v2067 = vadd.f32 %v1812, %v2058
    %v2068 = vadd.f32 %v1813, %v2017
    %v2069 = vadd.f32 %v1814, %v2019
    %v2070 = vadd.f32 %v1815, %v2060
    %v2071 = vadd.f32 %v1816, %v2062
    %v2072 = vxor.u32 %v1801, 2147483648
    %v2073 = vxor.u32 %v1805, 2147483648
    %v2074 = vmul.f32 %v2072, 1.442695
    %v2075 = vpow.pop %v2074
    %v2076 = vmul.f32 %v2073, 1.442695
    %v2077 = vpow.pop %v2076
    %v2078 = vadd.f32 %v2075, 1.0
    %v2079 = vadd.f32 %v2077, 1.0
    %v2080 = vrcp.pop %v2078
    %v2081 = vmul.f32 1.0, %v2080
    %v2082 = vrcp.pop %v2079
    %v2083 = vmul.f32 1.0, %v2082
    %v2084 = vxor.u32 %v1802, 2147483648
    %v2085 = vxor.u32 %v1806, 2147483648
    %v2086 = vmul.f32 %v2084, 1.442695
    %v2087 = vpow.pop %v2086
    %v2088 = vmul.f32 %v2085, 1.442695
    %v2089 = vpow.pop %v2088
    %v2090 = vadd.f32 %v2087, 1.0
    %v2091 = vadd.f32 %v2089, 1.0
    %v2092 = vrcp.pop %v2090
    %v2093 = vmul.f32 1.0, %v2092
    %v2094 = vrcp.pop %v2091
    %v2095 = vmul.f32 1.0, %v2094
    %v2096 = vtanh.pop %v1803
    %v2097 = vtanh.pop %v1807
    %v2098 = vxor.u32 %v1804, 2147483648
    %v2099 = vxor.u32 %v1808, 2147483648
    %v2100 = vmul.f32 %v2098, 1.442695
    %v2101 = vpow.pop %v2100
    %v2102 = vmul.f32 %v2099, 1.442695
    %v2103 = vpow.pop %v2102
    %v2104 = vadd.f32 %v2101, 1.0
    %v2105 = vadd.f32 %v2103, 1.0
    %v2106 = vrcp.pop %v2104
    %v2107 = vmul.f32 1.0, %v2106
    %v2108 = vrcp.pop %v2105
    %v2109 = vmul.f32 1.0, %v2108
    %v2110 = vmul.f32 %v2093, %v1540
    %v2111 = vmul.f32 %v2095, %v1541
    %v2112 = vmul.f32 %v2081, %v2096
    %v2113 = vmul.f32 %v2083, %v2097
    %v2114 = vadd.f32 %v2110, %v2112
    %v2115 = vadd.f32 %v2111, %v2113
    %v2116 = vtanh.pop %v2114
    %v2117 = vtanh.pop %v2115
    %v2118 = vmul.f32 %v2107, %v2116
    %v2119 = vmul.f32 %v2109, %v2117
    %v2120 = vstv %s1537
    %vm2121 = vcmp.lt.s32.totalorder %v2120, %v1533
    %vm2122 = vcmp.lt.s32.totalorder %v2120, %v1534
    %v2123 = vsel %vm2121, 1, 0
    %v2124 = vsel %vm2122, 1, 0
    %2125 = vset.pattern.permute.xlu0 0
    %2126 = vperm.xlu0 %2125, %v2123
    %v2127 = vpop.permute.xlu0 %2126
    %2128 = vset.pattern.permute.xlu0 0
    %2129 = vperm.xlu0 %2128, %v2124
    %v2130 = vpop.permute.xlu0 %2129
    %vm2131 = vcmp.eq.s32.totalorder %v2127, 1
    %vm2132 = vcmp.eq.s32.totalorder %v2130, 1
    %v2133 = vsel %vm2131, %v2118, %v1538
    %v2134 = vsel %vm2132, %v2119, %v1539
    %v2135 = vsel %vm2131, %v2114, %v1540
    %v2136 = vsel %vm2132, %v2115, %v1541
    %v2137 = vxor.u32 %v2064, 2147483648
    %v2138 = vxor.u32 %v2068, 2147483648
    %v2139 = vmul.f32 %v2137, 1.442695
    %v2140 = vpow.pop %v2139
    %v2141 = vmul.f32 %v2138, 1.442695
    %v2142 = vpow.pop %v2141
    %v2143 = vadd.f32 %v2140, 1.0
    %v2144 = vadd.f32 %v2142, 1.0
    %v2145 = vrcp.pop %v2143
    %v2146 = vmul.f32 1.0, %v2145
    %v2147 = vrcp.pop %v2144
    %v2148 = vmul.f32 1.0, %v2147
    %v2149 = vxor.u32 %v2065, 2147483648
    %v2150 = vxor.u32 %v2069, 2147483648
    %v2151 = vmul.f32 %v2149, 1.442695
    %v2152 = vpow.pop %v2151
    %v2153 = vmul.f32 %v2150, 1.442695
    %v2154 = vpow.pop %v2153
    %v2155 = vadd.f32 %v2152, 1.0
    %v2156 = vadd.f32 %v2154, 1.0
    %v2157 = vrcp.pop %v2155
    %v2158 = vmul.f32 1.0, %v2157
    %v2159 = vrcp.pop %v2156
    %v2160 = vmul.f32 1.0, %v2159
    %v2161 = vtanh.pop %v2066
    %v2162 = vtanh.pop %v2070
    %v2163 = vxor.u32 %v2067, 2147483648
    %v2164 = vxor.u32 %v2071, 2147483648
    %v2165 = vmul.f32 %v2163, 1.442695
    %v2166 = vpow.pop %v2165
    %v2167 = vmul.f32 %v2164, 1.442695
    %v2168 = vpow.pop %v2167
    %v2169 = vadd.f32 %v2166, 1.0
    %v2170 = vadd.f32 %v2168, 1.0
    %v2171 = vrcp.pop %v2169
    %v2172 = vmul.f32 1.0, %v2171
    %v2173 = vrcp.pop %v2170
    %v2174 = vmul.f32 1.0, %v2173
    %v2175 = vmul.f32 %v2158, %v1544
    %v2176 = vmul.f32 %v2160, %v1545
    %v2177 = vmul.f32 %v2146, %v2161
    %v2178 = vmul.f32 %v2148, %v2162
    %v2179 = vadd.f32 %v2175, %v2177
    %v2180 = vadd.f32 %v2176, %v2178
    %v2181 = vtanh.pop %v2179
    %v2182 = vtanh.pop %v2180
    %v2183 = vmul.f32 %v2172, %v2181
    %v2184 = vmul.f32 %v2174, %v2182
    %vm2185 = vcmp.lt.s32.totalorder %v2120, %v1535
    %vm2186 = vcmp.lt.s32.totalorder %v2120, %v1536
    %v2187 = vsel %vm2185, 1, 0
    %v2188 = vsel %vm2186, 1, 0
    %2189 = vset.pattern.permute.xlu0 0
    %2190 = vperm.xlu0 %2189, %v2187
    %v2191 = vpop.permute.xlu0 %2190
    %2192 = vset.pattern.permute.xlu0 0
    %2193 = vperm.xlu0 %2192, %v2188
    %v2194 = vpop.permute.xlu0 %2193
    %vm2195 = vcmp.eq.s32.totalorder %v2191, 1
    %vm2196 = vcmp.eq.s32.totalorder %v2194, 1
    %v2197 = vsel %vm2195, %v2183, %v1542
    %v2198 = vsel %vm2196, %v2184, %v1543
    %v2199 = vsel %vm2195, %v2179, %v1544
    %v2200 = vsel %vm2196, %v2180, %v1545
    %s2201 = scalar_lea.vmem [#allocation2], 64
    %v2202 = vld [vmem:[%s2201] sm:$0xff]
    %v2203 = vld [vmem:[%s2201 + $0x8] sm:$0xff]
    %v2204 = vld [vmem:[%s2201 + $0x10] sm:$0xff]
    %v2205 = vld [vmem:[%s2201 + $0x18] sm:$0xff]
    %v2206 = vld [vmem:[%s2201 + $0x20] sm:$0xff]
    %v2207 = vld [vmem:[%s2201 + $0x28] sm:$0xff]
    %v2208 = vld [vmem:[%s2201 + $0x30] sm:$0xff]
    %v2209 = vld [vmem:[%s2201 + $0x38] sm:$0xff]
    %v2210 = vpack.c.bf16 %v2134, %v2133
    %2211 = vmatprep.subr.bf16.mxu0 %v1652
    %2212 = vmatpush1.bf16.msra.mxu0 %v1651
    %2213 = vmatprep.subr.bf16.mxu0 %v1656
    %2214 = vmatpush1.bf16.msra.mxu0 %v1655
    %2215 = vmatprep.subr.bf16.mxu0 %v1660
    %2216 = vmatpush1.bf16.msra.mxu0 %v1659
    %2217 = vmatprep.subr.bf16.mxu0 %v1664
    %2218 = vmatpush1.bf16.msra.mxu0 %v1663
    %2219 = vmatprep.subr.bf16.mxu0 %v1668
    %2220 = vmatpush1.bf16.msra.mxu0 %v1667
    %2221 = vmatprep.subr.bf16.mxu0 %v1672
    %2222 = vmatpush1.bf16.msra.mxu0 %v1671
    %2223 = vmatprep.subr.bf16.mxu0 %v1676
    %2224 = vmatpush1.bf16.msra.mxu0 %v1675
    %2225 = vmatprep.subr.bf16.mxu0 %v1680
    %2226 = vmatpush1.bf16.msra.mxu0 %v1679
    %2227 = vmatprep.subr.bf16.mxu0 0
    %2228 = vmatpush1.bf16.msra.mxu0 0
    %2229 = vmatprep.subr.bf16.mxu0 0
    %2230 = vmatpush1.bf16.msra.mxu0 0
    %2231 = vmatprep.subr.bf16.mxu0 0
    %2232 = vmatpush1.bf16.msra.mxu0 0
    %2233 = vmatprep.subr.bf16.mxu0 0
    %2234 = vmatpush1.bf16.msra.mxu0 0
    %2235 = vmatprep.subr.bf16.mxu0 0
    %2236 = vmatpush1.bf16.msra.mxu0 0
    %2237 = vmatprep.subr.bf16.mxu0 0
    %2238 = vmatpush1.bf16.msra.mxu0 0
    %2239 = vmatprep.subr.bf16.mxu0 0
    %2240 = vmatpush1.bf16.msra.mxu0 0
    %2241 = vmatprep.subr.bf16.mxu0 0
    %2242 = vmatpush1.bf16.msra.mxu0 0
    %2243 = vmatprep.mubr.bf16.mxu0 0
    %2244 = vmatmul.mubr.bf16.gmra.mrb[0].mxu0 %v2210
    %v2245 = vpop.f32.mrb[0].mxu0
    %v2246 = vadd.f32 0.0, %v2245
    %v2247 = vpop.f32.mrb[0].mxu0
    %v2248 = vadd.f32 0.0, %v2247
    %v2249 = vpop.f32.mrb[0].mxu0
    %v2250 = vadd.f32 0.0, %v2249
    %v2251 = vpop.f32.mrb[0].mxu0
    %v2252 = vadd.f32 0.0, %v2251
    %2253 = vdwg.mxu0
    %2254 = vmatprep.subr.bf16.mxu0 %v1654
    %2255 = vmatpush1.bf16.msra.mxu0 %v1653
    %2256 = vmatprep.subr.bf16.mxu0 %v1658
    %2257 = vmatpush1.bf16.msra.mxu0 %v1657
    %2258 = vmatprep.subr.bf16.mxu0 %v1662
    %2259 = vmatpush1.bf16.msra.mxu0 %v1661
    %2260 = vmatprep.subr.bf16.mxu0 %v1666
    %2261 = vmatpush1.bf16.msra.mxu0 %v1665
    %2262 = vmatprep.subr.bf16.mxu0 %v1670
    %2263 = vmatpush1.bf16.msra.mxu0 %v1669
    %2264 = vmatprep.subr.bf16.mxu0 %v1674
    %2265 = vmatpush1.bf16.msra.mxu0 %v1673
    %2266 = vmatprep.subr.bf16.mxu0 %v1678
    %2267 = vmatpush1.bf16.msra.mxu0 %v1677
    %2268 = vmatprep.subr.bf16.mxu0 %v1682
    %2269 = vmatpush1.bf16.msra.mxu0 %v1681
    %2270 = vmatprep.subr.bf16.mxu0 0
    %2271 = vmatpush1.bf16.msra.mxu0 0
    %2272 = vmatprep.subr.bf16.mxu0 0
    %2273 = vmatpush1.bf16.msra.mxu0 0
    %2274 = vmatprep.subr.bf16.mxu0 0
    %2275 = vmatpush1.bf16.msra.mxu0 0
    %2276 = vmatprep.subr.bf16.mxu0 0
    %2277 = vmatpush1.bf16.msra.mxu0 0
    %2278 = vmatprep.subr.bf16.mxu0 0
    %2279 = vmatpush1.bf16.msra.mxu0 0
    %2280 = vmatprep.subr.bf16.mxu0 0
    %2281 = vmatpush1.bf16.msra.mxu0 0
    %2282 = vmatprep.subr.bf16.mxu0 0
    %2283 = vmatpush1.bf16.msra.mxu0 0
    %2284 = vmatprep.subr.bf16.mxu0 0
    %2285 = vmatpush1.bf16.msra.mxu0 0
    %2286 = vmatprep.mubr.bf16.mxu0 0
    %2287 = vmatmul.mubr.bf16.gmra.mrb[0].mxu0 %v2210
    %v2288 = vpop.f32.mrb[0].mxu0
    %v2289 = vadd.f32 0.0, %v2288
    %v2290 = vpop.f32.mrb[0].mxu0
    %v2291 = vadd.f32 0.0, %v2290
    %v2292 = vpop.f32.mrb[0].mxu0
    %v2293 = vadd.f32 0.0, %v2292
    %v2294 = vpop.f32.mrb[0].mxu0
    %v2295 = vadd.f32 0.0, %v2294
    %2296 = vdwg.mxu0
    %v2297 = vadd.f32 %v2202, %v2246
    %v2298 = vadd.f32 %v2203, %v2248
    %v2299 = vadd.f32 %v2204, %v2289
    %v2300 = vadd.f32 %v2205, %v2291
    %v2301 = vadd.f32 %v2206, %v2250
    %v2302 = vadd.f32 %v2207, %v2252
    %v2303 = vadd.f32 %v2208, %v2293
    %v2304 = vadd.f32 %v2209, %v2295
    %s2305 = scalar_lea.vmem [#allocation3], 64
    %v2306 = vld [vmem:[%s2305] sm:$0xff]
    %v2307 = vld [vmem:[%s2305 + $0x8] sm:$0xff]
    %v2308 = vld [vmem:[%s2305 + $0x10] sm:$0xff]
    %v2309 = vld [vmem:[%s2305 + $0x18] sm:$0xff]
    %v2310 = vld [vmem:[%s2305 + $0x20] sm:$0xff]
    %v2311 = vld [vmem:[%s2305 + $0x28] sm:$0xff]
    %v2312 = vld [vmem:[%s2305 + $0x30] sm:$0xff]
    %v2313 = vld [vmem:[%s2305 + $0x38] sm:$0xff]
    %v2314 = vpack.c.bf16 %v2198, %v2197
    %2315 = vmatprep.subr.bf16.mxu0 %v1915
    %2316 = vmatpush1.bf16.msra.mxu0 %v1914
    %2317 = vmatprep.subr.bf16.mxu0 %v1919
    %2318 = vmatpush1.bf16.msra.mxu0 %v1918
    %2319 = vmatprep.subr.bf16.mxu0 %v1923
    %2320 = vmatpush1.bf16.msra.mxu0 %v1922
    %2321 = vmatprep.subr.bf16.mxu0 %v1927
    %2322 = vmatpush1.bf16.msra.mxu0 %v1926
    %2323 = vmatprep.subr.bf16.mxu0 %v1931
    %2324 = vmatpush1.bf16.msra.mxu0 %v1930
    %2325 = vmatprep.subr.bf16.mxu0 %v1935
    %2326 = vmatpush1.bf16.msra.mxu0 %v1934
    %2327 = vmatprep.subr.bf16.mxu0 %v1939
    %2328 = vmatpush1.bf16.msra.mxu0 %v1938
    %2329 = vmatprep.subr.bf16.mxu0 %v1943
    %2330 = vmatpush1.bf16.msra.mxu0 %v1942
    %2331 = vmatprep.subr.bf16.mxu0 0
    %2332 = vmatpush1.bf16.msra.mxu0 0
    %2333 = vmatprep.subr.bf16.mxu0 0
    %2334 = vmatpush1.bf16.msra.mxu0 0
    %2335 = vmatprep.subr.bf16.mxu0 0
    %2336 = vmatpush1.bf16.msra.mxu0 0
    %2337 = vmatprep.subr.bf16.mxu0 0
    %2338 = vmatpush1.bf16.msra.mxu0 0
    %2339 = vmatprep.subr.bf16.mxu0 0
    %2340 = vmatpush1.bf16.msra.mxu0 0
    %2341 = vmatprep.subr.bf16.mxu0 0
    %2342 = vmatpush1.bf16.msra.mxu0 0
    %2343 = vmatprep.subr.bf16.mxu0 0
    %2344 = vmatpush1.bf16.msra.mxu0 0
    %2345 = vmatprep.subr.bf16.mxu0 0
    %2346 = vmatpush1.bf16.msra.mxu0 0
    %2347 = vmatprep.mubr.bf16.mxu0 0
    %2348 = vmatmul.mubr.bf16.gmra.mrb[0].mxu0 %v2314
    %v2349 = vpop.f32.mrb[0].mxu0
    %v2350 = vadd.f32 0.0, %v2349
    %v2351 = vpop.f32.mrb[0].mxu0
    %v2352 = vadd.f32 0.0, %v2351
    %v2353 = vpop.f32.mrb[0].mxu0
    %v2354 = vadd.f32 0.0, %v2353
    %v2355 = vpop.f32.mrb[0].mxu0
    %v2356 = vadd.f32 0.0, %v2355
    %2357 = vdwg.mxu0
    %2358 = vmatprep.subr.bf16.mxu0 %v1917
    %2359 = vmatpush1.bf16.msra.mxu0 %v1916
    %2360 = vmatprep.subr.bf16.mxu0 %v1921
    %2361 = vmatpush1.bf16.msra.mxu0 %v1920
    %2362 = vmatprep.subr.bf16.mxu0 %v1925
    %2363 = vmatpush1.bf16.msra.mxu0 %v1924
    %2364 = vmatprep.subr.bf16.mxu0 %v1929
    %2365 = vmatpush1.bf16.msra.mxu0 %v1928
    %2366 = vmatprep.subr.bf16.mxu0 %v1933
    %2367 = vmatpush1.bf16.msra.mxu0 %v1932
    %2368 = vmatprep.subr.bf16.mxu0 %v1937
    %2369 = vmatpush1.bf16.msra.mxu0 %v1936
    %2370 = vmatprep.subr.bf16.mxu0 %v1941
    %2371 = vmatpush1.bf16.msra.mxu0 %v1940
    %2372 = vmatprep.subr.bf16.mxu0 %v1945
    %2373 = vmatpush1.bf16.msra.mxu0 %v1944
    %2374 = vmatprep.subr.bf16.mxu0 0
    %2375 = vmatpush1.bf16.msra.mxu0 0
    %2376 = vmatprep.subr.bf16.mxu0 0
    %2377 = vmatpush1.bf16.msra.mxu0 0
    %2378 = vmatprep.subr.bf16.mxu0 0
    %2379 = vmatpush1.bf16.msra.mxu0 0
    %2380 = vmatprep.subr.bf16.mxu0 0
    %2381 = vmatpush1.bf16.msra.mxu0 0
    %2382 = vmatprep.subr.bf16.mxu0 0
    %2383 = vmatpush1.bf16.msra.mxu0 0
    %2384 = vmatprep.subr.bf16.mxu0 0
    %2385 = vmatpush1.bf16.msra.mxu0 0
    %2386 = vmatprep.subr.bf16.mxu0 0
    %2387 = vmatpush1.bf16.msra.mxu0 0
    %2388 = vmatprep.subr.bf16.mxu0 0
    %2389 = vmatpush1.bf16.msra.mxu0 0
    %2390 = vmatprep.mubr.bf16.mxu0 0
    %2391 = vmatmul.mubr.bf16.gmra.mrb[0].mxu0 %v2314
    %v2392 = vpop.f32.mrb[0].mxu0
    %v2393 = vadd.f32 0.0, %v2392
    %v2394 = vpop.f32.mrb[0].mxu0
    %v2395 = vadd.f32 0.0, %v2394
    %v2396 = vpop.f32.mrb[0].mxu0
    %v2397 = vadd.f32 0.0, %v2396
    %v2398 = vpop.f32.mrb[0].mxu0
    %v2399 = vadd.f32 0.0, %v2398
    %2400 = vdwg.mxu0
    %v2401 = vadd.f32 %v2306, %v2350
    %v2402 = vadd.f32 %v2307, %v2352
    %v2403 = vadd.f32 %v2308, %v2393
    %v2404 = vadd.f32 %v2309, %v2395
    %v2405 = vadd.f32 %v2310, %v2354
    %v2406 = vadd.f32 %v2311, %v2356
    %v2407 = vadd.f32 %v2312, %v2397
    %v2408 = vadd.f32 %v2313, %v2399
    %v2409 = vxor.u32 %v2297, 2147483648
    %v2410 = vxor.u32 %v2301, 2147483648
    %v2411 = vmul.f32 %v2409, 1.442695
    %v2412 = vpow.pop %v2411
    %v2413 = vmul.f32 %v2410, 1.442695
    %v2414 = vpow.pop %v2413
    %v2415 = vadd.f32 %v2412, 1.0
    %v2416 = vadd.f32 %v2414, 1.0
    %v2417 = vrcp.pop %v2415
    %v2418 = vmul.f32 1.0, %v2417
    %v2419 = vrcp.pop %v2416
    %v2420 = vmul.f32 1.0, %v2419
    %v2421 = vxor.u32 %v2298, 2147483648
    %v2422 = vxor.u32 %v2302, 2147483648
    %v2423 = vmul.f32 %v2421, 1.442695
    %v2424 = vpow.pop %v2423
    %v2425 = vmul.f32 %v2422, 1.442695
    %v2426 = vpow.pop %v2425
    %v2427 = vadd.f32 %v2424, 1.0
    %v2428 = vadd.f32 %v2426, 1.0
    %v2429 = vrcp.pop %v2427
    %v2430 = vmul.f32 1.0, %v2429
    %v2431 = vrcp.pop %v2428
    %v2432 = vmul.f32 1.0, %v2431
    %v2433 = vtanh.pop %v2299
    %v2434 = vtanh.pop %v2303
    %v2435 = vxor.u32 %v2300, 2147483648
    %v2436 = vxor.u32 %v2304, 2147483648
    %v2437 = vmul.f32 %v2435, 1.442695
    %v2438 = vpow.pop %v2437
    %v2439 = vmul.f32 %v2436, 1.442695
    %v2440 = vpow.pop %v2439
    %v2441 = vadd.f32 %v2438, 1.0
    %v2442 = vadd.f32 %v2440, 1.0
    %v2443 = vrcp.pop %v2441
    %v2444 = vmul.f32 1.0, %v2443
    %v2445 = vrcp.pop %v2442
    %v2446 = vmul.f32 1.0, %v2445
    %v2447 = vmul.f32 %v2430, %v2135
    %v2448 = vmul.f32 %v2432, %v2136
    %v2449 = vmul.f32 %v2418, %v2433
    %v2450 = vmul.f32 %v2420, %v2434
    %v2451 = vadd.f32 %v2447, %v2449
    %v2452 = vadd.f32 %v2448, %v2450
    %v2453 = vtanh.pop %v2451
    %v2454 = vtanh.pop %v2452
    %v2455 = vmul.f32 %v2444, %v2453
    %v2456 = vmul.f32 %v2446, %v2454
    %s2457 = sadd.s32 %s1537, 1
    %v2458 = vstv %s2457
    %vm2459 = vcmp.lt.s32.totalorder %v2458, %v1533
    %vm2460 = vcmp.lt.s32.totalorder %v2458, %v1534
    %v2461 = vsel %vm2459, 1, 0
    %v2462 = vsel %vm2460, 1, 0
    %2463 = vset.pattern.permute.xlu0 0
    %2464 = vperm.xlu0 %2463, %v2461
    %v2465 = vpop.permute.xlu0 %2464
    %2466 = vset.pattern.permute.xlu0 0
    %2467 = vperm.xlu0 %2466, %v2462
    %v2468 = vpop.permute.xlu0 %2467
    %vm2469 = vcmp.eq.s32.totalorder %v2465, 1
    %vm2470 = vcmp.eq.s32.totalorder %v2468, 1
    %v2471 = vsel %vm2469, %v2455, %v2133
    %v2472 = vsel %vm2470, %v2456, %v2134
    %v2473 = vsel %vm2469, %v2451, %v2135
    %v2474 = vsel %vm2470, %v2452, %v2136
    %v2475 = vxor.u32 %v2401, 2147483648
    %v2476 = vxor.u32 %v2405, 2147483648
    %v2477 = vmul.f32 %v2475, 1.442695
    %v2478 = vpow.pop %v2477
    %v2479 = vmul.f32 %v2476, 1.442695
    %v2480 = vpow.pop %v2479
    %v2481 = vadd.f32 %v2478, 1.0
    %v2482 = vadd.f32 %v2480, 1.0
    %v2483 = vrcp.pop %v2481
    %v2484 = vmul.f32 1.0, %v2483
    %v2485 = vrcp.pop %v2482
    %v2486 = vmul.f32 1.0, %v2485
    %v2487 = vxor.u32 %v2402, 2147483648
    %v2488 = vxor.u32 %v2406, 2147483648
    %v2489 = vmul.f32 %v2487, 1.442695
    %v2490 = vpow.pop %v2489
    %v2491 = vmul.f32 %v2488, 1.442695
    %v2492 = vpow.pop %v2491
    %v2493 = vadd.f32 %v2490, 1.0
    %v2494 = vadd.f32 %v2492, 1.0
    %v2495 = vrcp.pop %v2493
    %v2496 = vmul.f32 1.0, %v2495
    %v2497 = vrcp.pop %v2494
    %v2498 = vmul.f32 1.0, %v2497
    %v2499 = vtanh.pop %v2403
    %v2500 = vtanh.pop %v2407
    %v2501 = vxor.u32 %v2404, 2147483648
    %v2502 = vxor.u32 %v2408, 2147483648
    %v2503 = vmul.f32 %v2501, 1.442695
    %v2504 = vpow.pop %v2503
    %v2505 = vmul.f32 %v2502, 1.442695
    %v2506 = vpow.pop %v2505
    %v2507 = vadd.f32 %v2504, 1.0
    %v2508 = vadd.f32 %v2506, 1.0
    %v2509 = vrcp.pop %v2507
    %v2510 = vmul.f32 1.0, %v2509
    %v2511 = vrcp.pop %v2508
    %v2512 = vmul.f32 1.0, %v2511
    %v2513 = vmul.f32 %v2496, %v2199
    %v2514 = vmul.f32 %v2498, %v2200
    %v2515 = vmul.f32 %v2484, %v2499
    %v2516 = vmul.f32 %v2486, %v2500
    %v2517 = vadd.f32 %v2513, %v2515
    %v2518 = vadd.f32 %v2514, %v2516
    %v2519 = vtanh.pop %v2517
    %v2520 = vtanh.pop %v2518
    %v2521 = vmul.f32 %v2510, %v2519
    %v2522 = vmul.f32 %v2512, %v2520
    %vm2523 = vcmp.lt.s32.totalorder %v2458, %v1535
    %vm2524 = vcmp.lt.s32.totalorder %v2458, %v1536
    %v2525 = vsel %vm2523, 1, 0
    %v2526 = vsel %vm2524, 1, 0
    %2527 = vset.pattern.permute.xlu0 0
    %2528 = vperm.xlu0 %2527, %v2525
    %v2529 = vpop.permute.xlu0 %2528
    %2530 = vset.pattern.permute.xlu0 0
    %2531 = vperm.xlu0 %2530, %v2526
    %v2532 = vpop.permute.xlu0 %2531
    %vm2533 = vcmp.eq.s32.totalorder %v2529, 1
    %vm2534 = vcmp.eq.s32.totalorder %v2532, 1
    %v2535 = vsel %vm2533, %v2521, %v2197
    %v2536 = vsel %vm2534, %v2522, %v2198
    %v2537 = vsel %vm2533, %v2517, %v2199
    %v2538 = vsel %vm2534, %v2518, %v2200
    %s2539 = scalar_lea.vmem [#allocation2], 128
    %v2540 = vld [vmem:[%s2539] sm:$0xff]
    %v2541 = vld [vmem:[%s2539 + $0x8] sm:$0xff]
    %v2542 = vld [vmem:[%s2539 + $0x10] sm:$0xff]
    %v2543 = vld [vmem:[%s2539 + $0x18] sm:$0xff]
    %v2544 = vld [vmem:[%s2539 + $0x20] sm:$0xff]
    %v2545 = vld [vmem:[%s2539 + $0x28] sm:$0xff]
    %v2546 = vld [vmem:[%s2539 + $0x30] sm:$0xff]
    %v2547 = vld [vmem:[%s2539 + $0x38] sm:$0xff]
    %v2548 = vpack.c.bf16 %v2472, %v2471
    %2549 = vmatprep.subr.bf16.mxu0 %v1652
    %2550 = vmatpush1.bf16.msra.mxu0 %v1651
    %2551 = vmatprep.subr.bf16.mxu0 %v1656
    %2552 = vmatpush1.bf16.msra.mxu0 %v1655
    %2553 = vmatprep.subr.bf16.mxu0 %v1660
    %2554 = vmatpush1.bf16.msra.mxu0 %v1659
    %2555 = vmatprep.subr.bf16.mxu0 %v1664
    %2556 = vmatpush1.bf16.msra.mxu0 %v1663
    %2557 = vmatprep.subr.bf16.mxu0 %v1668
    %2558 = vmatpush1.bf16.msra.mxu0 %v1667
    %2559 = vmatprep.subr.bf16.mxu0 %v1672
    %2560 = vmatpush1.bf16.msra.mxu0 %v1671
    %2561 = vmatprep.subr.bf16.mxu0 %v1676
    %2562 = vmatpush1.bf16.msra.mxu0 %v1675
    %2563 = vmatprep.subr.bf16.mxu0 %v1680
    %2564 = vmatpush1.bf16.msra.mxu0 %v1679
    %2565 = vmatprep.subr.bf16.mxu0 0
    %2566 = vmatpush1.bf16.msra.mxu0 0
    %2567 = vmatprep.subr.bf16.mxu0 0
    %2568 = vmatpush1.bf16.msra.mxu0 0
    %2569 = vmatprep.subr.bf16.mxu0 0
    %2570 = vmatpush1.bf16.msra.mxu0 0
    %2571 = vmatprep.subr.bf16.mxu0 0
    %2572 = vmatpush1.bf16.msra.mxu0 0
    %2573 = vmatprep.subr.bf16.mxu0 0
    %2574 = vmatpush1.bf16.msra.mxu0 0
    %2575 = vmatprep.subr.bf16.mxu0 0
    %2576 = vmatpush1.bf16.msra.mxu0 0
    %2577 = vmatprep.subr.bf16.mxu0 0
    %2578 = vmatpush1.bf16.msra.mxu0 0
    %2579 = vmatprep.subr.bf16.mxu0 0
    %2580 = vmatpush1.bf16.msra.mxu0 0
    %2581 = vmatprep.mubr.bf16.mxu0 0
    %2582 = vmatmul.mubr.bf16.gmra.mrb[0].mxu0 %v2548
    %v2583 = vpop.f32.mrb[0].mxu0
    %v2584 = vadd.f32 0.0, %v2583
    %v2585 = vpop.f32.mrb[0].mxu0
    %v2586 = vadd.f32 0.0, %v2585
    %v2587 = vpop.f32.mrb[0].mxu0
    %v2588 = vadd.f32 0.0, %v2587
    %v2589 = vpop.f32.mrb[0].mxu0
    %v2590 = vadd.f32 0.0, %v2589
    %2591 = vdwg.mxu0
    %2592 = vmatprep.subr.bf16.mxu0 %v1654
    %2593 = vmatpush1.bf16.msra.mxu0 %v1653
    %2594 = vmatprep.subr.bf16.mxu0 %v1658
    %2595 = vmatpush1.bf16.msra.mxu0 %v1657
    %2596 = vmatprep.subr.bf16.mxu0 %v1662
    %2597 = vmatpush1.bf16.msra.mxu0 %v1661
    %2598 = vmatprep.subr.bf16.mxu0 %v1666
    %2599 = vmatpush1.bf16.msra.mxu0 %v1665
    %2600 = vmatprep.subr.bf16.mxu0 %v1670
    %2601 = vmatpush1.bf16.msra.mxu0 %v1669
    %2602 = vmatprep.subr.bf16.mxu0 %v1674
    %2603 = vmatpush1.bf16.msra.mxu0 %v1673
    %2604 = vmatprep.subr.bf16.mxu0 %v1678
    %2605 = vmatpush1.bf16.msra.mxu0 %v1677
    %2606 = vmatprep.subr.bf16.mxu0 %v1682
    %2607 = vmatpush1.bf16.msra.mxu0 %v1681
    %2608 = vmatprep.subr.bf16.mxu0 0
    %2609 = vmatpush1.bf16.msra.mxu0 0
    %2610 = vmatprep.subr.bf16.mxu0 0
    %2611 = vmatpush1.bf16.msra.mxu0 0
    %2612 = vmatprep.subr.bf16.mxu0 0
    %2613 = vmatpush1.bf16.msra.mxu0 0
    %2614 = vmatprep.subr.bf16.mxu0 0
    %2615 = vmatpush1.bf16.msra.mxu0 0
    %2616 = vmatprep.subr.bf16.mxu0 0
    %2617 = vmatpush1.bf16.msra.mxu0 0
    %2618 = vmatprep.subr.bf16.mxu0 0
    %2619 = vmatpush1.bf16.msra.mxu0 0
    %2620 = vmatprep.subr.bf16.mxu0 0
    %2621 = vmatpush1.bf16.msra.mxu0 0
    %2622 = vmatprep.subr.bf16.mxu0 0
    %2623 = vmatpush1.bf16.msra.mxu0 0
    %2624 = vmatprep.mubr.bf16.mxu0 0
    %2625 = vmatmul.mubr.bf16.gmra.mrb[0].mxu0 %v2548
    %v2626 = vpop.f32.mrb[0].mxu0
    %v2627 = vadd.f32 0.0, %v2626
    %v2628 = vpop.f32.mrb[0].mxu0
    %v2629 = vadd.f32 0.0, %v2628
    %v2630 = vpop.f32.mrb[0].mxu0
    %v2631 = vadd.f32 0.0, %v2630
    %v2632 = vpop.f32.mrb[0].mxu0
    %v2633 = vadd.f32 0.0, %v2632
    %2634 = vdwg.mxu0
    %v2635 = vadd.f32 %v2540, %v2584
    %v2636 = vadd.f32 %v2541, %v2586
    %v2637 = vadd.f32 %v2542, %v2627
    %v2638 = vadd.f32 %v2543, %v2629
    %v2639 = vadd.f32 %v2544, %v2588
    %v2640 = vadd.f32 %v2545, %v2590
    %v2641 = vadd.f32 %v2546, %v2631
    %v2642 = vadd.f32 %v2547, %v2633
    %s2643 = scalar_lea.vmem [#allocation3], 128
    %v2644 = vld [vmem:[%s2643] sm:$0xff]
    %v2645 = vld [vmem:[%s2643 + $0x8] sm:$0xff]
    %v2646 = vld [vmem:[%s2643 + $0x10] sm:$0xff]
    %v2647 = vld [vmem:[%s2643 + $0x18] sm:$0xff]
    %v2648 = vld [vmem:[%s2643 + $0x20] sm:$0xff]
    %v2649 = vld [vmem:[%s2643 + $0x28] sm:$0xff]
    %v2650 = vld [vmem:[%s2643 + $0x30] sm:$0xff]
    %v2651 = vld [vmem:[%s2643 + $0x38] sm:$0xff]
    %v2652 = vpack.c.bf16 %v2536, %v2535
    %2653 = vmatprep.subr.bf16.mxu0 %v1915
    %2654 = vmatpush1.bf16.msra.mxu0 %v1914
    %2655 = vmatprep.subr.bf16.mxu0 %v1919
    %2656 = vmatpush1.bf16.msra.mxu0 %v1918
    %2657 = vmatprep.subr.bf16.mxu0 %v1923
    %2658 = vmatpush1.bf16.msra.mxu0 %v1922
    %2659 = vmatprep.subr.bf16.mxu0 %v1927
    %2660 = vmatpush1.bf16.msra.mxu0 %v1926
    %2661 = vmatprep.subr.bf16.mxu0 %v1931
    %2662 = vmatpush1.bf16.msra.mxu0 %v1930
    %2663 = vmatprep.subr.bf16.mxu0 %v1935
    %2664 = vmatpush1.bf16.msra.mxu0 %v1934
    %2665 = vmatprep.subr.bf16.mxu0 %v1939
    %2666 = vmatpush1.bf16.msra.mxu0 %v1938
    %2667 = vmatprep.subr.bf16.mxu0 %v1943
    %2668 = vmatpush1.bf16.msra.mxu0 %v1942
    %2669 = vmatprep.subr.bf16.mxu0 0
    %2670 = vmatpush1.bf16.msra.mxu0 0
    %2671 = vmatprep.subr.bf16.mxu0 0
    %2672 = vmatpush1.bf16.msra.mxu0 0
    %2673 = vmatprep.subr.bf16.mxu0 0
    %2674 = vmatpush1.bf16.msra.mxu0 0
    %2675 = vmatprep.subr.bf16.mxu0 0
    %2676 = vmatpush1.bf16.msra.mxu0 0
    %2677 = vmatprep.subr.bf16.mxu0 0
    %2678 = vmatpush1.bf16.msra.mxu0 0
    %2679 = vmatprep.subr.bf16.mxu0 0
    %2680 = vmatpush1.bf16.msra.mxu0 0
    %2681 = vmatprep.subr.bf16.mxu0 0
    %2682 = vmatpush1.bf16.msra.mxu0 0
    %2683 = vmatprep.subr.bf16.mxu0 0
    %2684 = vmatpush1.bf16.msra.mxu0 0
    %2685 = vmatprep.mubr.bf16.mxu0 0
    %2686 = vmatmul.mubr.bf16.gmra.mrb[0].mxu0 %v2652
    %v2687 = vpop.f32.mrb[0].mxu0
    %v2688 = vadd.f32 0.0, %v2687
    %v2689 = vpop.f32.mrb[0].mxu0
    %v2690 = vadd.f32 0.0, %v2689
    %v2691 = vpop.f32.mrb[0].mxu0
    %v2692 = vadd.f32 0.0, %v2691
    %v2693 = vpop.f32.mrb[0].mxu0
    %v2694 = vadd.f32 0.0, %v2693
    %2695 = vdwg.mxu0
    %2696 = vmatprep.subr.bf16.mxu0 %v1917
    %2697 = vmatpush1.bf16.msra.mxu0 %v1916
    %2698 = vmatprep.subr.bf16.mxu0 %v1921
    %2699 = vmatpush1.bf16.msra.mxu0 %v1920
    %2700 = vmatprep.subr.bf16.mxu0 %v1925
    %2701 = vmatpush1.bf16.msra.mxu0 %v1924
    %2702 = vmatprep.subr.bf16.mxu0 %v1929
    %2703 = vmatpush1.bf16.msra.mxu0 %v1928
    %2704 = vmatprep.subr.bf16.mxu0 %v1933
    %2705 = vmatpush1.bf16.msra.mxu0 %v1932
    %2706 = vmatprep.subr.bf16.mxu0 %v1937
    %2707 = vmatpush1.bf16.msra.mxu0 %v1936
    %2708 = vmatprep.subr.bf16.mxu0 %v1941
    %2709 = vmatpush1.bf16.msra.mxu0 %v1940
    %2710 = vmatprep.subr.bf16.mxu0 %v1945
    %2711 = vmatpush1.bf16.msra.mxu0 %v1944
    %2712 = vmatprep.subr.bf16.mxu0 0
    %2713 = vmatpush1.bf16.msra.mxu0 0
    %2714 = vmatprep.subr.bf16.mxu0 0
    %2715 = vmatpush1.bf16.msra.mxu0 0
    %2716 = vmatprep.subr.bf16.mxu0 0
    %2717 = vmatpush1.bf16.msra.mxu0 0
    %2718 = vmatprep.subr.bf16.mxu0 0
    %2719 = vmatpush1.bf16.msra.mxu0 0
    %2720 = vmatprep.subr.bf16.mxu0 0
    %2721 = vmatpush1.bf16.msra.mxu0 0
    %2722 = vmatprep.subr.bf16.mxu0 0
    %2723 = vmatpush1.bf16.msra.mxu0 0
    %2724 = vmatprep.subr.bf16.mxu0 0
    %2725 = vmatpush1.bf16.msra.mxu0 0
    %2726 = vmatprep.subr.bf16.mxu0 0
    %2727 = vmatpush1.bf16.msra.mxu0 0
    %2728 = vmatprep.mubr.bf16.mxu0 0
    %2729 = vmatmul.mubr.bf16.gmra.mrb[0].mxu0 %v2652
    %v2730 = vpop.f32.mrb[0].mxu0
    %v2731 = vadd.f32 0.0, %v2730
    %v2732 = vpop.f32.mrb[0].mxu0
    %v2733 = vadd.f32 0.0, %v2732
    %v2734 = vpop.f32.mrb[0].mxu0
    %v2735 = vadd.f32 0.0, %v2734
    %v2736 = vpop.f32.mrb[0].mxu0
    %v2737 = vadd.f32 0.0, %v2736
    %2738 = vdwg.mxu0
    %v2739 = vadd.f32 %v2644, %v2688
    %v2740 = vadd.f32 %v2645, %v2690
    %v2741 = vadd.f32 %v2646, %v2731
    %v2742 = vadd.f32 %v2647, %v2733
    %v2743 = vadd.f32 %v2648, %v2692
    %v2744 = vadd.f32 %v2649, %v2694
    %v2745 = vadd.f32 %v2650, %v2735
    %v2746 = vadd.f32 %v2651, %v2737
    %v2747 = vxor.u32 %v2635, 2147483648
    %v2748 = vxor.u32 %v2639, 2147483648
    %v2749 = vmul.f32 %v2747, 1.442695
    %v2750 = vpow.pop %v2749
    %v2751 = vmul.f32 %v2748, 1.442695
    %v2752 = vpow.pop %v2751
    %v2753 = vadd.f32 %v2750, 1.0
    %v2754 = vadd.f32 %v2752, 1.0
    %v2755 = vrcp.pop %v2753
    %v2756 = vmul.f32 1.0, %v2755
    %v2757 = vrcp.pop %v2754
    %v2758 = vmul.f32 1.0, %v2757
    %v2759 = vxor.u32 %v2636, 2147483648
    %v2760 = vxor.u32 %v2640, 2147483648
    %v2761 = vmul.f32 %v2759, 1.442695
    %v2762 = vpow.pop %v2761
    %v2763 = vmul.f32 %v2760, 1.442695
    %v2764 = vpow.pop %v2763
    %v2765 = vadd.f32 %v2762, 1.0
    %v2766 = vadd.f32 %v2764, 1.0
    %v2767 = vrcp.pop %v2765
    %v2768 = vmul.f32 1.0, %v2767
    %v2769 = vrcp.pop %v2766
    %v2770 = vmul.f32 1.0, %v2769
    %v2771 = vtanh.pop %v2637
    %v2772 = vtanh.pop %v2641
    %v2773 = vxor.u32 %v2638, 2147483648
    %v2774 = vxor.u32 %v2642, 2147483648
    %v2775 = vmul.f32 %v2773, 1.442695
    %v2776 = vpow.pop %v2775
    %v2777 = vmul.f32 %v2774, 1.442695
    %v2778 = vpow.pop %v2777
    %v2779 = vadd.f32 %v2776, 1.0
    %v2780 = vadd.f32 %v2778, 1.0
    %v2781 = vrcp.pop %v2779
    %v2782 = vmul.f32 1.0, %v2781
    %v2783 = vrcp.pop %v2780
    %v2784 = vmul.f32 1.0, %v2783
    %v2785 = vmul.f32 %v2768, %v2473
    %v2786 = vmul.f32 %v2770, %v2474
    %v2787 = vmul.f32 %v2756, %v2771
    %v2788 = vmul.f32 %v2758, %v2772
    %v2789 = vadd.f32 %v2785, %v2787
    %v2790 = vadd.f32 %v2786, %v2788
    %v2791 = vtanh.pop %v2789
    %v2792 = vtanh.pop %v2790
    %v2793 = vmul.f32 %v2782, %v2791
    %v2794 = vmul.f32 %v2784, %v2792
    %s2795 = sadd.s32 %s1537, 2
    %v2796 = vstv %s2795
    %vm2797 = vcmp.lt.s32.totalorder %v2796, %v1533
    %vm2798 = vcmp.lt.s32.totalorder %v2796, %v1534
    %v2799 = vsel %vm2797, 1, 0
    %v2800 = vsel %vm2798, 1, 0
    %2801 = vset.pattern.permute.xlu0 0
    %2802 = vperm.xlu0 %2801, %v2799
    %v2803 = vpop.permute.xlu0 %2802
    %2804 = vset.pattern.permute.xlu0 0
    %2805 = vperm.xlu0 %2804, %v2800
    %v2806 = vpop.permute.xlu0 %2805
    %vm2807 = vcmp.eq.s32.totalorder %v2803, 1
    %vm2808 = vcmp.eq.s32.totalorder %v2806, 1
    %v2809 = vsel %vm2807, %v2793, %v2471
    %v2810 = vsel %vm2808, %v2794, %v2472
    %v2811 = vsel %vm2807, %v2789, %v2473
    %v2812 = vsel %vm2808, %v2790, %v2474
    %v2813 = vxor.u32 %v2739, 2147483648
    %v2814 = vxor.u32 %v2743, 2147483648
    %v2815 = vmul.f32 %v2813, 1.442695
    %v2816 = vpow.pop %v2815
    %v2817 = vmul.f32 %v2814, 1.442695
    %v2818 = vpow.pop %v2817
    %v2819 = vadd.f32 %v2816, 1.0
    %v2820 = vadd.f32 %v2818, 1.0
    %v2821 = vrcp.pop %v2819
    %v2822 = vmul.f32 1.0, %v2821
    %v2823 = vrcp.pop %v2820
    %v2824 = vmul.f32 1.0, %v2823
    %v2825 = vxor.u32 %v2740, 2147483648
    %v2826 = vxor.u32 %v2744, 2147483648
    %v2827 = vmul.f32 %v2825, 1.442695
    %v2828 = vpow.pop %v2827
    %v2829 = vmul.f32 %v2826, 1.442695
    %v2830 = vpow.pop %v2829
    %v2831 = vadd.f32 %v2828, 1.0
    %v2832 = vadd.f32 %v2830, 1.0
    %v2833 = vrcp.pop %v2831
    %v2834 = vmul.f32 1.0, %v2833
    %v2835 = vrcp.pop %v2832
    %v2836 = vmul.f32 1.0, %v2835
    %v2837 = vtanh.pop %v2741
    %v2838 = vtanh.pop %v2745
    %v2839 = vxor.u32 %v2742, 2147483648
    %v2840 = vxor.u32 %v2746, 2147483648
    %v2841 = vmul.f32 %v2839, 1.442695
    %v2842 = vpow.pop %v2841
    %v2843 = vmul.f32 %v2840, 1.442695
    %v2844 = vpow.pop %v2843
    %v2845 = vadd.f32 %v2842, 1.0
    %v2846 = vadd.f32 %v2844, 1.0
    %v2847 = vrcp.pop %v2845
    %v2848 = vmul.f32 1.0, %v2847
    %v2849 = vrcp.pop %v2846
    %v2850 = vmul.f32 1.0, %v2849
    %v2851 = vmul.f32 %v2834, %v2537
    %v2852 = vmul.f32 %v2836, %v2538
    %v2853 = vmul.f32 %v2822, %v2837
    %v2854 = vmul.f32 %v2824, %v2838
    %v2855 = vadd.f32 %v2851, %v2853
    %v2856 = vadd.f32 %v2852, %v2854
    %v2857 = vtanh.pop %v2855
    %v2858 = vtanh.pop %v2856
    %v2859 = vmul.f32 %v2848, %v2857
    %v2860 = vmul.f32 %v2850, %v2858
    %vm2861 = vcmp.lt.s32.totalorder %v2796, %v1535
    %vm2862 = vcmp.lt.s32.totalorder %v2796, %v1536
    %v2863 = vsel %vm2861, 1, 0
    %v2864 = vsel %vm2862, 1, 0
    %2865 = vset.pattern.permute.xlu0 0
    %2866 = vperm.xlu0 %2865, %v2863
    %v2867 = vpop.permute.xlu0 %2866
    %2868 = vset.pattern.permute.xlu0 0
    %2869 = vperm.xlu0 %2868, %v2864
    %v2870 = vpop.permute.xlu0 %2869
    %vm2871 = vcmp.eq.s32.totalorder %v2867, 1
    %vm2872 = vcmp.eq.s32.totalorder %v2870, 1
    %v2873 = vsel %vm2871, %v2859, %v2535
    %v2874 = vsel %vm2872, %v2860, %v2536
    %v2875 = vsel %vm2871, %v2855, %v2537
    %v2876 = vsel %vm2872, %v2856, %v2538
    %s2877 = scalar_lea.vmem [#allocation2], 192
    %v2878 = vld [vmem:[%s2877] sm:$0xff]
    %v2879 = vld [vmem:[%s2877 + $0x8] sm:$0xff]
    %v2880 = vld [vmem:[%s2877 + $0x10] sm:$0xff]
    %v2881 = vld [vmem:[%s2877 + $0x18] sm:$0xff]
    %v2882 = vld [vmem:[%s2877 + $0x20] sm:$0xff]
    %v2883 = vld [vmem:[%s2877 + $0x28] sm:$0xff]
    %v2884 = vld [vmem:[%s2877 + $0x30] sm:$0xff]
    %v2885 = vld [vmem:[%s2877 + $0x38] sm:$0xff]
    %v2886 = vpack.c.bf16 %v2810, %v2809
    %2887 = vmatprep.subr.bf16.mxu0 %v1652
    %2888 = vmatpush1.bf16.msra.mxu0 %v1651
    %2889 = vmatprep.subr.bf16.mxu0 %v1656
    %2890 = vmatpush1.bf16.msra.mxu0 %v1655
    %2891 = vmatprep.subr.bf16.mxu0 %v1660
    %2892 = vmatpush1.bf16.msra.mxu0 %v1659
    %2893 = vmatprep.subr.bf16.mxu0 %v1664
    %2894 = vmatpush1.bf16.msra.mxu0 %v1663
    %2895 = vmatprep.subr.bf16.mxu0 %v1668
    %2896 = vmatpush1.bf16.msra.mxu0 %v1667
    %2897 = vmatprep.subr.bf16.mxu0 %v1672
    %2898 = vmatpush1.bf16.msra.mxu0 %v1671
    %2899 = vmatprep.subr.bf16.mxu0 %v1676
    %2900 = vmatpush1.bf16.msra.mxu0 %v1675
    %2901 = vmatprep.subr.bf16.mxu0 %v1680
    %2902 = vmatpush1.bf16.msra.mxu0 %v1679
    %2903 = vmatprep.subr.bf16.mxu0 0
    %2904 = vmatpush1.bf16.msra.mxu0 0
    %2905 = vmatprep.subr.bf16.mxu0 0
    %2906 = vmatpush1.bf16.msra.mxu0 0
    %2907 = vmatprep.subr.bf16.mxu0 0
    %2908 = vmatpush1.bf16.msra.mxu0 0
    %2909 = vmatprep.subr.bf16.mxu0 0
    %2910 = vmatpush1.bf16.msra.mxu0 0
    %2911 = vmatprep.subr.bf16.mxu0 0
    %2912 = vmatpush1.bf16.msra.mxu0 0
    %2913 = vmatprep.subr.bf16.mxu0 0
    %2914 = vmatpush1.bf16.msra.mxu0 0
    %2915 = vmatprep.subr.bf16.mxu0 0
    %2916 = vmatpush1.bf16.msra.mxu0 0
    %2917 = vmatprep.subr.bf16.mxu0 0
    %2918 = vmatpush1.bf16.msra.mxu0 0
    %2919 = vmatprep.mubr.bf16.mxu0 0
    %2920 = vmatmul.mubr.bf16.gmra.mrb[0].mxu0 %v2886
    %v2921 = vpop.f32.mrb[0].mxu0
    %v2922 = vadd.f32 0.0, %v2921
    %v2923 = vpop.f32.mrb[0].mxu0
    %v2924 = vadd.f32 0.0, %v2923
    %v2925 = vpop.f32.mrb[0].mxu0
    %v2926 = vadd.f32 0.0, %v2925
    %v2927 = vpop.f32.mrb[0].mxu0
    %v2928 = vadd.f32 0.0, %v2927
    %2929 = vdwg.mxu0
    %2930 = vmatprep.subr.bf16.mxu0 %v1654
    %2931 = vmatpush1.bf16.msra.mxu0 %v1653
    %2932 = vmatprep.subr.bf16.mxu0 %v1658
    %2933 = vmatpush1.bf16.msra.mxu0 %v1657
    %2934 = vmatprep.subr.bf16.mxu0 %v1662
    %2935 = vmatpush1.bf16.msra.mxu0 %v1661
    %2936 = vmatprep.subr.bf16.mxu0 %v1666
    %2937 = vmatpush1.bf16.msra.mxu0 %v1665
    %2938 = vmatprep.subr.bf16.mxu0 %v1670
    %2939 = vmatpush1.bf16.msra.mxu0 %v1669
    %2940 = vmatprep.subr.bf16.mxu0 %v1674
    %2941 = vmatpush1.bf16.msra.mxu0 %v1673
    %2942 = vmatprep.subr.bf16.mxu0 %v1678
    %2943 = vmatpush1.bf16.msra.mxu0 %v1677
    %2944 = vmatprep.subr.bf16.mxu0 %v1682
    %2945 = vmatpush1.bf16.msra.mxu0 %v1681
    %2946 = vmatprep.subr.bf16.mxu0 0
    %2947 = vmatpush1.bf16.msra.mxu0 0
    %2948 = vmatprep.subr.bf16.mxu0 0
    %2949 = vmatpush1.bf16.msra.mxu0 0
    %2950 = vmatprep.subr.bf16.mxu0 0
    %2951 = vmatpush1.bf16.msra.mxu0 0
    %2952 = vmatprep.subr.bf16.mxu0 0
    %2953 = vmatpush1.bf16.msra.mxu0 0
    %2954 = vmatprep.subr.bf16.mxu0 0
    %2955 = vmatpush1.bf16.msra.mxu0 0
    %2956 = vmatprep.subr.bf16.mxu0 0
    %2957 = vmatpush1.bf16.msra.mxu0 0
    %2958 = vmatprep.subr.bf16.mxu0 0
    %2959 = vmatpush1.bf16.msra.mxu0 0
    %2960 = vmatprep.subr.bf16.mxu0 0
    %2961 = vmatpush1.bf16.msra.mxu0 0
    %2962 = vmatprep.mubr.bf16.mxu0 0
    %2963 = vmatmul.mubr.bf16.gmra.mrb[0].mxu0 %v2886
    %v2964 = vpop.f32.mrb[0].mxu0
    %v2965 = vadd.f32 0.0, %v2964
    %v2966 = vpop.f32.mrb[0].mxu0
    %v2967 = vadd.f32 0.0, %v2966
    %v2968 = vpop.f32.mrb[0].mxu0
    %v2969 = vadd.f32 0.0, %v2968
    %v2970 = vpop.f32.mrb[0].mxu0
    %v2971 = vadd.f32 0.0, %v2970
    %2972 = vdwg.mxu0
    %v2973 = vadd.f32 %v2878, %v2922
    %v2974 = vadd.f32 %v2879, %v2924
    %v2975 = vadd.f32 %v2880, %v2965
    %v2976 = vadd.f32 %v2881, %v2967
    %v2977 = vadd.f32 %v2882, %v2926
    %v2978 = vadd.f32 %v2883, %v2928
    %v2979 = vadd.f32 %v2884, %v2969
    %v2980 = vadd.f32 %v2885, %v2971
    %s2981 = scalar_lea.vmem [#allocation3], 192
    %v2982 = vld [vmem:[%s2981] sm:$0xff]
    %v2983 = vld [vmem:[%s2981 + $0x8] sm:$0xff]
    %v2984 = vld [vmem:[%s2981 + $0x10] sm:$0xff]
    %v2985 = vld [vmem:[%s2981 + $0x18] sm:$0xff]
    %v2986 = vld [vmem:[%s2981 + $0x20] sm:$0xff]
    %v2987 = vld [vmem:[%s2981 + $0x28] sm:$0xff]
    %v2988 = vld [vmem:[%s2981 + $0x30] sm:$0xff]
    %v2989 = vld [vmem:[%s2981 + $0x38] sm:$0xff]
    %v2990 = vpack.c.bf16 %v2874, %v2873
    %2991 = vmatprep.subr.bf16.mxu0 %v1915
    %2992 = vmatpush1.bf16.msra.mxu0 %v1914
    %2993 = vmatprep.subr.bf16.mxu0 %v1919
    %2994 = vmatpush1.bf16.msra.mxu0 %v1918
    %2995 = vmatprep.subr.bf16.mxu0 %v1923
    %2996 = vmatpush1.bf16.msra.mxu0 %v1922
    %2997 = vmatprep.subr.bf16.mxu0 %v1927
    %2998 = vmatpush1.bf16.msra.mxu0 %v1926
    %2999 = vmatprep.subr.bf16.mxu0 %v1931
    %3000 = vmatpush1.bf16.msra.mxu0 %v1930
    %3001 = vmatprep.subr.bf16.mxu0 %v1935
    %3002 = vmatpush1.bf16.msra.mxu0 %v1934
    %3003 = vmatprep.subr.bf16.mxu0 %v1939
    %3004 = vmatpush1.bf16.msra.mxu0 %v1938
    %3005 = vmatprep.subr.bf16.mxu0 %v1943
    %3006 = vmatpush1.bf16.msra.mxu0 %v1942
    %3007 = vmatprep.subr.bf16.mxu0 0
    %3008 = vmatpush1.bf16.msra.mxu0 0
    %3009 = vmatprep.subr.bf16.mxu0 0
    %3010 = vmatpush1.bf16.msra.mxu0 0
    %3011 = vmatprep.subr.bf16.mxu0 0
    %3012 = vmatpush1.bf16.msra.mxu0 0
    %3013 = vmatprep.subr.bf16.mxu0 0
    %3014 = vmatpush1.bf16.msra.mxu0 0
    %3015 = vmatprep.subr.bf16.mxu0 0
    %3016 = vmatpush1.bf16.msra.mxu0 0
    %3017 = vmatprep.subr.bf16.mxu0 0
    %3018 = vmatpush1.bf16.msra.mxu0 0
    %3019 = vmatprep.subr.bf16.mxu0 0
    %3020 = vmatpush1.bf16.msra.mxu0 0
    %3021 = vmatprep.subr.bf16.mxu0 0
    %3022 = vmatpush1.bf16.msra.mxu0 0
    %3023 = vmatprep.mubr.bf16.mxu0 0
    %3024 = vmatmul.mubr.bf16.gmra.mrb[0].mxu0 %v2990
    %v3025 = vpop.f32.mrb[0].mxu0
    %v3026 = vadd.f32 0.0, %v3025
    %v3027 = vpop.f32.mrb[0].mxu0
    %v3028 = vadd.f32 0.0, %v3027
    %v3029 = vpop.f32.mrb[0].mxu0
    %v3030 = vadd.f32 0.0, %v3029
    %v3031 = vpop.f32.mrb[0].mxu0
    %v3032 = vadd.f32 0.0, %v3031
    %3033 = vdwg.mxu0
    %3034 = vmatprep.subr.bf16.mxu0 %v1917
    %3035 = vmatpush1.bf16.msra.mxu0 %v1916
    %3036 = vmatprep.subr.bf16.mxu0 %v1921
    %3037 = vmatpush1.bf16.msra.mxu0 %v1920
    %3038 = vmatprep.subr.bf16.mxu0 %v1925
    %3039 = vmatpush1.bf16.msra.mxu0 %v1924
    %3040 = vmatprep.subr.bf16.mxu0 %v1929
    %3041 = vmatpush1.bf16.msra.mxu0 %v1928
    %3042 = vmatprep.subr.bf16.mxu0 %v1933
    %3043 = vmatpush1.bf16.msra.mxu0 %v1932
    %3044 = vmatprep.subr.bf16.mxu0 %v1937
    %3045 = vmatpush1.bf16.msra.mxu0 %v1936
    %3046 = vmatprep.subr.bf16.mxu0 %v1941
    %3047 = vmatpush1.bf16.msra.mxu0 %v1940
    %3048 = vmatprep.subr.bf16.mxu0 %v1945
    %3049 = vmatpush1.bf16.msra.mxu0 %v1944
    %3050 = vmatprep.subr.bf16.mxu0 0
    %3051 = vmatpush1.bf16.msra.mxu0 0
    %3052 = vmatprep.subr.bf16.mxu0 0
    %3053 = vmatpush1.bf16.msra.mxu0 0
    %3054 = vmatprep.subr.bf16.mxu0 0
    %3055 = vmatpush1.bf16.msra.mxu0 0
    %3056 = vmatprep.subr.bf16.mxu0 0
    %3057 = vmatpush1.bf16.msra.mxu0 0
    %3058 = vmatprep.subr.bf16.mxu0 0
    %3059 = vmatpush1.bf16.msra.mxu0 0
    %3060 = vmatprep.subr.bf16.mxu0 0
    %3061 = vmatpush1.bf16.msra.mxu0 0
    %3062 = vmatprep.subr.bf16.mxu0 0
    %3063 = vmatpush1.bf16.msra.mxu0 0
    %3064 = vmatprep.subr.bf16.mxu0 0
    %3065 = vmatpush1.bf16.msra.mxu0 0
    %3066 = vmatprep.mubr.bf16.mxu0 0
    %3067 = vmatmul.mubr.bf16.gmra.mrb[0].mxu0 %v2990
    %v3068 = vpop.f32.mrb[0].mxu0
    %v3069 = vadd.f32 0.0, %v3068
    %v3070 = vpop.f32.mrb[0].mxu0
    %v3071 = vadd.f32 0.0, %v3070
    %v3072 = vpop.f32.mrb[0].mxu0
    %v3073 = vadd.f32 0.0, %v3072
    %v3074 = vpop.f32.mrb[0].mxu0
    %v3075 = vadd.f32 0.0, %v3074
    %3076 = vdwg.mxu0
    %v3077 = vadd.f32 %v2982, %v3026
    %v3078 = vadd.f32 %v2983, %v3028
    %v3079 = vadd.f32 %v2984, %v3069
    %v3080 = vadd.f32 %v2985, %v3071
    %v3081 = vadd.f32 %v2986, %v3030
    %v3082 = vadd.f32 %v2987, %v3032
    %v3083 = vadd.f32 %v2988, %v3073
    %v3084 = vadd.f32 %v2989, %v3075
    %v3085 = vxor.u32 %v2973, 2147483648
    %v3086 = vxor.u32 %v2977, 2147483648
    %v3087 = vmul.f32 %v3085, 1.442695
    %v3088 = vpow.pop %v3087
    %v3089 = vmul.f32 %v3086, 1.442695
    %v3090 = vpow.pop %v3089
    %v3091 = vadd.f32 %v3088, 1.0
    %v3092 = vadd.f32 %v3090, 1.0
    %v3093 = vrcp.pop %v3091
    %v3094 = vmul.f32 1.0, %v3093
    %v3095 = vrcp.pop %v3092
    %v3096 = vmul.f32 1.0, %v3095
    %v3097 = vxor.u32 %v2974, 2147483648
    %v3098 = vxor.u32 %v2978, 2147483648
    %v3099 = vmul.f32 %v3097, 1.442695
    %v3100 = vpow.pop %v3099
    %v3101 = vmul.f32 %v3098, 1.442695
    %v3102 = vpow.pop %v3101
    %v3103 = vadd.f32 %v3100, 1.0
    %v3104 = vadd.f32 %v3102, 1.0
    %v3105 = vrcp.pop %v3103
    %v3106 = vmul.f32 1.0, %v3105
    %v3107 = vrcp.pop %v3104
    %v3108 = vmul.f32 1.0, %v3107
    %v3109 = vtanh.pop %v2975
    %v3110 = vtanh.pop %v2979
    %v3111 = vxor.u32 %v2976, 2147483648
    %v3112 = vxor.u32 %v2980, 2147483648
    %v3113 = vmul.f32 %v3111, 1.442695
    %v3114 = vpow.pop %v3113
    %v3115 = vmul.f32 %v3112, 1.442695
    %v3116 = vpow.pop %v3115
    %v3117 = vadd.f32 %v3114, 1.0
    %v3118 = vadd.f32 %v3116, 1.0
    %v3119 = vrcp.pop %v3117
    %v3120 = vmul.f32 1.0, %v3119
    %v3121 = vrcp.pop %v3118
    %v3122 = vmul.f32 1.0, %v3121
    %v3123 = vmul.f32 %v3106, %v2811
    %v3124 = vmul.f32 %v3108, %v2812
    %v3125 = vmul.f32 %v3094, %v3109
    %v3126 = vmul.f32 %v3096, %v3110
    %v3127 = vadd.f32 %v3123, %v3125
    %v3128 = vadd.f32 %v3124, %v3126
    %v3129 = vtanh.pop %v3127
    %v3130 = vtanh.pop %v3128
    %v3131 = vmul.f32 %v3120, %v3129
    %v3132 = vmul.f32 %v3122, %v3130
    %s3133 = sadd.s32 %s1537, 3
    %v3134 = vstv %s3133
    %vm3135 = vcmp.lt.s32.totalorder %v3134, %v1533
    %vm3136 = vcmp.lt.s32.totalorder %v3134, %v1534
    %v3137 = vsel %vm3135, 1, 0
    %v3138 = vsel %vm3136, 1, 0
    %3139 = vset.pattern.permute.xlu0 0
    %3140 = vperm.xlu0 %3139, %v3137
    %v3141 = vpop.permute.xlu0 %3140
    %3142 = vset.pattern.permute.xlu0 0
    %3143 = vperm.xlu0 %3142, %v3138
    %v3144 = vpop.permute.xlu0 %3143
    %vm3145 = vcmp.eq.s32.totalorder %v3141, 1
    %vm3146 = vcmp.eq.s32.totalorder %v3144, 1
    %v3147 = vsel %vm3145, %v3131, %v2809
    %v3148 = vsel %vm3146, %v3132, %v2810
    %v3149 = vsel %vm3145, %v3127, %v2811
    %v3150 = vsel %vm3146, %v3128, %v2812
    %v3151 = vxor.u32 %v3077, 2147483648
    %v3152 = vxor.u32 %v3081, 2147483648
    %v3153 = vmul.f32 %v3151, 1.442695
    %v3154 = vpow.pop %v3153
    %v3155 = vmul.f32 %v3152, 1.442695
    %v3156 = vpow.pop %v3155
    %v3157 = vadd.f32 %v3154, 1.0
    %v3158 = vadd.f32 %v3156, 1.0
    %v3159 = vrcp.pop %v3157
    %v3160 = vmul.f32 1.0, %v3159
    %v3161 = vrcp.pop %v3158
    %v3162 = vmul.f32 1.0, %v3161
    %v3163 = vxor.u32 %v3078, 2147483648
    %v3164 = vxor.u32 %v3082, 2147483648
    %v3165 = vmul.f32 %v3163, 1.442695
    %v3166 = vpow.pop %v3165
    %v3167 = vmul.f32 %v3164, 1.442695
    %v3168 = vpow.pop %v3167
    %v3169 = vadd.f32 %v3166, 1.0
    %v3170 = vadd.f32 %v3168, 1.0
    %v3171 = vrcp.pop %v3169
    %v3172 = vmul.f32 1.0, %v3171
    %v3173 = vrcp.pop %v3170
    %v3174 = vmul.f32 1.0, %v3173
    %v3175 = vtanh.pop %v3079
    %v3176 = vtanh.pop %v3083
    %v3177 = vxor.u32 %v3080, 2147483648
    %v3178 = vxor.u32 %v3084, 2147483648
    %v3179 = vmul.f32 %v3177, 1.442695
    %v3180 = vpow.pop %v3179
    %v3181 = vmul.f32 %v3178, 1.442695
    %v3182 = vpow.pop %v3181
    %v3183 = vadd.f32 %v3180, 1.0
    %v3184 = vadd.f32 %v3182, 1.0
    %v3185 = vrcp.pop %v3183
    %v3186 = vmul.f32 1.0, %v3185
    %v3187 = vrcp.pop %v3184
    %v3188 = vmul.f32 1.0, %v3187
    %v3189 = vmul.f32 %v3172, %v2875
    %v3190 = vmul.f32 %v3174, %v2876
    %v3191 = vmul.f32 %v3160, %v3175
    %v3192 = vmul.f32 %v3162, %v3176
    %v3193 = vadd.f32 %v3189, %v3191
    %v3194 = vadd.f32 %v3190, %v3192
    %v3195 = vtanh.pop %v3193
    %v3196 = vtanh.pop %v3194
    %v3197 = vmul.f32 %v3186, %v3195
    %v3198 = vmul.f32 %v3188, %v3196
    %vm3199 = vcmp.lt.s32.totalorder %v3134, %v1535
    %vm3200 = vcmp.lt.s32.totalorder %v3134, %v1536
    %v3201 = vsel %vm3199, 1, 0
    %v3202 = vsel %vm3200, 1, 0
    %3203 = vset.pattern.permute.xlu0 0
    %3204 = vperm.xlu0 %3203, %v3201
    %v3205 = vpop.permute.xlu0 %3204
    %3206 = vset.pattern.permute.xlu0 0
    %3207 = vperm.xlu0 %3206, %v3202
    %v3208 = vpop.permute.xlu0 %3207
    %vm3209 = vcmp.eq.s32.totalorder %v3205, 1
    %vm3210 = vcmp.eq.s32.totalorder %v3208, 1
    %v3211 = vsel %vm3209, %v3197, %v2873
    %v3212 = vsel %vm3210, %v3198, %v2874
    %v3213 = vsel %vm3209, %v3193, %v2875
    %v3214 = vsel %vm3210, %v3194, %v2876
    %s3215 = scalar_lea.vmem [#allocation2], 256
    %v3216 = vld [vmem:[%s3215] sm:$0xff]
    %v3217 = vld [vmem:[%s3215 + $0x8] sm:$0xff]
    %v3218 = vld [vmem:[%s3215 + $0x10] sm:$0xff]
    %v3219 = vld [vmem:[%s3215 + $0x18] sm:$0xff]
    %v3220 = vld [vmem:[%s3215 + $0x20] sm:$0xff]
    %v3221 = vld [vmem:[%s3215 + $0x28] sm:$0xff]
    %v3222 = vld [vmem:[%s3215 + $0x30] sm:$0xff]
    %v3223 = vld [vmem:[%s3215 + $0x38] sm:$0xff]
    %v3224 = vpack.c.bf16 %v3148, %v3147
    %3225 = vmatprep.subr.bf16.mxu0 %v1652
    %3226 = vmatpush1.bf16.msra.mxu0 %v1651
    %3227 = vmatprep.subr.bf16.mxu0 %v1656
    %3228 = vmatpush1.bf16.msra.mxu0 %v1655
    %3229 = vmatprep.subr.bf16.mxu0 %v1660
    %3230 = vmatpush1.bf16.msra.mxu0 %v1659
    %3231 = vmatprep.subr.bf16.mxu0 %v1664
    %3232 = vmatpush1.bf16.msra.mxu0 %v1663
    %3233 = vmatprep.subr.bf16.mxu0 %v1668
    %3234 = vmatpush1.bf16.msra.mxu0 %v1667
    %3235 = vmatprep.subr.bf16.mxu0 %v1672
    %3236 = vmatpush1.bf16.msra.mxu0 %v1671
    %3237 = vmatprep.subr.bf16.mxu0 %v1676
    %3238 = vmatpush1.bf16.msra.mxu0 %v1675
    %3239 = vmatprep.subr.bf16.mxu0 %v1680
    %3240 = vmatpush1.bf16.msra.mxu0 %v1679
    %3241 = vmatprep.subr.bf16.mxu0 0
    %3242 = vmatpush1.bf16.msra.mxu0 0
    %3243 = vmatprep.subr.bf16.mxu0 0
    %3244 = vmatpush1.bf16.msra.mxu0 0
    %3245 = vmatprep.subr.bf16.mxu0 0
    %3246 = vmatpush1.bf16.msra.mxu0 0
    %3247 = vmatprep.subr.bf16.mxu0 0
    %3248 = vmatpush1.bf16.msra.mxu0 0
    %3249 = vmatprep.subr.bf16.mxu0 0
    %3250 = vmatpush1.bf16.msra.mxu0 0
    %3251 = vmatprep.subr.bf16.mxu0 0
    %3252 = vmatpush1.bf16.msra.mxu0 0
    %3253 = vmatprep.subr.bf16.mxu0 0
    %3254 = vmatpush1.bf16.msra.mxu0 0
    %3255 = vmatprep.subr.bf16.mxu0 0
    %3256 = vmatpush1.bf16.msra.mxu0 0
    %3257 = vmatprep.mubr.bf16.mxu0 0
    %3258 = vmatmul.mubr.bf16.gmra.mrb[0].mxu0 %v3224
    %v3259 = vpop.f32.mrb[0].mxu0
    %v3260 = vadd.f32 0.0, %v3259
    %v3261 = vpop.f32.mrb[0].mxu0
    %v3262 = vadd.f32 0.0, %v3261
    %v3263 = vpop.f32.mrb[0].mxu0
    %v3264 = vadd.f32 0.0, %v3263
    %v3265 = vpop.f32.mrb[0].mxu0
    %v3266 = vadd.f32 0.0, %v3265
    %3267 = vdwg.mxu0
    %3268 = vmatprep.subr.bf16.mxu0 %v1654
    %3269 = vmatpush1.bf16.msra.mxu0 %v1653
    %3270 = vmatprep.subr.bf16.mxu0 %v1658
    %3271 = vmatpush1.bf16.msra.mxu0 %v1657
    %3272 = vmatprep.subr.bf16.mxu0 %v1662
    %3273 = vmatpush1.bf16.msra.mxu0 %v1661
    %3274 = vmatprep.subr.bf16.mxu0 %v1666
    %3275 = vmatpush1.bf16.msra.mxu0 %v1665
    %3276 = vmatprep.subr.bf16.mxu0 %v1670
    %3277 = vmatpush1.bf16.msra.mxu0 %v1669
    %3278 = vmatprep.subr.bf16.mxu0 %v1674
    %3279 = vmatpush1.bf16.msra.mxu0 %v1673
    %3280 = vmatprep.subr.bf16.mxu0 %v1678
    %3281 = vmatpush1.bf16.msra.mxu0 %v1677
    %3282 = vmatprep.subr.bf16.mxu0 %v1682
    %3283 = vmatpush1.bf16.msra.mxu0 %v1681
    %3284 = vmatprep.subr.bf16.mxu0 0
    %3285 = vmatpush1.bf16.msra.mxu0 0
    %3286 = vmatprep.subr.bf16.mxu0 0
    %3287 = vmatpush1.bf16.msra.mxu0 0
    %3288 = vmatprep.subr.bf16.mxu0 0
    %3289 = vmatpush1.bf16.msra.mxu0 0
    %3290 = vmatprep.subr.bf16.mxu0 0
    %3291 = vmatpush1.bf16.msra.mxu0 0
    %3292 = vmatprep.subr.bf16.mxu0 0
    %3293 = vmatpush1.bf16.msra.mxu0 0
    %3294 = vmatprep.subr.bf16.mxu0 0
    %3295 = vmatpush1.bf16.msra.mxu0 0
    %3296 = vmatprep.subr.bf16.mxu0 0
    %3297 = vmatpush1.bf16.msra.mxu0 0
    %3298 = vmatprep.subr.bf16.mxu0 0
    %3299 = vmatpush1.bf16.msra.mxu0 0
    %3300 = vmatprep.mubr.bf16.mxu0 0
    %3301 = vmatmul.mubr.bf16.gmra.mrb[0].mxu0 %v3224
    %v3302 = vpop.f32.mrb[0].mxu0
    %v3303 = vadd.f32 0.0, %v3302
    %v3304 = vpop.f32.mrb[0].mxu0
    %v3305 = vadd.f32 0.0, %v3304
    %v3306 = vpop.f32.mrb[0].mxu0
    %v3307 = vadd.f32 0.0, %v3306
    %v3308 = vpop.f32.mrb[0].mxu0
    %v3309 = vadd.f32 0.0, %v3308
    %3310 = vdwg.mxu0
    %v3311 = vadd.f32 %v3216, %v3260
    %v3312 = vadd.f32 %v3217, %v3262
    %v3313 = vadd.f32 %v3218, %v3303
    %v3314 = vadd.f32 %v3219, %v3305
    %v3315 = vadd.f32 %v3220, %v3264
    %v3316 = vadd.f32 %v3221, %v3266
    %v3317 = vadd.f32 %v3222, %v3307
    %v3318 = vadd.f32 %v3223, %v3309
    %s3319 = scalar_lea.vmem [#allocation3], 256
    %v3320 = vld [vmem:[%s3319] sm:$0xff]
    %v3321 = vld [vmem:[%s3319 + $0x8] sm:$0xff]
    %v3322 = vld [vmem:[%s3319 + $0x10] sm:$0xff]
    %v3323 = vld [vmem:[%s3319 + $0x18] sm:$0xff]
    %v3324 = vld [vmem:[%s3319 + $0x20] sm:$0xff]
    %v3325 = vld [vmem:[%s3319 + $0x28] sm:$0xff]
    %v3326 = vld [vmem:[%s3319 + $0x30] sm:$0xff]
    %v3327 = vld [vmem:[%s3319 + $0x38] sm:$0xff]
    %v3328 = vpack.c.bf16 %v3212, %v3211
    %3329 = vmatprep.subr.bf16.mxu0 %v1915
    %3330 = vmatpush1.bf16.msra.mxu0 %v1914
    %3331 = vmatprep.subr.bf16.mxu0 %v1919
    %3332 = vmatpush1.bf16.msra.mxu0 %v1918
    %3333 = vmatprep.subr.bf16.mxu0 %v1923
    %3334 = vmatpush1.bf16.msra.mxu0 %v1922
    %3335 = vmatprep.subr.bf16.mxu0 %v1927
    %3336 = vmatpush1.bf16.msra.mxu0 %v1926
    %3337 = vmatprep.subr.bf16.mxu0 %v1931
    %3338 = vmatpush1.bf16.msra.mxu0 %v1930
    %3339 = vmatprep.subr.bf16.mxu0 %v1935
    %3340 = vmatpush1.bf16.msra.mxu0 %v1934
    %3341 = vmatprep.subr.bf16.mxu0 %v1939
    %3342 = vmatpush1.bf16.msra.mxu0 %v1938
    %3343 = vmatprep.subr.bf16.mxu0 %v1943
    %3344 = vmatpush1.bf16.msra.mxu0 %v1942
    %3345 = vmatprep.subr.bf16.mxu0 0
    %3346 = vmatpush1.bf16.msra.mxu0 0
    %3347 = vmatprep.subr.bf16.mxu0 0
    %3348 = vmatpush1.bf16.msra.mxu0 0
    %3349 = vmatprep.subr.bf16.mxu0 0
    %3350 = vmatpush1.bf16.msra.mxu0 0
    %3351 = vmatprep.subr.bf16.mxu0 0
    %3352 = vmatpush1.bf16.msra.mxu0 0
    %3353 = vmatprep.subr.bf16.mxu0 0
    %3354 = vmatpush1.bf16.msra.mxu0 0
    %3355 = vmatprep.subr.bf16.mxu0 0
    %3356 = vmatpush1.bf16.msra.mxu0 0
    %3357 = vmatprep.subr.bf16.mxu0 0
    %3358 = vmatpush1.bf16.msra.mxu0 0
    %3359 = vmatprep.subr.bf16.mxu0 0
    %3360 = vmatpush1.bf16.msra.mxu0 0
    %3361 = vmatprep.mubr.bf16.mxu0 0
    %3362 = vmatmul.mubr.bf16.gmra.mrb[0].mxu0 %v3328
    %v3363 = vpop.f32.mrb[0].mxu0
    %v3364 = vadd.f32 0.0, %v3363
    %v3365 = vpop.f32.mrb[0].mxu0
    %v3366 = vadd.f32 0.0, %v3365
    %v3367 = vpop.f32.mrb[0].mxu0
    %v3368 = vadd.f32 0.0, %v3367
    %v3369 = vpop.f32.mrb[0].mxu0
    %v3370 = vadd.f32 0.0, %v3369
    %3371 = vdwg.mxu0
    %3372 = vmatprep.subr.bf16.mxu0 %v1917
    %3373 = vmatpush1.bf16.msra.mxu0 %v1916
    %3374 = vmatprep.subr.bf16.mxu0 %v1921
    %3375 = vmatpush1.bf16.msra.mxu0 %v1920
    %3376 = vmatprep.subr.bf16.mxu0 %v1925
    %3377 = vmatpush1.bf16.msra.mxu0 %v1924
    %3378 = vmatprep.subr.bf16.mxu0 %v1929
    %3379 = vmatpush1.bf16.msra.mxu0 %v1928
    %3380 = vmatprep.subr.bf16.mxu0 %v1933
    %3381 = vmatpush1.bf16.msra.mxu0 %v1932
    %3382 = vmatprep.subr.bf16.mxu0 %v1937
    %3383 = vmatpush1.bf16.msra.mxu0 %v1936
    %3384 = vmatprep.subr.bf16.mxu0 %v1941
    %3385 = vmatpush1.bf16.msra.mxu0 %v1940
    %3386 = vmatprep.subr.bf16.mxu0 %v1945
    %3387 = vmatpush1.bf16.msra.mxu0 %v1944
    %3388 = vmatprep.subr.bf16.mxu0 0
    %3389 = vmatpush1.bf16.msra.mxu0 0
    %3390 = vmatprep.subr.bf16.mxu0 0
    %3391 = vmatpush1.bf16.msra.mxu0 0
    %3392 = vmatprep.subr.bf16.mxu0 0
    %3393 = vmatpush1.bf16.msra.mxu0 0
    %3394 = vmatprep.subr.bf16.mxu0 0
    %3395 = vmatpush1.bf16.msra.mxu0 0
    %3396 = vmatprep.subr.bf16.mxu0 0
    %3397 = vmatpush1.bf16.msra.mxu0 0
    %3398 = vmatprep.subr.bf16.mxu0 0
    %3399 = vmatpush1.bf16.msra.mxu0 0
    %3400 = vmatprep.subr.bf16.mxu0 0
    %3401 = vmatpush1.bf16.msra.mxu0 0
    %3402 = vmatprep.subr.bf16.mxu0 0
    %3403 = vmatpush1.bf16.msra.mxu0 0
    %3404 = vmatprep.mubr.bf16.mxu0 0
    %3405 = vmatmul.mubr.bf16.gmra.mrb[0].mxu0 %v3328
    %v3406 = vpop.f32.mrb[0].mxu0
    %v3407 = vadd.f32 0.0, %v3406
    %v3408 = vpop.f32.mrb[0].mxu0
    %v3409 = vadd.f32 0.0, %v3408
    %v3410 = vpop.f32.mrb[0].mxu0
    %v3411 = vadd.f32 0.0, %v3410
    %v3412 = vpop.f32.mrb[0].mxu0
    %v3413 = vadd.f32 0.0, %v3412
    %3414 = vdwg.mxu0
    %v3415 = vadd.f32 %v3320, %v3364
    %v3416 = vadd.f32 %v3321, %v3366
    %v3417 = vadd.f32 %v3322, %v3407
    %v3418 = vadd.f32 %v3323, %v3409
    %v3419 = vadd.f32 %v3324, %v3368
    %v3420 = vadd.f32 %v3325, %v3370
    %v3421 = vadd.f32 %v3326, %v3411
    %v3422 = vadd.f32 %v3327, %v3413
    %v3423 = vxor.u32 %v3311, 2147483648
    %v3424 = vxor.u32 %v3315, 2147483648
    %v3425 = vmul.f32 %v3423, 1.442695
    %v3426 = vpow.pop %v3425
    %v3427 = vmul.f32 %v3424, 1.442695
    %v3428 = vpow.pop %v3427
    %v3429 = vadd.f32 %v3426, 1.0
    %v3430 = vadd.f32 %v3428, 1.0
    %v3431 = vrcp.pop %v3429
    %v3432 = vmul.f32 1.0, %v3431
    %v3433 = vrcp.pop %v3430
    %v3434 = vmul.f32 1.0, %v3433
    %v3435 = vxor.u32 %v3312, 2147483648
    %v3436 = vxor.u32 %v3316, 2147483648
    %v3437 = vmul.f32 %v3435, 1.442695
    %v3438 = vpow.pop %v3437
    %v3439 = vmul.f32 %v3436, 1.442695
    %v3440 = vpow.pop %v3439
    %v3441 = vadd.f32 %v3438, 1.0
    %v3442 = vadd.f32 %v3440, 1.0
    %v3443 = vrcp.pop %v3441
    %v3444 = vmul.f32 1.0, %v3443
    %v3445 = vrcp.pop %v3442
    %v3446 = vmul.f32 1.0, %v3445
    %v3447 = vtanh.pop %v3313
    %v3448 = vtanh.pop %v3317
    %v3449 = vxor.u32 %v3314, 2147483648
    %v3450 = vxor.u32 %v3318, 2147483648
    %v3451 = vmul.f32 %v3449, 1.442695
    %v3452 = vpow.pop %v3451
    %v3453 = vmul.f32 %v3450, 1.442695
    %v3454 = vpow.pop %v3453
    %v3455 = vadd.f32 %v3452, 1.0
    %v3456 = vadd.f32 %v3454, 1.0
    %v3457 = vrcp.pop %v3455
    %v3458 = vmul.f32 1.0, %v3457
    %v3459 = vrcp.pop %v3456
    %v3460 = vmul.f32 1.0, %v3459
    %v3461 = vmul.f32 %v3444, %v3149
    %v3462 = vmul.f32 %v3446, %v3150
    %v3463 = vmul.f32 %v3432, %v3447
    %v3464 = vmul.f32 %v3434, %v3448
    %v3465 = vadd.f32 %v3461, %v3463
    %v3466 = vadd.f32 %v3462, %v3464
    %v3467 = vtanh.pop %v3465
    %v3468 = vtanh.pop %v3466
    %v3469 = vmul.f32 %v3458, %v3467
    %v3470 = vmul.f32 %v3460, %v3468
    %s3471 = sadd.s32 %s1537, 4
    %v3472 = vstv %s3471
    %vm3473 = vcmp.lt.s32.totalorder %v3472, %v1533
    %vm3474 = vcmp.lt.s32.totalorder %v3472, %v1534
    %v3475 = vsel %vm3473, 1, 0
    %v3476 = vsel %vm3474, 1, 0
    %3477 = vset.pattern.permute.xlu0 0
    %3478 = vperm.xlu0 %3477, %v3475
    %v3479 = vpop.permute.xlu0 %3478
    %3480 = vset.pattern.permute.xlu0 0
    %3481 = vperm.xlu0 %3480, %v3476
    %v3482 = vpop.permute.xlu0 %3481
    %vm3483 = vcmp.eq.s32.totalorder %v3479, 1
    %vm3484 = vcmp.eq.s32.totalorder %v3482, 1
    %v3485 = vsel %vm3483, %v3469, %v3147
    %v3486 = vsel %vm3484, %v3470, %v3148
    %v3487 = vsel %vm3483, %v3465, %v3149
    %v3488 = vsel %vm3484, %v3466, %v3150
    %v3489 = vxor.u32 %v3415, 2147483648
    %v3490 = vxor.u32 %v3419, 2147483648
    %v3491 = vmul.f32 %v3489, 1.442695
    %v3492 = vpow.pop %v3491
    %v3493 = vmul.f32 %v3490, 1.442695
    %v3494 = vpow.pop %v3493
    %v3495 = vadd.f32 %v3492, 1.0
    %v3496 = vadd.f32 %v3494, 1.0
    %v3497 = vrcp.pop %v3495
    %v3498 = vmul.f32 1.0, %v3497
    %v3499 = vrcp.pop %v3496
    %v3500 = vmul.f32 1.0, %v3499
    %v3501 = vxor.u32 %v3416, 2147483648
    %v3502 = vxor.u32 %v3420, 2147483648
    %v3503 = vmul.f32 %v3501, 1.442695
    %v3504 = vpow.pop %v3503
    %v3505 = vmul.f32 %v3502, 1.442695
    %v3506 = vpow.pop %v3505
    %v3507 = vadd.f32 %v3504, 1.0
    %v3508 = vadd.f32 %v3506, 1.0
    %v3509 = vrcp.pop %v3507
    %v3510 = vmul.f32 1.0, %v3509
    %v3511 = vrcp.pop %v3508
    %v3512 = vmul.f32 1.0, %v3511
    %v3513 = vtanh.pop %v3417
    %v3514 = vtanh.pop %v3421
    %v3515 = vxor.u32 %v3418, 2147483648
    %v3516 = vxor.u32 %v3422, 2147483648
    %v3517 = vmul.f32 %v3515, 1.442695
    %v3518 = vpow.pop %v3517
    %v3519 = vmul.f32 %v3516, 1.442695
    %v3520 = vpow.pop %v3519
    %v3521 = vadd.f32 %v3518, 1.0
    %v3522 = vadd.f32 %v3520, 1.0
    %v3523 = vrcp.pop %v3521
    %v3524 = vmul.f32 1.0, %v3523
    %v3525 = vrcp.pop %v3522
    %v3526 = vmul.f32 1.0, %v3525
    %v3527 = vmul.f32 %v3510, %v3213
    %v3528 = vmul.f32 %v3512, %v3214
    %v3529 = vmul.f32 %v3498, %v3513
    %v3530 = vmul.f32 %v3500, %v3514
    %v3531 = vadd.f32 %v3527, %v3529
    %v3532 = vadd.f32 %v3528, %v3530
    %v3533 = vtanh.pop %v3531
    %v3534 = vtanh.pop %v3532
    %v3535 = vmul.f32 %v3524, %v3533
    %v3536 = vmul.f32 %v3526, %v3534
    %vm3537 = vcmp.lt.s32.totalorder %v3472, %v1535
    %vm3538 = vcmp.lt.s32.totalorder %v3472, %v1536
    %v3539 = vsel %vm3537, 1, 0
    %v3540 = vsel %vm3538, 1, 0
    %3541 = vset.pattern.permute.xlu0 0
    %3542 = vperm.xlu0 %3541, %v3539
    %v3543 = vpop.permute.xlu0 %3542
    %3544 = vset.pattern.permute.xlu0 0
    %3545 = vperm.xlu0 %3544, %v3540
    %v3546 = vpop.permute.xlu0 %3545
    %vm3547 = vcmp.eq.s32.totalorder %v3543, 1
    %vm3548 = vcmp.eq.s32.totalorder %v3546, 1
    %v3549 = vsel %vm3547, %v3535, %v3211
    %v3550 = vsel %vm3548, %v3536, %v3212
    %v3551 = vsel %vm3547, %v3531, %v3213
    %v3552 = vsel %vm3548, %v3532, %v3214
    %s3553 = scalar_lea.vmem [#allocation2], 320
    %v3554 = vld [vmem:[%s3553] sm:$0xff]
    %v3555 = vld [vmem:[%s3553 + $0x8] sm:$0xff]
    %v3556 = vld [vmem:[%s3553 + $0x10] sm:$0xff]
    %v3557 = vld [vmem:[%s3553 + $0x18] sm:$0xff]
    %v3558 = vld [vmem:[%s3553 + $0x20] sm:$0xff]
    %v3559 = vld [vmem:[%s3553 + $0x28] sm:$0xff]
    %v3560 = vld [vmem:[%s3553 + $0x30] sm:$0xff]
    %v3561 = vld [vmem:[%s3553 + $0x38] sm:$0xff]
    %v3562 = vpack.c.bf16 %v3486, %v3485
    %3563 = vmatprep.subr.bf16.mxu0 %v1652
    %3564 = vmatpush1.bf16.msra.mxu0 %v1651
    %3565 = vmatprep.subr.bf16.mxu0 %v1656
    %3566 = vmatpush1.bf16.msra.mxu0 %v1655
    %3567 = vmatprep.subr.bf16.mxu0 %v1660
    %3568 = vmatpush1.bf16.msra.mxu0 %v1659
    %3569 = vmatprep.subr.bf16.mxu0 %v1664
    %3570 = vmatpush1.bf16.msra.mxu0 %v1663
    %3571 = vmatprep.subr.bf16.mxu0 %v1668
    %3572 = vmatpush1.bf16.msra.mxu0 %v1667
    %3573 = vmatprep.subr.bf16.mxu0 %v1672
    %3574 = vmatpush1.bf16.msra.mxu0 %v1671
    %3575 = vmatprep.subr.bf16.mxu0 %v1676
    %3576 = vmatpush1.bf16.msra.mxu0 %v1675
    %3577 = vmatprep.subr.bf16.mxu0 %v1680
    %3578 = vmatpush1.bf16.msra.mxu0 %v1679
    %3579 = vmatprep.subr.bf16.mxu0 0
    %3580 = vmatpush1.bf16.msra.mxu0 0
    %3581 = vmatprep.subr.bf16.mxu0 0
    %3582 = vmatpush1.bf16.msra.mxu0 0
    %3583 = vmatprep.subr.bf16.mxu0 0
    %3584 = vmatpush1.bf16.msra.mxu0 0
    %3585 = vmatprep.subr.bf16.mxu0 0
    %3586 = vmatpush1.bf16.msra.mxu0 0
    %3587 = vmatprep.subr.bf16.mxu0 0
    %3588 = vmatpush1.bf16.msra.mxu0 0
    %3589 = vmatprep.subr.bf16.mxu0 0
    %3590 = vmatpush1.bf16.msra.mxu0 0
    %3591 = vmatprep.subr.bf16.mxu0 0
    %3592 = vmatpush1.bf16.msra.mxu0 0
    %3593 = vmatprep.subr.bf16.mxu0 0
    %3594 = vmatpush1.bf16.msra.mxu0 0
    %3595 = vmatprep.mubr.bf16.mxu0 0
    %3596 = vmatmul.mubr.bf16.gmra.mrb[0].mxu0 %v3562
    %v3597 = vpop.f32.mrb[0].mxu0
    %v3598 = vadd.f32 0.0, %v3597
    %v3599 = vpop.f32.mrb[0].mxu0
    %v3600 = vadd.f32 0.0, %v3599
    %v3601 = vpop.f32.mrb[0].mxu0
    %v3602 = vadd.f32 0.0, %v3601
    %v3603 = vpop.f32.mrb[0].mxu0
    %v3604 = vadd.f32 0.0, %v3603
    %3605 = vdwg.mxu0
    %3606 = vmatprep.subr.bf16.mxu0 %v1654
    %3607 = vmatpush1.bf16.msra.mxu0 %v1653
    %3608 = vmatprep.subr.bf16.mxu0 %v1658
    %3609 = vmatpush1.bf16.msra.mxu0 %v1657
    %3610 = vmatprep.subr.bf16.mxu0 %v1662
    %3611 = vmatpush1.bf16.msra.mxu0 %v1661
    %3612 = vmatprep.subr.bf16.mxu0 %v1666
    %3613 = vmatpush1.bf16.msra.mxu0 %v1665
    %3614 = vmatprep.subr.bf16.mxu0 %v1670
    %3615 = vmatpush1.bf16.msra.mxu0 %v1669
    %3616 = vmatprep.subr.bf16.mxu0 %v1674
    %3617 = vmatpush1.bf16.msra.mxu0 %v1673
    %3618 = vmatprep.subr.bf16.mxu0 %v1678
    %3619 = vmatpush1.bf16.msra.mxu0 %v1677
    %3620 = vmatprep.subr.bf16.mxu0 %v1682
    %3621 = vmatpush1.bf16.msra.mxu0 %v1681
    %3622 = vmatprep.subr.bf16.mxu0 0
    %3623 = vmatpush1.bf16.msra.mxu0 0
    %3624 = vmatprep.subr.bf16.mxu0 0
    %3625 = vmatpush1.bf16.msra.mxu0 0
    %3626 = vmatprep.subr.bf16.mxu0 0
    %3627 = vmatpush1.bf16.msra.mxu0 0
    %3628 = vmatprep.subr.bf16.mxu0 0
    %3629 = vmatpush1.bf16.msra.mxu0 0
    %3630 = vmatprep.subr.bf16.mxu0 0
    %3631 = vmatpush1.bf16.msra.mxu0 0
    %3632 = vmatprep.subr.bf16.mxu0 0
    %3633 = vmatpush1.bf16.msra.mxu0 0
    %3634 = vmatprep.subr.bf16.mxu0 0
    %3635 = vmatpush1.bf16.msra.mxu0 0
    %3636 = vmatprep.subr.bf16.mxu0 0
    %3637 = vmatpush1.bf16.msra.mxu0 0
    %3638 = vmatprep.mubr.bf16.mxu0 0
    %3639 = vmatmul.mubr.bf16.gmra.mrb[0].mxu0 %v3562
    %v3640 = vpop.f32.mrb[0].mxu0
    %v3641 = vadd.f32 0.0, %v3640
    %v3642 = vpop.f32.mrb[0].mxu0
    %v3643 = vadd.f32 0.0, %v3642
    %v3644 = vpop.f32.mrb[0].mxu0
    %v3645 = vadd.f32 0.0, %v3644
    %v3646 = vpop.f32.mrb[0].mxu0
    %v3647 = vadd.f32 0.0, %v3646
    %3648 = vdwg.mxu0
    %v3649 = vadd.f32 %v3554, %v3598
    %v3650 = vadd.f32 %v3555, %v3600
    %v3651 = vadd.f32 %v3556, %v3641
    %v3652 = vadd.f32 %v3557, %v3643
    %v3653 = vadd.f32 %v3558, %v3602
    %v3654 = vadd.f32 %v3559, %v3604
    %v3655 = vadd.f32 %v3560, %v3645
    %v3656 = vadd.f32 %v3561, %v3647
    %s3657 = scalar_lea.vmem [#allocation3], 320
    %v3658 = vld [vmem:[%s3657] sm:$0xff]
    %v3659 = vld [vmem:[%s3657 + $0x8] sm:$0xff]
    %v3660 = vld [vmem:[%s3657 + $0x10] sm:$0xff]
    %v3661 = vld [vmem:[%s3657 + $0x18] sm:$0xff]
    %v3662 = vld [vmem:[%s3657 + $0x20] sm:$0xff]
    %v3663 = vld [vmem:[%s3657 + $0x28] sm:$0xff]
    %v3664 = vld [vmem:[%s3657 + $0x30] sm:$0xff]
    %v3665 = vld [vmem:[%s3657 + $0x38] sm:$0xff]
    %v3666 = vpack.c.bf16 %v3550, %v3549
    %3667 = vmatprep.subr.bf16.mxu0 %v1915
    %3668 = vmatpush1.bf16.msra.mxu0 %v1914
    %3669 = vmatprep.subr.bf16.mxu0 %v1919
    %3670 = vmatpush1.bf16.msra.mxu0 %v1918
    %3671 = vmatprep.subr.bf16.mxu0 %v1923
    %3672 = vmatpush1.bf16.msra.mxu0 %v1922
    %3673 = vmatprep.subr.bf16.mxu0 %v1927
    %3674 = vmatpush1.bf16.msra.mxu0 %v1926
    %3675 = vmatprep.subr.bf16.mxu0 %v1931
    %3676 = vmatpush1.bf16.msra.mxu0 %v1930
    %3677 = vmatprep.subr.bf16.mxu0 %v1935
    %3678 = vmatpush1.bf16.msra.mxu0 %v1934
    %3679 = vmatprep.subr.bf16.mxu0 %v1939
    %3680 = vmatpush1.bf16.msra.mxu0 %v1938
    %3681 = vmatprep.subr.bf16.mxu0 %v1943
    %3682 = vmatpush1.bf16.msra.mxu0 %v1942
    %3683 = vmatprep.subr.bf16.mxu0 0
    %3684 = vmatpush1.bf16.msra.mxu0 0
    %3685 = vmatprep.subr.bf16.mxu0 0
    %3686 = vmatpush1.bf16.msra.mxu0 0
    %3687 = vmatprep.subr.bf16.mxu0 0
    %3688 = vmatpush1.bf16.msra.mxu0 0
    %3689 = vmatprep.subr.bf16.mxu0 0
    %3690 = vmatpush1.bf16.msra.mxu0 0
    %3691 = vmatprep.subr.bf16.mxu0 0
    %3692 = vmatpush1.bf16.msra.mxu0 0
    %3693 = vmatprep.subr.bf16.mxu0 0
    %3694 = vmatpush1.bf16.msra.mxu0 0
    %3695 = vmatprep.subr.bf16.mxu0 0
    %3696 = vmatpush1.bf16.msra.mxu0 0
    %3697 = vmatprep.subr.bf16.mxu0 0
    %3698 = vmatpush1.bf16.msra.mxu0 0
    %3699 = vmatprep.mubr.bf16.mxu0 0
    %3700 = vmatmul.mubr.bf16.gmra.mrb[0].mxu0 %v3666
    %v3701 = vpop.f32.mrb[0].mxu0
    %v3702 = vadd.f32 0.0, %v3701
    %v3703 = vpop.f32.mrb[0].mxu0
    %v3704 = vadd.f32 0.0, %v3703
    %v3705 = vpop.f32.mrb[0].mxu0
    %v3706 = vadd.f32 0.0, %v3705
    %v3707 = vpop.f32.mrb[0].mxu0
    %v3708 = vadd.f32 0.0, %v3707
    %3709 = vdwg.mxu0
    %3710 = vmatprep.subr.bf16.mxu0 %v1917
    %3711 = vmatpush1.bf16.msra.mxu0 %v1916
    %3712 = vmatprep.subr.bf16.mxu0 %v1921
    %3713 = vmatpush1.bf16.msra.mxu0 %v1920
    %3714 = vmatprep.subr.bf16.mxu0 %v1925
    %3715 = vmatpush1.bf16.msra.mxu0 %v1924
    %3716 = vmatprep.subr.bf16.mxu0 %v1929
    %3717 = vmatpush1.bf16.msra.mxu0 %v1928
    %3718 = vmatprep.subr.bf16.mxu0 %v1933
    %3719 = vmatpush1.bf16.msra.mxu0 %v1932
    %3720 = vmatprep.subr.bf16.mxu0 %v1937
    %3721 = vmatpush1.bf16.msra.mxu0 %v1936
    %3722 = vmatprep.subr.bf16.mxu0 %v1941
    %3723 = vmatpush1.bf16.msra.mxu0 %v1940
    %3724 = vmatprep.subr.bf16.mxu0 %v1945
    %3725 = vmatpush1.bf16.msra.mxu0 %v1944
    %3726 = vmatprep.subr.bf16.mxu0 0
    %3727 = vmatpush1.bf16.msra.mxu0 0
    %3728 = vmatprep.subr.bf16.mxu0 0
    %3729 = vmatpush1.bf16.msra.mxu0 0
    %3730 = vmatprep.subr.bf16.mxu0 0
    %3731 = vmatpush1.bf16.msra.mxu0 0
    %3732 = vmatprep.subr.bf16.mxu0 0
    %3733 = vmatpush1.bf16.msra.mxu0 0
    %3734 = vmatprep.subr.bf16.mxu0 0
    %3735 = vmatpush1.bf16.msra.mxu0 0
    %3736 = vmatprep.subr.bf16.mxu0 0
    %3737 = vmatpush1.bf16.msra.mxu0 0
    %3738 = vmatprep.subr.bf16.mxu0 0
    %3739 = vmatpush1.bf16.msra.mxu0 0
    %3740 = vmatprep.subr.bf16.mxu0 0
    %3741 = vmatpush1.bf16.msra.mxu0 0
    %3742 = vmatprep.mubr.bf16.mxu0 0
    %3743 = vmatmul.mubr.bf16.gmra.mrb[0].mxu0 %v3666
    %v3744 = vpop.f32.mrb[0].mxu0
    %v3745 = vadd.f32 0.0, %v3744
    %v3746 = vpop.f32.mrb[0].mxu0
    %v3747 = vadd.f32 0.0, %v3746
    %v3748 = vpop.f32.mrb[0].mxu0
    %v3749 = vadd.f32 0.0, %v3748
    %v3750 = vpop.f32.mrb[0].mxu0
    %v3751 = vadd.f32 0.0, %v3750
    %3752 = vdwg.mxu0
    %v3753 = vadd.f32 %v3658, %v3702
    %v3754 = vadd.f32 %v3659, %v3704
    %v3755 = vadd.f32 %v3660, %v3745
    %v3756 = vadd.f32 %v3661, %v3747
    %v3757 = vadd.f32 %v3662, %v3706
    %v3758 = vadd.f32 %v3663, %v3708
    %v3759 = vadd.f32 %v3664, %v3749
    %v3760 = vadd.f32 %v3665, %v3751
    %v3761 = vxor.u32 %v3649, 2147483648
    %v3762 = vxor.u32 %v3653, 2147483648
    %v3763 = vmul.f32 %v3761, 1.442695
    %v3764 = vpow.pop %v3763
    %v3765 = vmul.f32 %v3762, 1.442695
    %v3766 = vpow.pop %v3765
    %v3767 = vadd.f32 %v3764, 1.0
    %v3768 = vadd.f32 %v3766, 1.0
    %v3769 = vrcp.pop %v3767
    %v3770 = vmul.f32 1.0, %v3769
    %v3771 = vrcp.pop %v3768
    %v3772 = vmul.f32 1.0, %v3771
    %v3773 = vxor.u32 %v3650, 2147483648
    %v3774 = vxor.u32 %v3654, 2147483648
    %v3775 = vmul.f32 %v3773, 1.442695
    %v3776 = vpow.pop %v3775
    %v3777 = vmul.f32 %v3774, 1.442695
    %v3778 = vpow.pop %v3777
    %v3779 = vadd.f32 %v3776, 1.0
    %v3780 = vadd.f32 %v3778, 1.0
    %v3781 = vrcp.pop %v3779
    %v3782 = vmul.f32 1.0, %v3781
    %v3783 = vrcp.pop %v3780
    %v3784 = vmul.f32 1.0, %v3783
    %v3785 = vtanh.pop %v3651
    %v3786 = vtanh.pop %v3655
    %v3787 = vxor.u32 %v3652, 2147483648
    %v3788 = vxor.u32 %v3656, 2147483648
    %v3789 = vmul.f32 %v3787, 1.442695
    %v3790 = vpow.pop %v3789
    %v3791 = vmul.f32 %v3788, 1.442695
    %v3792 = vpow.pop %v3791
    %v3793 = vadd.f32 %v3790, 1.0
    %v3794 = vadd.f32 %v3792, 1.0
    %v3795 = vrcp.pop %v3793
    %v3796 = vmul.f32 1.0, %v3795
    %v3797 = vrcp.pop %v3794
    %v3798 = vmul.f32 1.0, %v3797
    %v3799 = vmul.f32 %v3782, %v3487
    %v3800 = vmul.f32 %v3784, %v3488
    %v3801 = vmul.f32 %v3770, %v3785
    %v3802 = vmul.f32 %v3772, %v3786
    %v3803 = vadd.f32 %v3799, %v3801
    %v3804 = vadd.f32 %v3800, %v3802
    %v3805 = vtanh.pop %v3803
    %v3806 = vtanh.pop %v3804
    %v3807 = vmul.f32 %v3796, %v3805
    %v3808 = vmul.f32 %v3798, %v3806
    %s3809 = sadd.s32 %s1537, 5
    %v3810 = vstv %s3809
    %vm3811 = vcmp.lt.s32.totalorder %v3810, %v1533
    %vm3812 = vcmp.lt.s32.totalorder %v3810, %v1534
    %v3813 = vsel %vm3811, 1, 0
    %v3814 = vsel %vm3812, 1, 0
    %3815 = vset.pattern.permute.xlu0 0
    %3816 = vperm.xlu0 %3815, %v3813
    %v3817 = vpop.permute.xlu0 %3816
    %3818 = vset.pattern.permute.xlu0 0
    %3819 = vperm.xlu0 %3818, %v3814
    %v3820 = vpop.permute.xlu0 %3819
    %vm3821 = vcmp.eq.s32.totalorder %v3817, 1
    %vm3822 = vcmp.eq.s32.totalorder %v3820, 1
    %v3823 = vsel %vm3821, %v3807, %v3485
    %v3824 = vsel %vm3822, %v3808, %v3486
    %v3825 = vsel %vm3821, %v3803, %v3487
    %v3826 = vsel %vm3822, %v3804, %v3488
    %v3827 = vxor.u32 %v3753, 2147483648
    %v3828 = vxor.u32 %v3757, 2147483648
    %v3829 = vmul.f32 %v3827, 1.442695
    %v3830 = vpow.pop %v3829
    %v3831 = vmul.f32 %v3828, 1.442695
    %v3832 = vpow.pop %v3831
    %v3833 = vadd.f32 %v3830, 1.0
    %v3834 = vadd.f32 %v3832, 1.0
    %v3835 = vrcp.pop %v3833
    %v3836 = vmul.f32 1.0, %v3835
    %v3837 = vrcp.pop %v3834
    %v3838 = vmul.f32 1.0, %v3837
    %v3839 = vxor.u32 %v3754, 2147483648
    %v3840 = vxor.u32 %v3758, 2147483648
    %v3841 = vmul.f32 %v3839, 1.442695
    %v3842 = vpow.pop %v3841
    %v3843 = vmul.f32 %v3840, 1.442695
    %v3844 = vpow.pop %v3843
    %v3845 = vadd.f32 %v3842, 1.0
    %v3846 = vadd.f32 %v3844, 1.0
    %v3847 = vrcp.pop %v3845
    %v3848 = vmul.f32 1.0, %v3847
    %v3849 = vrcp.pop %v3846
    %v3850 = vmul.f32 1.0, %v3849
    %v3851 = vtanh.pop %v3755
    %v3852 = vtanh.pop %v3759
    %v3853 = vxor.u32 %v3756, 2147483648
    %v3854 = vxor.u32 %v3760, 2147483648
    %v3855 = vmul.f32 %v3853, 1.442695
    %v3856 = vpow.pop %v3855
    %v3857 = vmul.f32 %v3854, 1.442695
    %v3858 = vpow.pop %v3857
    %v3859 = vadd.f32 %v3856, 1.0
    %v3860 = vadd.f32 %v3858, 1.0
    %v3861 = vrcp.pop %v3859
    %v3862 = vmul.f32 1.0, %v3861
    %v3863 = vrcp.pop %v3860
    %v3864 = vmul.f32 1.0, %v3863
    %v3865 = vmul.f32 %v3848, %v3551
    %v3866 = vmul.f32 %v3850, %v3552
    %v3867 = vmul.f32 %v3836, %v3851
    %v3868 = vmul.f32 %v3838, %v3852
    %v3869 = vadd.f32 %v3865, %v3867
    %v3870 = vadd.f32 %v3866, %v3868
    %v3871 = vtanh.pop %v3869
    %v3872 = vtanh.pop %v3870
    %v3873 = vmul.f32 %v3862, %v3871
    %v3874 = vmul.f32 %v3864, %v3872
    %vm3875 = vcmp.lt.s32.totalorder %v3810, %v1535
    %vm3876 = vcmp.lt.s32.totalorder %v3810, %v1536
    %v3877 = vsel %vm3875, 1, 0
    %v3878 = vsel %vm3876, 1, 0
    %3879 = vset.pattern.permute.xlu0 0
    %3880 = vperm.xlu0 %3879, %v3877
    %v3881 = vpop.permute.xlu0 %3880
    %3882 = vset.pattern.permute.xlu0 0
    %3883 = vperm.xlu0 %3882, %v3878
    %v3884 = vpop.permute.xlu0 %3883
    %vm3885 = vcmp.eq.s32.totalorder %v3881, 1
    %vm3886 = vcmp.eq.s32.totalorder %v3884, 1
    %v3887 = vsel %vm3885, %v3873, %v3549
    %v3888 = vsel %vm3886, %v3874, %v3550
    %v3889 = vsel %vm3885, %v3869, %v3551
    %v3890 = vsel %vm3886, %v3870, %v3552
    %s3891 = scalar_lea.vmem [#allocation2], 384
    %v3892 = vld [vmem:[%s3891] sm:$0xff]
    %v3893 = vld [vmem:[%s3891 + $0x8] sm:$0xff]
    %v3894 = vld [vmem:[%s3891 + $0x10] sm:$0xff]
    %v3895 = vld [vmem:[%s3891 + $0x18] sm:$0xff]
    %v3896 = vld [vmem:[%s3891 + $0x20] sm:$0xff]
    %v3897 = vld [vmem:[%s3891 + $0x28] sm:$0xff]
    %v3898 = vld [vmem:[%s3891 + $0x30] sm:$0xff]
    %v3899 = vld [vmem:[%s3891 + $0x38] sm:$0xff]
    %v3900 = vpack.c.bf16 %v3824, %v3823
    %3901 = vmatprep.subr.bf16.mxu0 %v1652
    %3902 = vmatpush1.bf16.msra.mxu0 %v1651
    %3903 = vmatprep.subr.bf16.mxu0 %v1656
    %3904 = vmatpush1.bf16.msra.mxu0 %v1655
    %3905 = vmatprep.subr.bf16.mxu0 %v1660
    %3906 = vmatpush1.bf16.msra.mxu0 %v1659
    %3907 = vmatprep.subr.bf16.mxu0 %v1664
    %3908 = vmatpush1.bf16.msra.mxu0 %v1663
    %3909 = vmatprep.subr.bf16.mxu0 %v1668
    %3910 = vmatpush1.bf16.msra.mxu0 %v1667
    %3911 = vmatprep.subr.bf16.mxu0 %v1672
    %3912 = vmatpush1.bf16.msra.mxu0 %v1671
    %3913 = vmatprep.subr.bf16.mxu0 %v1676
    %3914 = vmatpush1.bf16.msra.mxu0 %v1675
    %3915 = vmatprep.subr.bf16.mxu0 %v1680
    %3916 = vmatpush1.bf16.msra.mxu0 %v1679
    %3917 = vmatprep.subr.bf16.mxu0 0
    %3918 = vmatpush1.bf16.msra.mxu0 0
    %3919 = vmatprep.subr.bf16.mxu0 0
    %3920 = vmatpush1.bf16.msra.mxu0 0
    %3921 = vmatprep.subr.bf16.mxu0 0
    %3922 = vmatpush1.bf16.msra.mxu0 0
    %3923 = vmatprep.subr.bf16.mxu0 0
    %3924 = vmatpush1.bf16.msra.mxu0 0
    %3925 = vmatprep.subr.bf16.mxu0 0
    %3926 = vmatpush1.bf16.msra.mxu0 0
    %3927 = vmatprep.subr.bf16.mxu0 0
    %3928 = vmatpush1.bf16.msra.mxu0 0
    %3929 = vmatprep.subr.bf16.mxu0 0
    %3930 = vmatpush1.bf16.msra.mxu0 0
    %3931 = vmatprep.subr.bf16.mxu0 0
    %3932 = vmatpush1.bf16.msra.mxu0 0
    %3933 = vmatprep.mubr.bf16.mxu0 0
    %3934 = vmatmul.mubr.bf16.gmra.mrb[0].mxu0 %v3900
    %v3935 = vpop.f32.mrb[0].mxu0
    %v3936 = vadd.f32 0.0, %v3935
    %v3937 = vpop.f32.mrb[0].mxu0
    %v3938 = vadd.f32 0.0, %v3937
    %v3939 = vpop.f32.mrb[0].mxu0
    %v3940 = vadd.f32 0.0, %v3939
    %v3941 = vpop.f32.mrb[0].mxu0
    %v3942 = vadd.f32 0.0, %v3941
    %3943 = vdwg.mxu0
    %3944 = vmatprep.subr.bf16.mxu0 %v1654
    %3945 = vmatpush1.bf16.msra.mxu0 %v1653
    %3946 = vmatprep.subr.bf16.mxu0 %v1658
    %3947 = vmatpush1.bf16.msra.mxu0 %v1657
    %3948 = vmatprep.subr.bf16.mxu0 %v1662
    %3949 = vmatpush1.bf16.msra.mxu0 %v1661
    %3950 = vmatprep.subr.bf16.mxu0 %v1666
    %3951 = vmatpush1.bf16.msra.mxu0 %v1665
    %3952 = vmatprep.subr.bf16.mxu0 %v1670
    %3953 = vmatpush1.bf16.msra.mxu0 %v1669
    %3954 = vmatprep.subr.bf16.mxu0 %v1674
    %3955 = vmatpush1.bf16.msra.mxu0 %v1673
    %3956 = vmatprep.subr.bf16.mxu0 %v1678
    %3957 = vmatpush1.bf16.msra.mxu0 %v1677
    %3958 = vmatprep.subr.bf16.mxu0 %v1682
    %3959 = vmatpush1.bf16.msra.mxu0 %v1681
    %3960 = vmatprep.subr.bf16.mxu0 0
    %3961 = vmatpush1.bf16.msra.mxu0 0
    %3962 = vmatprep.subr.bf16.mxu0 0
    %3963 = vmatpush1.bf16.msra.mxu0 0
    %3964 = vmatprep.subr.bf16.mxu0 0
    %3965 = vmatpush1.bf16.msra.mxu0 0
    %3966 = vmatprep.subr.bf16.mxu0 0
    %3967 = vmatpush1.bf16.msra.mxu0 0
    %3968 = vmatprep.subr.bf16.mxu0 0
    %3969 = vmatpush1.bf16.msra.mxu0 0
    %3970 = vmatprep.subr.bf16.mxu0 0
    %3971 = vmatpush1.bf16.msra.mxu0 0
    %3972 = vmatprep.subr.bf16.mxu0 0
    %3973 = vmatpush1.bf16.msra.mxu0 0
    %3974 = vmatprep.subr.bf16.mxu0 0
    %3975 = vmatpush1.bf16.msra.mxu0 0
    %3976 = vmatprep.mubr.bf16.mxu0 0
    %3977 = vmatmul.mubr.bf16.gmra.mrb[0].mxu0 %v3900
    %v3978 = vpop.f32.mrb[0].mxu0
    %v3979 = vadd.f32 0.0, %v3978
    %v3980 = vpop.f32.mrb[0].mxu0
    %v3981 = vadd.f32 0.0, %v3980
    %v3982 = vpop.f32.mrb[0].mxu0
    %v3983 = vadd.f32 0.0, %v3982
    %v3984 = vpop.f32.mrb[0].mxu0
    %v3985 = vadd.f32 0.0, %v3984
    %3986 = vdwg.mxu0
    %v3987 = vadd.f32 %v3892, %v3936
    %v3988 = vadd.f32 %v3893, %v3938
    %v3989 = vadd.f32 %v3894, %v3979
    %v3990 = vadd.f32 %v3895, %v3981
    %v3991 = vadd.f32 %v3896, %v3940
    %v3992 = vadd.f32 %v3897, %v3942
    %v3993 = vadd.f32 %v3898, %v3983
    %v3994 = vadd.f32 %v3899, %v3985
    %s3995 = scalar_lea.vmem [#allocation3], 384
    %v3996 = vld [vmem:[%s3995] sm:$0xff]
    %v3997 = vld [vmem:[%s3995 + $0x8] sm:$0xff]
    %v3998 = vld [vmem:[%s3995 + $0x10] sm:$0xff]
    %v3999 = vld [vmem:[%s3995 + $0x18] sm:$0xff]
    %v4000 = vld [vmem:[%s3995 + $0x20] sm:$0xff]
    %v4001 = vld [vmem:[%s3995 + $0x28] sm:$0xff]
    %v4002 = vld [vmem:[%s3995 + $0x30] sm:$0xff]
    %v4003 = vld [vmem:[%s3995 + $0x38] sm:$0xff]
    %v4004 = vpack.c.bf16 %v3888, %v3887
    %4005 = vmatprep.subr.bf16.mxu0 %v1915
    %4006 = vmatpush1.bf16.msra.mxu0 %v1914
    %4007 = vmatprep.subr.bf16.mxu0 %v1919
    %4008 = vmatpush1.bf16.msra.mxu0 %v1918
    %4009 = vmatprep.subr.bf16.mxu0 %v1923
    %4010 = vmatpush1.bf16.msra.mxu0 %v1922
    %4011 = vmatprep.subr.bf16.mxu0 %v1927
    %4012 = vmatpush1.bf16.msra.mxu0 %v1926
    %4013 = vmatprep.subr.bf16.mxu0 %v1931
    %4014 = vmatpush1.bf16.msra.mxu0 %v1930
    %4015 = vmatprep.subr.bf16.mxu0 %v1935
    %4016 = vmatpush1.bf16.msra.mxu0 %v1934
    %4017 = vmatprep.subr.bf16.mxu0 %v1939
    %4018 = vmatpush1.bf16.msra.mxu0 %v1938
    %4019 = vmatprep.subr.bf16.mxu0 %v1943
    %4020 = vmatpush1.bf16.msra.mxu0 %v1942
    %4021 = vmatprep.subr.bf16.mxu0 0
    %4022 = vmatpush1.bf16.msra.mxu0 0
    %4023 = vmatprep.subr.bf16.mxu0 0
    %4024 = vmatpush1.bf16.msra.mxu0 0
    %4025 = vmatprep.subr.bf16.mxu0 0
    %4026 = vmatpush1.bf16.msra.mxu0 0
    %4027 = vmatprep.subr.bf16.mxu0 0
    %4028 = vmatpush1.bf16.msra.mxu0 0
    %4029 = vmatprep.subr.bf16.mxu0 0
    %4030 = vmatpush1.bf16.msra.mxu0 0
    %4031 = vmatprep.subr.bf16.mxu0 0
    %4032 = vmatpush1.bf16.msra.mxu0 0
    %4033 = vmatprep.subr.bf16.mxu0 0
    %4034 = vmatpush1.bf16.msra.mxu0 0
    %4035 = vmatprep.subr.bf16.mxu0 0
    %4036 = vmatpush1.bf16.msra.mxu0 0
    %4037 = vmatprep.mubr.bf16.mxu0 0
    %4038 = vmatmul.mubr.bf16.gmra.mrb[0].mxu0 %v4004
    %v4039 = vpop.f32.mrb[0].mxu0
    %v4040 = vadd.f32 0.0, %v4039
    %v4041 = vpop.f32.mrb[0].mxu0
    %v4042 = vadd.f32 0.0, %v4041
    %v4043 = vpop.f32.mrb[0].mxu0
    %v4044 = vadd.f32 0.0, %v4043
    %v4045 = vpop.f32.mrb[0].mxu0
    %v4046 = vadd.f32 0.0, %v4045
    %4047 = vdwg.mxu0
    %4048 = vmatprep.subr.bf16.mxu0 %v1917
    %4049 = vmatpush1.bf16.msra.mxu0 %v1916
    %4050 = vmatprep.subr.bf16.mxu0 %v1921
    %4051 = vmatpush1.bf16.msra.mxu0 %v1920
    %4052 = vmatprep.subr.bf16.mxu0 %v1925
    %4053 = vmatpush1.bf16.msra.mxu0 %v1924
    %4054 = vmatprep.subr.bf16.mxu0 %v1929
    %4055 = vmatpush1.bf16.msra.mxu0 %v1928
    %4056 = vmatprep.subr.bf16.mxu0 %v1933
    %4057 = vmatpush1.bf16.msra.mxu0 %v1932
    %4058 = vmatprep.subr.bf16.mxu0 %v1937
    %4059 = vmatpush1.bf16.msra.mxu0 %v1936
    %4060 = vmatprep.subr.bf16.mxu0 %v1941
    %4061 = vmatpush1.bf16.msra.mxu0 %v1940
    %4062 = vmatprep.subr.bf16.mxu0 %v1945
    %4063 = vmatpush1.bf16.msra.mxu0 %v1944
    %4064 = vmatprep.subr.bf16.mxu0 0
    %4065 = vmatpush1.bf16.msra.mxu0 0
    %4066 = vmatprep.subr.bf16.mxu0 0
    %4067 = vmatpush1.bf16.msra.mxu0 0
    %4068 = vmatprep.subr.bf16.mxu0 0
    %4069 = vmatpush1.bf16.msra.mxu0 0
    %4070 = vmatprep.subr.bf16.mxu0 0
    %4071 = vmatpush1.bf16.msra.mxu0 0
    %4072 = vmatprep.subr.bf16.mxu0 0
    %4073 = vmatpush1.bf16.msra.mxu0 0
    %4074 = vmatprep.subr.bf16.mxu0 0
    %4075 = vmatpush1.bf16.msra.mxu0 0
    %4076 = vmatprep.subr.bf16.mxu0 0
    %4077 = vmatpush1.bf16.msra.mxu0 0
    %4078 = vmatprep.subr.bf16.mxu0 0
    %4079 = vmatpush1.bf16.msra.mxu0 0
    %4080 = vmatprep.mubr.bf16.mxu0 0
    %4081 = vmatmul.mubr.bf16.gmra.mrb[0].mxu0 %v4004
    %v4082 = vpop.f32.mrb[0].mxu0
    %v4083 = vadd.f32 0.0, %v4082
    %v4084 = vpop.f32.mrb[0].mxu0
    %v4085 = vadd.f32 0.0, %v4084
    %v4086 = vpop.f32.mrb[0].mxu0
    %v4087 = vadd.f32 0.0, %v4086
    %v4088 = vpop.f32.mrb[0].mxu0
    %v4089 = vadd.f32 0.0, %v4088
    %4090 = vdwg.mxu0
    %v4091 = vadd.f32 %v3996, %v4040
    %v4092 = vadd.f32 %v3997, %v4042
    %v4093 = vadd.f32 %v3998, %v4083
    %v4094 = vadd.f32 %v3999, %v4085
    %v4095 = vadd.f32 %v4000, %v4044
    %v4096 = vadd.f32 %v4001, %v4046
    %v4097 = vadd.f32 %v4002, %v4087
    %v4098 = vadd.f32 %v4003, %v4089
    %v4099 = vxor.u32 %v3987, 2147483648
    %v4100 = vxor.u32 %v3991, 2147483648
    %v4101 = vmul.f32 %v4099, 1.442695
    %v4102 = vpow.pop %v4101
    %v4103 = vmul.f32 %v4100, 1.442695
    %v4104 = vpow.pop %v4103
    %v4105 = vadd.f32 %v4102, 1.0
    %v4106 = vadd.f32 %v4104, 1.0
    %v4107 = vrcp.pop %v4105
    %v4108 = vmul.f32 1.0, %v4107
    %v4109 = vrcp.pop %v4106
    %v4110 = vmul.f32 1.0, %v4109
    %v4111 = vxor.u32 %v3988, 2147483648
    %v4112 = vxor.u32 %v3992, 2147483648
    %v4113 = vmul.f32 %v4111, 1.442695
    %v4114 = vpow.pop %v4113
    %v4115 = vmul.f32 %v4112, 1.442695
    %v4116 = vpow.pop %v4115
    %v4117 = vadd.f32 %v4114, 1.0
    %v4118 = vadd.f32 %v4116, 1.0
    %v4119 = vrcp.pop %v4117
    %v4120 = vmul.f32 1.0, %v4119
    %v4121 = vrcp.pop %v4118
    %v4122 = vmul.f32 1.0, %v4121
    %v4123 = vtanh.pop %v3989
    %v4124 = vtanh.pop %v3993
    %v4125 = vxor.u32 %v3990, 2147483648
    %v4126 = vxor.u32 %v3994, 2147483648
    %v4127 = vmul.f32 %v4125, 1.442695
    %v4128 = vpow.pop %v4127
    %v4129 = vmul.f32 %v4126, 1.442695
    %v4130 = vpow.pop %v4129
    %v4131 = vadd.f32 %v4128, 1.0
    %v4132 = vadd.f32 %v4130, 1.0
    %v4133 = vrcp.pop %v4131
    %v4134 = vmul.f32 1.0, %v4133
    %v4135 = vrcp.pop %v4132
    %v4136 = vmul.f32 1.0, %v4135
    %v4137 = vmul.f32 %v4120, %v3825
    %v4138 = vmul.f32 %v4122, %v3826
    %v4139 = vmul.f32 %v4108, %v4123
    %v4140 = vmul.f32 %v4110, %v4124
    %v4141 = vadd.f32 %v4137, %v4139
    %v4142 = vadd.f32 %v4138, %v4140
    %v4143 = vtanh.pop %v4141
    %v4144 = vtanh.pop %v4142
    %v4145 = vmul.f32 %v4134, %v4143
    %v4146 = vmul.f32 %v4136, %v4144
    %s4147 = sadd.s32 %s1537, 6
    %v4148 = vstv %s4147
    %vm4149 = vcmp.lt.s32.totalorder %v4148, %v1533
    %vm4150 = vcmp.lt.s32.totalorder %v4148, %v1534
    %v4151 = vsel %vm4149, 1, 0
    %v4152 = vsel %vm4150, 1, 0
    %4153 = vset.pattern.permute.xlu0 0
    %4154 = vperm.xlu0 %4153, %v4151
    %v4155 = vpop.permute.xlu0 %4154
    %4156 = vset.pattern.permute.xlu0 0
    %4157 = vperm.xlu0 %4156, %v4152
    %v4158 = vpop.permute.xlu0 %4157
    %vm4159 = vcmp.eq.s32.totalorder %v4155, 1
    %vm4160 = vcmp.eq.s32.totalorder %v4158, 1
    %v4161 = vsel %vm4159, %v4145, %v3823
    %v4162 = vsel %vm4160, %v4146, %v3824
    %v4163 = vsel %vm4159, %v4141, %v3825
    %v4164 = vsel %vm4160, %v4142, %v3826
    %v4165 = vxor.u32 %v4091, 2147483648
    %v4166 = vxor.u32 %v4095, 2147483648
    %v4167 = vmul.f32 %v4165, 1.442695
    %v4168 = vpow.pop %v4167
    %v4169 = vmul.f32 %v4166, 1.442695
    %v4170 = vpow.pop %v4169
    %v4171 = vadd.f32 %v4168, 1.0
    %v4172 = vadd.f32 %v4170, 1.0
    %v4173 = vrcp.pop %v4171
    %v4174 = vmul.f32 1.0, %v4173
    %v4175 = vrcp.pop %v4172
    %v4176 = vmul.f32 1.0, %v4175
    %v4177 = vxor.u32 %v4092, 2147483648
    %v4178 = vxor.u32 %v4096, 2147483648
    %v4179 = vmul.f32 %v4177, 1.442695
    %v4180 = vpow.pop %v4179
    %v4181 = vmul.f32 %v4178, 1.442695
    %v4182 = vpow.pop %v4181
    %v4183 = vadd.f32 %v4180, 1.0
    %v4184 = vadd.f32 %v4182, 1.0
    %v4185 = vrcp.pop %v4183
    %v4186 = vmul.f32 1.0, %v4185
    %v4187 = vrcp.pop %v4184
    %v4188 = vmul.f32 1.0, %v4187
    %v4189 = vtanh.pop %v4093
    %v4190 = vtanh.pop %v4097
    %v4191 = vxor.u32 %v4094, 2147483648
    %v4192 = vxor.u32 %v4098, 2147483648
    %v4193 = vmul.f32 %v4191, 1.442695
    %v4194 = vpow.pop %v4193
    %v4195 = vmul.f32 %v4192, 1.442695
    %v4196 = vpow.pop %v4195
    %v4197 = vadd.f32 %v4194, 1.0
    %v4198 = vadd.f32 %v4196, 1.0
    %v4199 = vrcp.pop %v4197
    %v4200 = vmul.f32 1.0, %v4199
    %v4201 = vrcp.pop %v4198
    %v4202 = vmul.f32 1.0, %v4201
    %v4203 = vmul.f32 %v4186, %v3889
    %v4204 = vmul.f32 %v4188, %v3890
    %v4205 = vmul.f32 %v4174, %v4189
    %v4206 = vmul.f32 %v4176, %v4190
    %v4207 = vadd.f32 %v4203, %v4205
    %v4208 = vadd.f32 %v4204, %v4206
    %v4209 = vtanh.pop %v4207
    %v4210 = vtanh.pop %v4208
    %v4211 = vmul.f32 %v4200, %v4209
    %v4212 = vmul.f32 %v4202, %v4210
    %vm4213 = vcmp.lt.s32.totalorder %v4148, %v1535
    %vm4214 = vcmp.lt.s32.totalorder %v4148, %v1536
    %v4215 = vsel %vm4213, 1, 0
    %v4216 = vsel %vm4214, 1, 0
    %4217 = vset.pattern.permute.xlu0 0
    %4218 = vperm.xlu0 %4217, %v4215
    %v4219 = vpop.permute.xlu0 %4218
    %4220 = vset.pattern.permute.xlu0 0
    %4221 = vperm.xlu0 %4220, %v4216
    %v4222 = vpop.permute.xlu0 %4221
    %vm4223 = vcmp.eq.s32.totalorder %v4219, 1
    %vm4224 = vcmp.eq.s32.totalorder %v4222, 1
    %v4225 = vsel %vm4223, %v4211, %v3887
    %v4226 = vsel %vm4224, %v4212, %v3888
    %v4227 = vsel %vm4223, %v4207, %v3889
    %v4228 = vsel %vm4224, %v4208, %v3890
    %s4229 = scalar_lea.vmem [#allocation2], 448
    %v4230 = vld [vmem:[%s4229] sm:$0xff]
    %v4231 = vld [vmem:[%s4229 + $0x8] sm:$0xff]
    %v4232 = vld [vmem:[%s4229 + $0x10] sm:$0xff]
    %v4233 = vld [vmem:[%s4229 + $0x18] sm:$0xff]
    %v4234 = vld [vmem:[%s4229 + $0x20] sm:$0xff]
    %v4235 = vld [vmem:[%s4229 + $0x28] sm:$0xff]
    %v4236 = vld [vmem:[%s4229 + $0x30] sm:$0xff]
    %v4237 = vld [vmem:[%s4229 + $0x38] sm:$0xff]
    %v4238 = vpack.c.bf16 %v4162, %v4161
    %4239 = vmatprep.subr.bf16.mxu0 %v1652
    %4240 = vmatpush1.bf16.msra.mxu0 %v1651
    %4241 = vmatprep.subr.bf16.mxu0 %v1656
    %4242 = vmatpush1.bf16.msra.mxu0 %v1655
    %4243 = vmatprep.subr.bf16.mxu0 %v1660
    %4244 = vmatpush1.bf16.msra.mxu0 %v1659
    %4245 = vmatprep.subr.bf16.mxu0 %v1664
    %4246 = vmatpush1.bf16.msra.mxu0 %v1663
    %4247 = vmatprep.subr.bf16.mxu0 %v1668
    %4248 = vmatpush1.bf16.msra.mxu0 %v1667
    %4249 = vmatprep.subr.bf16.mxu0 %v1672
    %4250 = vmatpush1.bf16.msra.mxu0 %v1671
    %4251 = vmatprep.subr.bf16.mxu0 %v1676
    %4252 = vmatpush1.bf16.msra.mxu0 %v1675
    %4253 = vmatprep.subr.bf16.mxu0 %v1680
    %4254 = vmatpush1.bf16.msra.mxu0 %v1679
    %4255 = vmatprep.subr.bf16.mxu0 0
    %4256 = vmatpush1.bf16.msra.mxu0 0
    %4257 = vmatprep.subr.bf16.mxu0 0
    %4258 = vmatpush1.bf16.msra.mxu0 0
    %4259 = vmatprep.subr.bf16.mxu0 0
    %4260 = vmatpush1.bf16.msra.mxu0 0
    %4261 = vmatprep.subr.bf16.mxu0 0
    %4262 = vmatpush1.bf16.msra.mxu0 0
    %4263 = vmatprep.subr.bf16.mxu0 0
    %4264 = vmatpush1.bf16.msra.mxu0 0
    %4265 = vmatprep.subr.bf16.mxu0 0
    %4266 = vmatpush1.bf16.msra.mxu0 0
    %4267 = vmatprep.subr.bf16.mxu0 0
    %4268 = vmatpush1.bf16.msra.mxu0 0
    %4269 = vmatprep.subr.bf16.mxu0 0
    %4270 = vmatpush1.bf16.msra.mxu0 0
    %4271 = vmatprep.mubr.bf16.mxu0 0
    %4272 = vmatmul.mubr.bf16.gmra.mrb[0].mxu0 %v4238
    %v4273 = vpop.f32.mrb[0].mxu0
    %v4274 = vadd.f32 0.0, %v4273
    %v4275 = vpop.f32.mrb[0].mxu0
    %v4276 = vadd.f32 0.0, %v4275
    %v4277 = vpop.f32.mrb[0].mxu0
    %v4278 = vadd.f32 0.0, %v4277
    %v4279 = vpop.f32.mrb[0].mxu0
    %v4280 = vadd.f32 0.0, %v4279
    %4281 = vdwg.mxu0
    %4282 = vmatprep.subr.bf16.mxu0 %v1654
    %4283 = vmatpush1.bf16.msra.mxu0 %v1653
    %4284 = vmatprep.subr.bf16.mxu0 %v1658
    %4285 = vmatpush1.bf16.msra.mxu0 %v1657
    %4286 = vmatprep.subr.bf16.mxu0 %v1662
    %4287 = vmatpush1.bf16.msra.mxu0 %v1661
    %4288 = vmatprep.subr.bf16.mxu0 %v1666
    %4289 = vmatpush1.bf16.msra.mxu0 %v1665
    %4290 = vmatprep.subr.bf16.mxu0 %v1670
    %4291 = vmatpush1.bf16.msra.mxu0 %v1669
    %4292 = vmatprep.subr.bf16.mxu0 %v1674
    %4293 = vmatpush1.bf16.msra.mxu0 %v1673
    %4294 = vmatprep.subr.bf16.mxu0 %v1678
    %4295 = vmatpush1.bf16.msra.mxu0 %v1677
    %4296 = vmatprep.subr.bf16.mxu0 %v1682
    %4297 = vmatpush1.bf16.msra.mxu0 %v1681
    %4298 = vmatprep.subr.bf16.mxu0 0
    %4299 = vmatpush1.bf16.msra.mxu0 0
    %4300 = vmatprep.subr.bf16.mxu0 0
    %4301 = vmatpush1.bf16.msra.mxu0 0
    %4302 = vmatprep.subr.bf16.mxu0 0
    %4303 = vmatpush1.bf16.msra.mxu0 0
    %4304 = vmatprep.subr.bf16.mxu0 0
    %4305 = vmatpush1.bf16.msra.mxu0 0
    %4306 = vmatprep.subr.bf16.mxu0 0
    %4307 = vmatpush1.bf16.msra.mxu0 0
    %4308 = vmatprep.subr.bf16.mxu0 0
    %4309 = vmatpush1.bf16.msra.mxu0 0
    %4310 = vmatprep.subr.bf16.mxu0 0
    %4311 = vmatpush1.bf16.msra.mxu0 0
    %4312 = vmatprep.subr.bf16.mxu0 0
    %4313 = vmatpush1.bf16.msra.mxu0 0
    %4314 = vmatprep.mubr.bf16.mxu0 0
    %4315 = vmatmul.mubr.bf16.gmra.mrb[0].mxu0 %v4238
    %v4316 = vpop.f32.mrb[0].mxu0
    %v4317 = vadd.f32 0.0, %v4316
    %v4318 = vpop.f32.mrb[0].mxu0
    %v4319 = vadd.f32 0.0, %v4318
    %v4320 = vpop.f32.mrb[0].mxu0
    %v4321 = vadd.f32 0.0, %v4320
    %v4322 = vpop.f32.mrb[0].mxu0
    %v4323 = vadd.f32 0.0, %v4322
    %4324 = vdwg.mxu0
    %v4325 = vadd.f32 %v4230, %v4274
    %v4326 = vadd.f32 %v4231, %v4276
    %v4327 = vadd.f32 %v4232, %v4317
    %v4328 = vadd.f32 %v4233, %v4319
    %v4329 = vadd.f32 %v4234, %v4278
    %v4330 = vadd.f32 %v4235, %v4280
    %v4331 = vadd.f32 %v4236, %v4321
    %v4332 = vadd.f32 %v4237, %v4323
    %s4333 = scalar_lea.vmem [#allocation3], 448
    %v4334 = vld [vmem:[%s4333] sm:$0xff]
    %v4335 = vld [vmem:[%s4333 + $0x8] sm:$0xff]
    %v4336 = vld [vmem:[%s4333 + $0x10] sm:$0xff]
    %v4337 = vld [vmem:[%s4333 + $0x18] sm:$0xff]
    %v4338 = vld [vmem:[%s4333 + $0x20] sm:$0xff]
    %v4339 = vld [vmem:[%s4333 + $0x28] sm:$0xff]
    %v4340 = vld [vmem:[%s4333 + $0x30] sm:$0xff]
    %v4341 = vld [vmem:[%s4333 + $0x38] sm:$0xff]
    %v4342 = vpack.c.bf16 %v4226, %v4225
    %4343 = vmatprep.subr.bf16.mxu0 %v1915
    %4344 = vmatpush1.bf16.msra.mxu0 %v1914
    %4345 = vmatprep.subr.bf16.mxu0 %v1919
    %4346 = vmatpush1.bf16.msra.mxu0 %v1918
    %4347 = vmatprep.subr.bf16.mxu0 %v1923
    %4348 = vmatpush1.bf16.msra.mxu0 %v1922
    %4349 = vmatprep.subr.bf16.mxu0 %v1927
    %4350 = vmatpush1.bf16.msra.mxu0 %v1926
    %4351 = vmatprep.subr.bf16.mxu0 %v1931
    %4352 = vmatpush1.bf16.msra.mxu0 %v1930
    %4353 = vmatprep.subr.bf16.mxu0 %v1935
    %4354 = vmatpush1.bf16.msra.mxu0 %v1934
    %4355 = vmatprep.subr.bf16.mxu0 %v1939
    %4356 = vmatpush1.bf16.msra.mxu0 %v1938
    %4357 = vmatprep.subr.bf16.mxu0 %v1943
    %4358 = vmatpush1.bf16.msra.mxu0 %v1942
    %4359 = vmatprep.subr.bf16.mxu0 0
    %4360 = vmatpush1.bf16.msra.mxu0 0
    %4361 = vmatprep.subr.bf16.mxu0 0
    %4362 = vmatpush1.bf16.msra.mxu0 0
    %4363 = vmatprep.subr.bf16.mxu0 0
    %4364 = vmatpush1.bf16.msra.mxu0 0
    %4365 = vmatprep.subr.bf16.mxu0 0
    %4366 = vmatpush1.bf16.msra.mxu0 0
    %4367 = vmatprep.subr.bf16.mxu0 0
    %4368 = vmatpush1.bf16.msra.mxu0 0
    %4369 = vmatprep.subr.bf16.mxu0 0
    %4370 = vmatpush1.bf16.msra.mxu0 0
    %4371 = vmatprep.subr.bf16.mxu0 0
    %4372 = vmatpush1.bf16.msra.mxu0 0
    %4373 = vmatprep.subr.bf16.mxu0 0
    %4374 = vmatpush1.bf16.msra.mxu0 0
    %4375 = vmatprep.mubr.bf16.mxu0 0
    %4376 = vmatmul.mubr.bf16.gmra.mrb[0].mxu0 %v4342
    %v4377 = vpop.f32.mrb[0].mxu0
    %v4378 = vadd.f32 0.0, %v4377
    %v4379 = vpop.f32.mrb[0].mxu0
    %v4380 = vadd.f32 0.0, %v4379
    %v4381 = vpop.f32.mrb[0].mxu0
    %v4382 = vadd.f32 0.0, %v4381
    %v4383 = vpop.f32.mrb[0].mxu0
    %v4384 = vadd.f32 0.0, %v4383
    %4385 = vdwg.mxu0
    %4386 = vmatprep.subr.bf16.mxu0 %v1917
    %4387 = vmatpush1.bf16.msra.mxu0 %v1916
    %4388 = vmatprep.subr.bf16.mxu0 %v1921
    %4389 = vmatpush1.bf16.msra.mxu0 %v1920
    %4390 = vmatprep.subr.bf16.mxu0 %v1925
    %4391 = vmatpush1.bf16.msra.mxu0 %v1924
    %4392 = vmatprep.subr.bf16.mxu0 %v1929
    %4393 = vmatpush1.bf16.msra.mxu0 %v1928
    %4394 = vmatprep.subr.bf16.mxu0 %v1933
    %4395 = vmatpush1.bf16.msra.mxu0 %v1932
    %4396 = vmatprep.subr.bf16.mxu0 %v1937
    %4397 = vmatpush1.bf16.msra.mxu0 %v1936
    %4398 = vmatprep.subr.bf16.mxu0 %v1941
    %4399 = vmatpush1.bf16.msra.mxu0 %v1940
    %4400 = vmatprep.subr.bf16.mxu0 %v1945
    %4401 = vmatpush1.bf16.msra.mxu0 %v1944
    %4402 = vmatprep.subr.bf16.mxu0 0
    %4403 = vmatpush1.bf16.msra.mxu0 0
    %4404 = vmatprep.subr.bf16.mxu0 0
    %4405 = vmatpush1.bf16.msra.mxu0 0
    %4406 = vmatprep.subr.bf16.mxu0 0
    %4407 = vmatpush1.bf16.msra.mxu0 0
    %4408 = vmatprep.subr.bf16.mxu0 0
    %4409 = vmatpush1.bf16.msra.mxu0 0
    %4410 = vmatprep.subr.bf16.mxu0 0
    %4411 = vmatpush1.bf16.msra.mxu0 0
    %4412 = vmatprep.subr.bf16.mxu0 0
    %4413 = vmatpush1.bf16.msra.mxu0 0
    %4414 = vmatprep.subr.bf16.mxu0 0
    %4415 = vmatpush1.bf16.msra.mxu0 0
    %4416 = vmatprep.subr.bf16.mxu0 0
    %4417 = vmatpush1.bf16.msra.mxu0 0
    %4418 = vmatprep.mubr.bf16.mxu0 0
    %4419 = vmatmul.mubr.bf16.gmra.mrb[0].mxu0 %v4342
    %v4420 = vpop.f32.mrb[0].mxu0
    %v4421 = vadd.f32 0.0, %v4420
    %v4422 = vpop.f32.mrb[0].mxu0
    %v4423 = vadd.f32 0.0, %v4422
    %v4424 = vpop.f32.mrb[0].mxu0
    %v4425 = vadd.f32 0.0, %v4424
    %v4426 = vpop.f32.mrb[0].mxu0
    %v4427 = vadd.f32 0.0, %v4426
    %4428 = vdwg.mxu0
    %v4429 = vadd.f32 %v4334, %v4378
    %v4430 = vadd.f32 %v4335, %v4380
    %v4431 = vadd.f32 %v4336, %v4421
    %v4432 = vadd.f32 %v4337, %v4423
    %v4433 = vadd.f32 %v4338, %v4382
    %v4434 = vadd.f32 %v4339, %v4384
    %v4435 = vadd.f32 %v4340, %v4425
    %v4436 = vadd.f32 %v4341, %v4427
    %v4437 = vxor.u32 %v4325, 2147483648
    %v4438 = vxor.u32 %v4329, 2147483648
    %v4439 = vmul.f32 %v4437, 1.442695
    %v4440 = vpow.pop %v4439
    %v4441 = vmul.f32 %v4438, 1.442695
    %v4442 = vpow.pop %v4441
    %v4443 = vadd.f32 %v4440, 1.0
    %v4444 = vadd.f32 %v4442, 1.0
    %v4445 = vrcp.pop %v4443
    %v4446 = vmul.f32 1.0, %v4445
    %v4447 = vrcp.pop %v4444
    %v4448 = vmul.f32 1.0, %v4447
    %v4449 = vxor.u32 %v4326, 2147483648
    %v4450 = vxor.u32 %v4330, 2147483648
    %v4451 = vmul.f32 %v4449, 1.442695
    %v4452 = vpow.pop %v4451
    %v4453 = vmul.f32 %v4450, 1.442695
    %v4454 = vpow.pop %v4453
    %v4455 = vadd.f32 %v4452, 1.0
    %v4456 = vadd.f32 %v4454, 1.0
    %v4457 = vrcp.pop %v4455
    %v4458 = vmul.f32 1.0, %v4457
    %v4459 = vrcp.pop %v4456
    %v4460 = vmul.f32 1.0, %v4459
    %v4461 = vtanh.pop %v4327
    %v4462 = vtanh.pop %v4331
    %v4463 = vxor.u32 %v4328, 2147483648
    %v4464 = vxor.u32 %v4332, 2147483648
    %v4465 = vmul.f32 %v4463, 1.442695
    %v4466 = vpow.pop %v4465
    %v4467 = vmul.f32 %v4464, 1.442695
    %v4468 = vpow.pop %v4467
    %v4469 = vadd.f32 %v4466, 1.0
    %v4470 = vadd.f32 %v4468, 1.0
    %v4471 = vrcp.pop %v4469
    %v4472 = vmul.f32 1.0, %v4471
    %v4473 = vrcp.pop %v4470
    %v4474 = vmul.f32 1.0, %v4473
    %v4475 = vmul.f32 %v4458, %v4163
    %v4476 = vmul.f32 %v4460, %v4164
    %v4477 = vmul.f32 %v4446, %v4461
    %v4478 = vmul.f32 %v4448, %v4462
    %v4479 = vadd.f32 %v4475, %v4477
    %v4480 = vadd.f32 %v4476, %v4478
    %v4481 = vtanh.pop %v4479
    %v4482 = vtanh.pop %v4480
    %v4483 = vmul.f32 %v4472, %v4481
    %v4484 = vmul.f32 %v4474, %v4482
    %s4485 = sadd.s32 %s1537, 7
    %v4486 = vstv %s4485
    %vm4487 = vcmp.lt.s32.totalorder %v4486, %v1533
    %vm4488 = vcmp.lt.s32.totalorder %v4486, %v1534
    %v4489 = vsel %vm4487, 1, 0
    %v4490 = vsel %vm4488, 1, 0
    %4491 = vset.pattern.permute.xlu0 0
    %4492 = vperm.xlu0 %4491, %v4489
    %v4493 = vpop.permute.xlu0 %4492
    %4494 = vset.pattern.permute.xlu0 0
    %4495 = vperm.xlu0 %4494, %v4490
    %v4496 = vpop.permute.xlu0 %4495
    %vm4497 = vcmp.eq.s32.totalorder %v4493, 1
    %vm4498 = vcmp.eq.s32.totalorder %v4496, 1
    %v4499 = vsel %vm4497, %v4483, %v4161
    %v4500 = vsel %vm4498, %v4484, %v4162
    %v4501 = vsel %vm4497, %v4479, %v4163
    %v4502 = vsel %vm4498, %v4480, %v4164
    %v4503 = vxor.u32 %v4429, 2147483648
    %v4504 = vxor.u32 %v4433, 2147483648
    %v4505 = vmul.f32 %v4503, 1.442695
    %v4506 = vpow.pop %v4505
    %v4507 = vmul.f32 %v4504, 1.442695
    %v4508 = vpow.pop %v4507
    %v4509 = vadd.f32 %v4506, 1.0
    %v4510 = vadd.f32 %v4508, 1.0
    %v4511 = vrcp.pop %v4509
    %v4512 = vmul.f32 1.0, %v4511
    %v4513 = vrcp.pop %v4510
    %v4514 = vmul.f32 1.0, %v4513
    %v4515 = vxor.u32 %v4430, 2147483648
    %v4516 = vxor.u32 %v4434, 2147483648
    %v4517 = vmul.f32 %v4515, 1.442695
    %v4518 = vpow.pop %v4517
    %v4519 = vmul.f32 %v4516, 1.442695
    %v4520 = vpow.pop %v4519
    %v4521 = vadd.f32 %v4518, 1.0
    %v4522 = vadd.f32 %v4520, 1.0
    %v4523 = vrcp.pop %v4521
    %v4524 = vmul.f32 1.0, %v4523
    %v4525 = vrcp.pop %v4522
    %v4526 = vmul.f32 1.0, %v4525
    %v4527 = vtanh.pop %v4431
    %v4528 = vtanh.pop %v4435
    %v4529 = vxor.u32 %v4432, 2147483648
    %v4530 = vxor.u32 %v4436, 2147483648
    %v4531 = vmul.f32 %v4529, 1.442695
    %v4532 = vpow.pop %v4531
    %v4533 = vmul.f32 %v4530, 1.442695
    %v4534 = vpow.pop %v4533
    %v4535 = vadd.f32 %v4532, 1.0
    %v4536 = vadd.f32 %v4534, 1.0
    %v4537 = vrcp.pop %v4535
    %v4538 = vmul.f32 1.0, %v4537
    %v4539 = vrcp.pop %v4536
    %v4540 = vmul.f32 1.0, %v4539
    %v4541 = vmul.f32 %v4524, %v4227
    %v4542 = vmul.f32 %v4526, %v4228
    %v4543 = vmul.f32 %v4512, %v4527
    %v4544 = vmul.f32 %v4514, %v4528
    %v4545 = vadd.f32 %v4541, %v4543
    %v4546 = vadd.f32 %v4542, %v4544
    %v4547 = vtanh.pop %v4545
    %v4548 = vtanh.pop %v4546
    %v4549 = vmul.f32 %v4538, %v4547
    %v4550 = vmul.f32 %v4540, %v4548
    %vm4551 = vcmp.lt.s32.totalorder %v4486, %v1535
    %vm4552 = vcmp.lt.s32.totalorder %v4486, %v1536
    %v4553 = vsel %vm4551, 1, 0
    %v4554 = vsel %vm4552, 1, 0
    %4555 = vset.pattern.permute.xlu0 0
    %4556 = vperm.xlu0 %4555, %v4553
    %v4557 = vpop.permute.xlu0 %4556
    %4558 = vset.pattern.permute.xlu0 0
    %4559 = vperm.xlu0 %4558, %v4554
    %v4560 = vpop.permute.xlu0 %4559
    %vm4561 = vcmp.eq.s32.totalorder %v4557, 1
    %vm4562 = vcmp.eq.s32.totalorder %v4560, 1
    %v4563 = vsel %vm4561, %v4549, %v4225
    %v4564 = vsel %vm4562, %v4550, %v4226
    %v4565 = vsel %vm4561, %v4545, %v4227
    %v4566 = vsel %vm4562, %v4546, %v4228
    %4567 = vst [vmem:[#allocation4] sm:$0xff] %v4499
    %4568 = vst [vmem:[#allocation4 + $0x8] sm:$0xff] %v4500
    %4569 = vst [vmem:[#allocation5] sm:$0xff] %v4501
    %4570 = vst [vmem:[#allocation5 + $0x8] sm:$0xff] %v4502
    %4571 = vst [vmem:[#allocation6] sm:$0xff] %v4563
    %4572 = vst [vmem:[#allocation6 + $0x8] sm:$0xff] %v4564
    %4573 = vst [vmem:[#allocation7] sm:$0xff] %v4565
    %4574 = vst [vmem:[#allocation7 + $0x8] sm:$0xff] %v4566
    // Predicated region
    $region134: #{tc_lstm_forward.1} parent=1 // pred_check
      %p4575 = pneg %p266
    $region135: #{tc_lstm_forward.1} parent=1 // pred_check_branch
      %4577 = sbr.rel (%p4575) target = $region137
    $region136: #{tc_lstm_forward.1} parent=1 // pred_region
      %v4578 = vpack.c.bf16 %v4500, %v4499
      %v4579 = vld [vmem:[#allocation29] sm:$0xf]
      %v4580 = vld [vmem:[#allocation29 + $0x4] sm:$0xf]
      %v4581 = vld [vmem:[#allocation29 + $0x8] sm:$0xf]
      %v4582 = vld [vmem:[#allocation29 + $0xc] sm:$0xf]
      %v4583 = vld [vmem:[#allocation29 + $0x10] sm:$0xf]
      %v4584 = vld [vmem:[#allocation29 + $0x14] sm:$0xf]
      %v4585 = vld [vmem:[#allocation29 + $0x18] sm:$0xf]
      %v4586 = vld [vmem:[#allocation29 + $0x1c] sm:$0xf]
      %v4587 = vld [vmem:[#allocation29 + $0x20] sm:$0xf]
      %v4588 = vld [vmem:[#allocation29 + $0x24] sm:$0xf]
      %v4589 = vld [vmem:[#allocation29 + $0x28] sm:$0xf]
      %v4590 = vld [vmem:[#allocation29 + $0x2c] sm:$0xf]
      %v4591 = vld [vmem:[#allocation29 + $0x30] sm:$0xf]
      %v4592 = vld [vmem:[#allocation29 + $0x34] sm:$0xf]
      %v4593 = vld [vmem:[#allocation29 + $0x38] sm:$0xf]
      %v4594 = vld [vmem:[#allocation29 + $0x3c] sm:$0xf]
      %v4595 = vpack.c.bf16 %v4564, %v4563
      %v4596 = vld [vmem:[#allocation31] sm:$0xf]
      %v4597 = vld [vmem:[#allocation31 + $0x4] sm:$0xf]
      %v4598 = vld [vmem:[#allocation31 + $0x8] sm:$0xf]
      %v4599 = vld [vmem:[#allocation31 + $0xc] sm:$0xf]
      %v4600 = vld [vmem:[#allocation31 + $0x10] sm:$0xf]
      %v4601 = vld [vmem:[#allocation31 + $0x14] sm:$0xf]
      %v4602 = vld [vmem:[#allocation31 + $0x18] sm:$0xf]
      %v4603 = vld [vmem:[#allocation31 + $0x1c] sm:$0xf]
      %v4604 = vld [vmem:[#allocation31 + $0x20] sm:$0xf]
      %v4605 = vld [vmem:[#allocation31 + $0x24] sm:$0xf]
      %v4606 = vld [vmem:[#allocation31 + $0x28] sm:$0xf]
      %v4607 = vld [vmem:[#allocation31 + $0x2c] sm:$0xf]
      %v4608 = vld [vmem:[#allocation31 + $0x30] sm:$0xf]
      %v4609 = vld [vmem:[#allocation31 + $0x34] sm:$0xf]
      %v4610 = vld [vmem:[#allocation31 + $0x38] sm:$0xf]
      %v4611 = vld [vmem:[#allocation31 + $0x3c] sm:$0xf]
      %v4628 = vunpack.c.l.b16 %v4596
      %v4629 = vunpack.c.l.b16 %v4597
      %v4630 = vunpack.c.l.b16 %v4598
      %v4631 = vunpack.c.l.b16 %v4599
      %v4632 = vunpack.c.l.b16 %v4600
      %v4633 = vunpack.c.l.b16 %v4601
      %v4634 = vunpack.c.l.b16 %v4602
      %v4635 = vunpack.c.l.b16 %v4603
      %v4636 = vunpack.c.l.b16 %v4604
      %v4637 = vunpack.c.l.b16 %v4605
      %v4638 = vunpack.c.l.b16 %v4606
      %v4639 = vunpack.c.l.b16 %v4607
      %v4640 = vunpack.c.l.b16 %v4608
      %v4641 = vunpack.c.l.b16 %v4609
      %v4642 = vunpack.c.l.b16 %v4610
      %v4643 = vunpack.c.l.b16 %v4611
      %v4644 = vpack.c.b16 %v4629, %v4628
      %v4645 = vpack.c.b16 %v4631, %v4630
      %v4646 = vpack.c.b16 %v4633, %v4632
      %v4647 = vpack.c.b16 %v4635, %v4634
      %v4648 = vpack.c.b16 %v4637, %v4636
      %v4649 = vpack.c.b16 %v4639, %v4638
      %v4650 = vpack.c.b16 %v4641, %v4640
      %v4651 = vpack.c.b16 %v4643, %v4642
      %4660 = vmatprep.subr.bf16.mxu0 0
      %4661 = vmatpush1.bf16.msra.mxu0 %v4644
      %4662 = vmatprep.subr.bf16.mxu0 0
      %4663 = vmatpush1.bf16.msra.mxu0 %v4645
      %4664 = vmatprep.subr.bf16.mxu0 0
      %4665 = vmatpush1.bf16.msra.mxu0 %v4646
      %4666 = vmatprep.subr.bf16.mxu0 0
      %4667 = vmatpush1.bf16.msra.mxu0 %v4647
      %4668 = vmatprep.subr.bf16.mxu0 0
      %4669 = vmatpush1.bf16.msra.mxu0 %v4648
      %4670 = vmatprep.subr.bf16.mxu0 0
      %4671 = vmatpush1.bf16.msra.mxu0 %v4649
      %4672 = vmatprep.subr.bf16.mxu0 0
      %4673 = vmatpush1.bf16.msra.mxu0 %v4650
      %4674 = vmatprep.subr.bf16.mxu0 0
      %4675 = vmatpush1.bf16.msra.mxu0 %v4651
      %4676 = vmatprep.subr.bf16.mxu0 0
      %4677 = vmatpush1.bf16.msra.mxu0 0
      %4678 = vmatprep.subr.bf16.mxu0 0
      %4679 = vmatpush1.bf16.msra.mxu0 0
      %4680 = vmatprep.subr.bf16.mxu0 0
      %4681 = vmatpush1.bf16.msra.mxu0 0
      %4682 = vmatprep.subr.bf16.mxu0 0
      %4683 = vmatpush1.bf16.msra.mxu0 0
      %4684 = vmatprep.subr.bf16.mxu0 0
      %4685 = vmatpush1.bf16.msra.mxu0 0
      %4686 = vmatprep.subr.bf16.mxu0 0
      %4687 = vmatpush1.bf16.msra.mxu0 0
      %4688 = vmatprep.subr.bf16.mxu0 0
      %4689 = vmatpush1.bf16.msra.mxu0 0
      %4690 = vmatprep.subr.bf16.mxu0 0
      %4691 = vmatpush1.bf16.msra.mxu0 0
      %4692 = vmatprep.mubr.bf16.mxu0 0
      %4693 = vmatmul.mubr.bf16.gmra.mrb[0].mxu0 %v4595
      %v4694 = vpop.f32.mrb[0].mxu0
      %v4695 = vadd.f32 0.0, %v4694
      %v4696 = vpop.f32.mrb[0].mxu0
      %v4697 = vpop.f32.mrb[0].mxu0
      %v4698 = vadd.f32 0.0, %v4697
      %v4699 = vpop.f32.mrb[0].mxu0
      %4700 = vdwg.mxu0
      %v4717 = vunpack.c.l.b16 %v4579
      %v4718 = vunpack.c.l.b16 %v4580
      %v4719 = vunpack.c.l.b16 %v4581
      %v4720 = vunpack.c.l.b16 %v4582
      %v4721 = vunpack.c.l.b16 %v4583
      %v4722 = vunpack.c.l.b16 %v4584
      %v4723 = vunpack.c.l.b16 %v4585
      %v4724 = vunpack.c.l.b16 %v4586
      %v4725 = vunpack.c.l.b16 %v4587
      %v4726 = vunpack.c.l.b16 %v4588
      %v4727 = vunpack.c.l.b16 %v4589
      %v4728 = vunpack.c.l.b16 %v4590
      %v4729 = vunpack.c.l.b16 %v4591
      %v4730 = vunpack.c.l.b16 %v4592
      %v4731 = vunpack.c.l.b16 %v4593
      %v4732 = vunpack.c.l.b16 %v4594
      %v4733 = vpack.c.b16 %v4718, %v4717
      %v4734 = vpack.c.b16 %v4720, %v4719
      %v4735 = vpack.c.b16 %v4722, %v4721
      %v4736 = vpack.c.b16 %v4724, %v4723
      %v4737 = vpack.c.b16 %v4726, %v4725
      %v4738 = vpack.c.b16 %v4728, %v4727
      %v4739 = vpack.c.b16 %v4730, %v4729
      %v4740 = vpack.c.b16 %v4732, %v4731
      %4749 = vmatprep.subr.bf16.mxu0 0
      %4750 = vmatpush1.bf16.msra.mxu0 %v4733
      %4751 = vmatprep.subr.bf16.mxu0 0
      %4752 = vmatpush1.bf16.msra.mxu0 %v4734
      %4753 = vmatprep.subr.bf16.mxu0 0
      %4754 = vmatpush1.bf16.msra.mxu0 %v4735
      %4755 = vmatprep.subr.bf16.mxu0 0
      %4756 = vmatpush1.bf16.msra.mxu0 %v4736
      %4757 = vmatprep.subr.bf16.mxu0 0
      %4758 = vmatpush1.bf16.msra.mxu0 %v4737
      %4759 = vmatprep.subr.bf16.mxu0 0
      %4760 = vmatpush1.bf16.msra.mxu0 %v4738
      %4761 = vmatprep.subr.bf16.mxu0 0
      %4762 = vmatpush1.bf16.msra.mxu0 %v4739
      %4763 = vmatprep.subr.bf16.mxu0 0
      %4764 = vmatpush1.bf16.msra.mxu0 %v4740
      %4765 = vmatprep.subr.bf16.mxu0 0
      %4766 = vmatpush1.bf16.msra.mxu0 0
      %4767 = vmatprep.subr.bf16.mxu0 0
      %4768 = vmatpush1.bf16.msra.mxu0 0
      %4769 = vmatprep.subr.bf16.mxu0 0
      %4770 = vmatpush1.bf16.msra.mxu0 0
      %4771 = vmatprep.subr.bf16.mxu0 0
      %4772 = vmatpush1.bf16.msra.mxu0 0
      %4773 = vmatprep.subr.bf16.mxu0 0
      %4774 = vmatpush1.bf16.msra.mxu0 0
      %4775 = vmatprep.subr.bf16.mxu0 0
      %4776 = vmatpush1.bf16.msra.mxu0 0
      %4777 = vmatprep.subr.bf16.mxu0 0
      %4778 = vmatpush1.bf16.msra.mxu0 0
      %4779 = vmatprep.subr.bf16.mxu0 0
      %4780 = vmatpush1.bf16.msra.mxu0 0
      %4781 = vmatprep.mubr.bf16.mxu0 0
      %4782 = vmatmul.mubr.bf16.gmra.mrb[0].mxu0 %v4578
      %v4783 = vpop.f32.mrb[0].mxu0
      %v4784 = vadd.f32 %v4695, %v4783
      %v4785 = vpop.f32.mrb[0].mxu0
      %v4786 = vpop.f32.mrb[0].mxu0
      %v4787 = vadd.f32 %v4698, %v4786
      %v4788 = vpop.f32.mrb[0].mxu0
      %4789 = vdwg.mxu0
      %v4790 = vld [vmem:[#allocation32] sm:$0x1]
      %v4792 = vlaneseq
      %v4793 = vshrl.u32 %v4792, 7
      %v4794 = vsub.s32 0, %v4793
      %v4795 = vrot.slane %v4790, %v4794
      %v4797 = vadd.f32 %v4784, %v4795
      %v4798 = vadd.f32 %v4787, %v4795
      %4799 = vst [vmem:[#allocation34] sm:$0xff] %v4797
      %4800 = vst [vmem:[#allocation34 + $0x8] sm:$0xff] %v4798
    $region137: #{tc_lstm_forward.1} parent=1 // pred_fallthru
      _
    // Predicated region
    $region138: #{tc_lstm_forward.1} parent=1 // pred_check
      _
    $region139: #{tc_lstm_forward.1} parent=1 // pred_check_branch
      %4802 = sbr.rel (0) target = $region141
    $region140: #{tc_lstm_forward.1} parent=1 // pred_region
      %s4804 = ssub.s32 256, 256
      %4805 = vsyncadd [#allocation10], %s4804
      %s4806 = sshll.u32 [#allocation34], 4
      %s4807 = int_to_ptr.vmem [resolvable:$true] %s4806
      %4812 = dma.vmem_to_hbm [thread:$0]  %s4807, 256, %s16, [#allocation10], 128, 128, 8
    $region141: #{tc_lstm_forward.1} parent=1 // pred_fallthru
      _
    // Predicated region
    $region142: #{tc_lstm_forward.1} parent=1 // pred_check
      _
    $region143: #{tc_lstm_forward.1} parent=1 // pred_check_branch
      %4814 = sbr.rel (0) target = $region145
    $region144: #{tc_lstm_forward.1} parent=1 // pred_region
      %4815 = dma.done [#allocation10], 256
    $region145: #{tc_lstm_forward.1} parent=1 // pred_fallthru
      _
    %4816 = vsyncpa [#allocation9], 1
    %4817 = vsyncpa [#allocation12], 1
    %4818 = vsyncpa [#allocation15], 1
    %4819 = vsyncpa [#allocation18], 1
    %4820 = vsyncpa [#allocation21], 1
    %4821 = vsyncpa [#allocation24], 1
    %4822 = vsyncpa [#allocation27], 1
    %4823 = vsyncpa [#allocation30], 1
    %4824 = vsyncpa [#allocation33], 1
    %4825 = vsyncpa [#allocation10], 1

</llo_original>
